<compile_context>
chip_gen: v6e
topology: v6e:2x2x1
jax: 0.10.0
libtpu: 0.0.40
codegen_flags: <defaults>
</compile_context>

<pallas_src>
import numpy as np

import jax
import jax.numpy as jnp
from jax.experimental import pallas as pl
from jax.experimental.pallas import tpu as pltpu

# ---------------- small synthetic sizes consistent with the module -----------
PAD_IDX = 0
B       = 2      # caption batch
S       = 8      # caption seq_len
D_MODEL = 32
D_K     = 8
D_V     = 8
H       = 4      # heads
D_FF    = 64
H_BERT  = 48     # bert_hidden_size
VOCAB   = 64
MAX_LEN = 54
B_BERT  = 2
L_BERT  = 12
BERT_VOCAB = 100
LN_EPS  = 1e-5
NEG_MASK = -1e30                              # finite "-inf": NaN-free masking
VPAD = ((VOCAB + 127) // 128) * 128           # lane-dense (128-multiple) vocab width


# ---------------------------------------------------------------------------
def sinusoid_encoding_table(n_pos, d_model, padding_idx=None):
    pos = np.arange(n_pos)[:, None].astype(np.float64)
    dim = np.arange(d_model)[None, :]
    angle = pos / np.power(10000.0, 2.0 * (dim // 2) / d_model)
    tbl = np.zeros((n_pos, d_model), np.float32)
    tbl[:, 0::2] = np.sin(angle[:, 0::2])
    tbl[:, 1::2] = np.cos(angle[:, 1::2])
    if padding_idx is not None:
        tbl[padding_idx] = 0.0
    return jnp.asarray(tbl, jnp.float32)


def _layernorm(x, g, b, eps=LN_EPS):
    mu = jnp.mean(x, axis=-1, keepdims=True)
    var = jnp.mean((x - mu) ** 2, axis=-1, keepdims=True)
    return (x - mu) * jax.lax.rsqrt(var + eps) * g + b


# ---------------------------------------------------------------------------
# Fused kernel: proj+pos  ->  EncoderLayer  ->  vocab proj + log_softmax
def _lm_fused_kernel(xb_ref, pos_ref, vq_ref, vk_ref,
                     pw_ref, pb_ref,
                     wq_ref, bq_ref, wk_ref, bk_ref, wv_ref, bv_ref,
                     wo_ref, bo_ref,
                     gmha_ref, bmha_ref, g1_ref, b1_ref,
                     wf1_ref, bf1_ref, wf2_ref, bf2_ref, g2_ref, b2_ref,
                     wvoc_ref, bvoc_ref,
                     out_ref, lf_ref):
    f32 = jnp.float32

    # ---- 1) proj_to_caption_model + positional embedding --------------------
    xb = xb_ref[0]                                              # (S, H_BERT)
    x = (jnp.dot(xb, pw_ref[...], preferred_element_type=f32)
         + pb_ref[...] + pos_ref[0])                            # (S, D)
    s_len = x.shape[0]

    # ---- 2) masks built in-kernel (no (S,S) f32 DMA) -------------------------
    valid_q = vq_ref[0]                                         # (S, 1) 1=real token
    valid_k = vk_ref[0]                                         # (1, S)
    row = jax.lax.broadcasted_iota(jnp.int32, (s_len, s_len), 0)
    col = jax.lax.broadcasted_iota(jnp.int32, (s_len, s_len), 1)
    blocked = jnp.logical_or(col > row, valid_k <= 0.0)         # True = masked out

    # ---- 3) multi-head self-attention (per-head weight slabs, no lane slices)
    inv_sqrt_dk = 1.0 / (float(D_K) ** 0.5)
    acc = jnp.zeros((s_len, D_MODEL), f32)
    for h in range(H):                                          # static unroll
        qh = jnp.dot(x, wq_ref[h], preferred_element_type=f32) + bq_ref[h]
        kh = jnp.dot(x, wk_ref[h], preferred_element_type=f32) + bk_ref[h]
        vh = jnp.dot(x, wv_ref[h], preferred_element_type=f32) + bv_ref[h]
        s = jax.lax.dot_general(qh, kh, (((1,), (1,)), ((), ())),
                                preferred_element_type=f32) * inv_sqrt_dk
        s = jnp.where(blocked, NEG_MASK, s)                     # masked_fill(mask, -inf)
        m = jnp.max(s, axis=-1, keepdims=True)
        p = jnp.exp(s - m)
        p = p * pl.reciprocal(jnp.sum(p, axis=-1, keepdims=True), approx=True)
        oh = jnp.dot(p, vh, preferred_element_type=f32)
        # concat_h(o_h) @ Wo  ==  sum_h o_h @ Wo[h]
        acc = acc + jnp.dot(oh, wo_ref[h], preferred_element_type=f32)
    att = acc + bo_ref[...]

    # dropout layers are eval-mode identities
    mha = _layernorm(x + att, gmha_ref[...], bmha_ref[...])     # LN inside MHA
    y = _layernorm(x + mha, g1_ref[...], b1_ref[...])           # encoder lnorm1
    y = y * valid_q                                             # * mask_pad

    hdd = jnp.maximum(
        jnp.dot(y, wf1_ref[...], preferred_element_type=f32) + bf1_ref[...], 0.0)
    ffo = jnp.dot(hdd, wf2_ref[...], preferred_element_type=f32) + bf2_ref[...]
    ff = _layernorm(y + ffo, g2_ref[...], b2_ref[...])          # LN inside PWFF
    ff = ff * valid_q                                           # * mask_pad
    lf_ref[0] = ff                                              # language_feature

    # ---- 4) proj_to_vocab (padded to 128 lanes) + log_softmax ----------------
    logits = jnp.dot(ff, wvoc_ref[...], preferred_element_type=f32) + bvoc_ref[...]
    m2 = jnp.max(logits, axis=-1, keepdims=True)
    lse = jnp.log(jnp.sum(jnp.exp(logits - m2), axis=-1, keepdims=True)) + m2
    out_ref[0] = logits - lse


_WEIGHT_ORDER = ("proj_cap_w", "proj_cap_b",
                 "wq", "bq", "wk", "bk", "wv", "bv", "wo", "bo",
                 "ln_mha_g", "ln_mha_b", "ln1_g", "ln1_b",
                 "w1", "b1", "w2", "b2", "ln2_g", "ln2_b",
                 "vocab_w_pad", "vocab_b_pad")


def fused_language_model(bert_embed, pos, valid_q, valid_k, weights):
    b, s, hb = bert_embed.shape
    d = D_MODEL
    vpad = weights[-1].shape[-1]

    def batch_spec(shape):
        return pl.BlockSpec(shape, lambda i: (i, 0, 0))

    def const_spec(w):
        nd = w.ndim
        return pl.BlockSpec(w.shape, lambda i, _nd=nd: (0,) * _nd)

    in_specs = [batch_spec((1, s, hb)),     # bert_embed
                batch_spec((1, s, d)),      # positional embedding
                batch_spec((1, s, 1)),      # valid query flags (mask_queries)
                batch_spec((1, 1, s))]      # valid key flags
    in_specs += [const_spec(w) for w in weights]

    out_pad, lf = pl.pallas_call(
        _lm_fused_kernel,
        out_shape=(jax.ShapeDtypeStruct((b, s, vpad), jnp.float32),
                   jax.ShapeDtypeStruct((b, s, d), jnp.float32)),
        grid=(b,),
        in_specs=in_specs,
        out_specs=(batch_spec((1, s, vpad)), batch_spec((1, s, d))),
        compiler_params=pltpu.CompilerParams(dimension_semantics=("parallel",)),
    )(bert_embed, pos, valid_q, valid_k, *weights)
    return out_pad, lf


# ---------------------------------------------------------------------------
def init_params(key):
    ks = jax.random.split(key, 10)
    f32 = jnp.float32
    sc = 0.02

    def norm(k, shape):
        return jax.random.normal(k, shape, f32) * sc

    p = {}
    p["bert_emb"] = norm(ks[0], (BERT_VOCAB, H_BERT))
    p["pos_table"] = sinusoid_encoding_table(MAX_LEN + 1, D_MODEL, padding_idx=0)
    p["proj_cap_w"] = norm(ks[1], (H_BERT, D_MODEL))
    p["proj_cap_b"] = jnp.zeros((1, D_MODEL), f32)
    # q/k/v/o projections stored head-major so the kernel indexes the leading dim
    # (no lane-axis slicing of activations inside the kernel).
    p["wq"] = norm(ks[2], (H, D_MODEL, D_K)); p["bq"] = jnp.zeros((H, 1, D_K), f32)
    p["wk"] = norm(ks[3], (H, D_MODEL, D_K)); p["bk"] = jnp.zeros((H, 1, D_K), f32)
    p["wv"] = norm(ks[4], (H, D_MODEL, D_V)); p["bv"] = jnp.zeros((H, 1, D_V), f32)
    p["wo"] = norm(ks[5], (H, D_V, D_MODEL)); p["bo"] = jnp.zeros((1, D_MODEL), f32)
    p["ln_mha_g"] = jnp.ones((1, D_MODEL), f32); p["ln_mha_b"] = jnp.zeros((1, D_MODEL), f32)
    p["ln1_g"] = jnp.ones((1, D_MODEL), f32);    p["ln1_b"] = jnp.zeros((1, D_MODEL), f32)
    p["w1"] = norm(ks[6], (D_MODEL, D_FF)); p["b1"] = jnp.zeros((1, D_FF), f32)
    p["w2"] = norm(ks[7], (D_FF, D_MODEL)); p["b2"] = jnp.zeros((1, D_MODEL), f32)
    p["ln2_g"] = jnp.ones((1, D_MODEL), f32); p["ln2_b"] = jnp.zeros((1, D_MODEL), f32)
    p["vocab_w"] = norm(ks[8], (D_MODEL, VOCAB)); p["vocab_b"] = jnp.zeros((1, VOCAB), f32)
    return p


def language_model_forward(params, input_ids, input_ids_bert, bert_mask, lens):
    b_s, seq_len = input_ids.shape
    hb = params["bert_emb"].shape[1]

    # masks (same semantics as the PyTorch code); causal+pad mask is built in-kernel
    valid = (input_ids != PAD_IDX).astype(jnp.float32)           # (b,S)
    valid_q = valid[..., None]                                   # (b,S,1)  mask_queries
    valid_k = valid[:, None, :]                                  # (b,1,S)

    seq = jnp.broadcast_to(jnp.arange(1, seq_len + 1)[None, :], (b_s, seq_len))
    seq = jnp.where(input_ids != PAD_IDX, seq, 0)

    # TODO(synk): pretrained RobertaModel ('vinai/phobert-base') has no in-script
    # equivalent; replaced by a deterministic synthetic token-embedding table.
    bert_hidden = params["bert_emb"][input_ids_bert]             # (Bb, Lb, Hb)

    # ragged per-word mean pooling of subword embeddings + masked_scatter_
    flat_tok = bert_hidden.reshape(-1, hb)
    flat_m = bert_mask.reshape(-1)
    lens_f = lens.reshape(-1)
    n_words = lens_f.shape[0]
    rank = jnp.cumsum(flat_m.astype(jnp.int32)) - 1              # rank among masked
    cum = jnp.cumsum(lens_f)
    word_id = jnp.searchsorted(cum, rank, side="right")
    seg = jnp.where(flat_m, word_id, n_words)                    # dummy seg for pads
    sums = jax.ops.segment_sum(flat_tok, seg, num_segments=n_words + 1)[:n_words]
    means = sums / jnp.maximum(lens_f, 1)[:, None].astype(jnp.float32)
    bert_embed = jnp.where((lens_f > 0)[:, None], means, 0.0)
    bert_embed = bert_embed.reshape(b_s, seq_len, hb)

    pos = params["pos_table"][seq]                               # (b,S,D)

    # Pad the vocab projection to a 128-lane multiple so the kernel's big store is
    # lane-dense.  Padded columns get bias NEG_MASK -> exactly zero probability mass,
    # so log_softmax over the real columns is unchanged; they are sliced off below.
    pad = VPAD - VOCAB
    vocab_w_pad = jnp.pad(params["vocab_w"], ((0, 0), (0, pad)))
    vocab_b_pad = jnp.pad(params["vocab_b"], ((0, 0), (0, pad)),
                          constant_values=NEG_MASK)
    wmap = dict(params, vocab_w_pad=vocab_w_pad, vocab_b_pad=vocab_b_pad)
    weights = [wmap[n] for n in _WEIGHT_ORDER]

    # Pallas hot path: single fused kernel
    out_pad, language_feature = fused_language_model(
        bert_embed, pos, valid_q, valid_k, weights)
    out = out_pad[:, :, :VOCAB]
    # TODO(synk): stateful decoding buffers (running_mask_self_attention /
    # running_seq) are inactive in the plain forward pass and are not modeled.
    return out, language_feature


# ---------------------------------------------------------------------------
if __name__ == "__main__":
    key = jax.random.PRNGKey(0)
    pkey, ikey = jax.random.split(key)
    params = init_params(pkey)

    # caption word ids (first token always non-pad, trailing pads in row 1)
    input_ids = jnp.array([[5, 12, 7, 3, 9, 2, 4, 6],
                           [8, 11, 6, 2, 3, 0, 0, 0]], dtype=jnp.int32)
    # number of BERT subword tokens per caption word (0 for padding words)
    lens = jnp.array([[1, 2, 1, 1, 2, 1, 1, 1],      # sum = 10
                      [2, 1, 1, 2, 1, 0, 0, 0]],     # sum = 7
                     dtype=jnp.int32)
    input_ids_bert = jax.random.randint(ikey, (B_BERT, L_BERT), 1, BERT_VOCAB,
                                        dtype=jnp.int32)
    tok_counts = jnp.sum(lens, axis=1)
    bert_mask = jnp.arange(L_BERT)[None, :] < tok_counts[:, None]    # (Bb, Lb) bool

    fwd = jax.jit(language_model_forward)
    out, language_feature = fwd(params, input_ids, input_ids_bert, bert_mask, lens)
    jax.block_until_ready((out, language_feature))

    assert out.shape == (B, S, VOCAB)
    assert language_feature.shape == (B, S, D_MODEL)
    assert bool(jnp.all(jnp.isfinite(out)))
    assert bool(jnp.all(jnp.isfinite(language_feature)))
    # log_softmax rows should sum to ~1 in prob space
    assert bool(jnp.all(jnp.abs(jnp.sum(jnp.exp(out), axis=-1) - 1.0) < 1e-3))
    print("KERNEL_OK")
</pallas_src>

<mosaic_0001>
module attributes {stable_mosaic.version = 11 : i64} {
  func.func @_lm_fused_kernel(%arg0: i32, %arg1: memref<1x8x48xf32, #tpu.memory_space<vmem>>, %arg2: memref<1x8x32xf32, #tpu.memory_space<vmem>>, %arg3: memref<1x8x1xf32, #tpu.memory_space<vmem>>, %arg4: memref<1x1x8xf32, #tpu.memory_space<vmem>>, %arg5: memref<48x32xf32, #tpu.memory_space<vmem>>, %arg6: memref<1x32xf32, #tpu.memory_space<vmem>>, %arg7: memref<4x32x8xf32, #tpu.memory_space<vmem>>, %arg8: memref<4x1x8xf32, #tpu.memory_space<vmem>>, %arg9: memref<4x32x8xf32, #tpu.memory_space<vmem>>, %arg10: memref<4x1x8xf32, #tpu.memory_space<vmem>>, %arg11: memref<4x32x8xf32, #tpu.memory_space<vmem>>, %arg12: memref<4x1x8xf32, #tpu.memory_space<vmem>>, %arg13: memref<4x8x32xf32, #tpu.memory_space<vmem>>, %arg14: memref<1x32xf32, #tpu.memory_space<vmem>>, %arg15: memref<1x32xf32, #tpu.memory_space<vmem>>, %arg16: memref<1x32xf32, #tpu.memory_space<vmem>>, %arg17: memref<1x32xf32, #tpu.memory_space<vmem>>, %arg18: memref<1x32xf32, #tpu.memory_space<vmem>>, %arg19: memref<32x64xf32, #tpu.memory_space<vmem>>, %arg20: memref<1x64xf32, #tpu.memory_space<vmem>>, %arg21: memref<64x32xf32, #tpu.memory_space<vmem>>, %arg22: memref<1x32xf32, #tpu.memory_space<vmem>>, %arg23: memref<1x32xf32, #tpu.memory_space<vmem>>, %arg24: memref<1x32xf32, #tpu.memory_space<vmem>>, %arg25: memref<32x128xf32, #tpu.memory_space<vmem>>, %arg26: memref<1x128xf32, #tpu.memory_space<vmem>>, %arg27: memref<1x8x128xf32, #tpu.memory_space<vmem>>, %arg28: memref<1x8x32xf32, #tpu.memory_space<vmem>>) attributes {dimension_semantics = [#tpu.dimension_semantics<parallel>], iteration_bounds = array<i64: 2>, scalar_prefetch = 0 : i64, scratch_operands = 0 : i64, tpu.core_type = #tpu.core_type<tc>, window_params = [{transform_indices = @transform_0, window_bounds = array<i64: 1, 8, 48>}, {transform_indices = @transform_1, window_bounds = array<i64: 1, 8, 32>}, {transform_indices = @transform_2, window_bounds = array<i64: 1, 8, 1>}, {transform_indices = @transform_3, window_bounds = array<i64: 1, 1, 8>}, {pipeline_mode = #tpu.pipeline_mode<synchronous>, transform_indices = @transform_4, window_bounds = array<i64: 48, 32>}, {pipeline_mode = #tpu.pipeline_mode<synchronous>, transform_indices = @transform_5, window_bounds = array<i64: 1, 32>}, {pipeline_mode = #tpu.pipeline_mode<synchronous>, transform_indices = @transform_6, window_bounds = array<i64: 4, 32, 8>}, {pipeline_mode = #tpu.pipeline_mode<synchronous>, transform_indices = @transform_7, window_bounds = array<i64: 4, 1, 8>}, {pipeline_mode = #tpu.pipeline_mode<synchronous>, transform_indices = @transform_8, window_bounds = array<i64: 4, 32, 8>}, {pipeline_mode = #tpu.pipeline_mode<synchronous>, transform_indices = @transform_9, window_bounds = array<i64: 4, 1, 8>}, {pipeline_mode = #tpu.pipeline_mode<synchronous>, transform_indices = @transform_10, window_bounds = array<i64: 4, 32, 8>}, {pipeline_mode = #tpu.pipeline_mode<synchronous>, transform_indices = @transform_11, window_bounds = array<i64: 4, 1, 8>}, {pipeline_mode = #tpu.pipeline_mode<synchronous>, transform_indices = @transform_12, window_bounds = array<i64: 4, 8, 32>}, {pipeline_mode = #tpu.pipeline_mode<synchronous>, transform_indices = @transform_13, window_bounds = array<i64: 1, 32>}, {pipeline_mode = #tpu.pipeline_mode<synchronous>, transform_indices = @transform_14, window_bounds = array<i64: 1, 32>}, {pipeline_mode = #tpu.pipeline_mode<synchronous>, transform_indices = @transform_15, window_bounds = array<i64: 1, 32>}, {pipeline_mode = #tpu.pipeline_mode<synchronous>, transform_indices = @transform_16, window_bounds = array<i64: 1, 32>}, {pipeline_mode = #tpu.pipeline_mode<synchronous>, transform_indices = @transform_17, window_bounds = array<i64: 1, 32>}, {pipeline_mode = #tpu.pipeline_mode<synchronous>, transform_indices = @transform_18, window_bounds = array<i64: 32, 64>}, {pipeline_mode = #tpu.pipeline_mode<synchronous>, transform_indices = @transform_19, window_bounds = array<i64: 1, 64>}, {pipeline_mode = #tpu.pipeline_mode<synchronous>, transform_indices = @transform_20, window_bounds = array<i64: 64, 32>}, {pipeline_mode = #tpu.pipeline_mode<synchronous>, transform_indices = @transform_21, window_bounds = array<i64: 1, 32>}, {pipeline_mode = #tpu.pipeline_mode<synchronous>, transform_indices = @transform_22, window_bounds = array<i64: 1, 32>}, {pipeline_mode = #tpu.pipeline_mode<synchronous>, transform_indices = @transform_23, window_bounds = array<i64: 1, 32>}, {pipeline_mode = #tpu.pipeline_mode<synchronous>, transform_indices = @transform_24, window_bounds = array<i64: 32, 128>}, {pipeline_mode = #tpu.pipeline_mode<synchronous>, transform_indices = @transform_25, window_bounds = array<i64: 1, 128>}, {transform_indices = @transform_26, window_bounds = array<i64: 1, 8, 128>}, {transform_indices = @transform_27, window_bounds = array<i64: 1, 8, 32>}]} {
    %c0 = arith.constant 0 : index
    %c0_0 = arith.constant 0 : index
    %c0_1 = arith.constant 0 : index
    %0 = vector.load %arg1[%c0, %c0_0, %c0_1] : memref<1x8x48xf32, #tpu.memory_space<vmem>>, vector<1x8x48xf32>
    %1 = vector.shape_cast %0 : vector<1x8x48xf32> to vector<8x48xf32>
    %c0_2 = arith.constant 0 : index
    %c0_3 = arith.constant 0 : index
    %2 = vector.load %arg5[%c0_2, %c0_3] : memref<48x32xf32, #tpu.memory_space<vmem>>, vector<48x32xf32>
    %cst = arith.constant dense<0.000000e+00> : vector<8x32xf32>
    %3 = tpu.matmul %1, %2, %cst {dimension_numbers = #tpu.dot_dimension_numbers<[1], [0], [0], [1], [0, 0, 1, 1], [], []>} : vector<8x48xf32>, vector<48x32xf32>, vector<8x32xf32> -> vector<8x32xf32>
    %c0_4 = arith.constant 0 : index
    %c0_5 = arith.constant 0 : index
    %4 = vector.load %arg6[%c0_4, %c0_5] : memref<1x32xf32, #tpu.memory_space<vmem>>, vector<1x32xf32>
    %5 = vector.broadcast %4 : vector<1x32xf32> to vector<8x32xf32>
    %6 = arith.addf %3, %5 : vector<8x32xf32>
    %c0_6 = arith.constant 0 : index
    %c0_7 = arith.constant 0 : index
    %c0_8 = arith.constant 0 : index
    %7 = vector.load %arg2[%c0_6, %c0_7, %c0_8] : memref<1x8x32xf32, #tpu.memory_space<vmem>>, vector<1x8x32xf32>
    %8 = vector.shape_cast %7 : vector<1x8x32xf32> to vector<8x32xf32>
    %9 = arith.addf %6, %8 : vector<8x32xf32>
    %c0_9 = arith.constant 0 : index
    %c0_10 = arith.constant 0 : index
    %c0_11 = arith.constant 0 : index
    %10 = vector.load %arg3[%c0_9, %c0_10, %c0_11] : memref<1x8x1xf32, #tpu.memory_space<vmem>>, vector<1x8x1xf32>
    %11 = vector.shape_cast %10 : vector<1x8x1xf32> to vector<8x1xf32>
    %c0_12 = arith.constant 0 : index
    %c0_13 = arith.constant 0 : index
    %c0_14 = arith.constant 0 : index
    %12 = vector.load %arg4[%c0_12, %c0_13, %c0_14] : memref<1x1x8xf32, #tpu.memory_space<vmem>>, vector<1x1x8xf32>
    %13 = vector.shape_cast %12 : vector<1x1x8xf32> to vector<1x8xf32>
    %14 = tpu.iota {dimensions = array<i32: 0>} : vector<8x8xi32>
    %15 = tpu.iota {dimensions = array<i32: 1>} : vector<8x8xi32>
    %16 = arith.cmpi sgt, %15, %14 : vector<8x8xi32>
    %cst_15 = arith.constant 0.000000e+00 : f32
    %17 = vector.broadcast %cst_15 : f32 to vector<1x8xf32>
    %18 = arith.cmpf ole, %13, %17 : vector<1x8xf32>
    %19 = vector.broadcast %18 : vector<1x8xi1> to vector<8x8xi1>
    %20 = arith.ori %16, %19 : vector<8x8xi1>
    %cst_16 = arith.constant 0.000000e+00 : f32
    %21 = vector.broadcast %cst_16 : f32 to vector<8x32xf32>
    %c0_17 = arith.constant 0 : index
    %c0_18 = arith.constant 0 : index
    %c0_19 = arith.constant 0 : index
    %22 = vector.load %arg7[%c0_17, %c0_18, %c0_19] : memref<4x32x8xf32, #tpu.memory_space<vmem>>, vector<1x32x8xf32>
    %23 = vector.shape_cast %22 : vector<1x32x8xf32> to vector<32x8xf32>
    %cst_20 = arith.constant dense<0.000000e+00> : vector<8x8xf32>
    %24 = tpu.matmul %9, %23, %cst_20 {dimension_numbers = #tpu.dot_dimension_numbers<[1], [0], [0], [1], [0, 0, 1, 1], [], []>} : vector<8x32xf32>, vector<32x8xf32>, vector<8x8xf32> -> vector<8x8xf32>
    %c0_21 = arith.constant 0 : index
    %c0_22 = arith.constant 0 : index
    %c0_23 = arith.constant 0 : index
    %25 = vector.load %arg8[%c0_21, %c0_22, %c0_23] : memref<4x1x8xf32, #tpu.memory_space<vmem>>, vector<1x1x8xf32>
    %26 = vector.shape_cast %25 : vector<1x1x8xf32> to vector<1x8xf32>
    %27 = vector.broadcast %26 : vector<1x8xf32> to vector<8x8xf32>
    %28 = arith.addf %24, %27 : vector<8x8xf32>
    %c0_24 = arith.constant 0 : index
    %c0_25 = arith.constant 0 : index
    %c0_26 = arith.constant 0 : index
    %29 = vector.load %arg9[%c0_24, %c0_25, %c0_26] : memref<4x32x8xf32, #tpu.memory_space<vmem>>, vector<1x32x8xf32>
    %30 = vector.shape_cast %29 : vector<1x32x8xf32> to vector<32x8xf32>
    %cst_27 = arith.constant dense<0.000000e+00> : vector<8x8xf32>
    %31 = tpu.matmul %9, %30, %cst_27 {dimension_numbers = #tpu.dot_dimension_numbers<[1], [0], [0], [1], [0, 0, 1, 1], [], []>} : vector<8x32xf32>, vector<32x8xf32>, vector<8x8xf32> -> vector<8x8xf32>
    %c0_28 = arith.constant 0 : index
    %c0_29 = arith.constant 0 : index
    %c0_30 = arith.constant 0 : index
    %32 = vector.load %arg10[%c0_28, %c0_29, %c0_30] : memref<4x1x8xf32, #tpu.memory_space<vmem>>, vector<1x1x8xf32>
    %33 = vector.shape_cast %32 : vector<1x1x8xf32> to vector<1x8xf32>
    %34 = vector.broadcast %33 : vector<1x8xf32> to vector<8x8xf32>
    %35 = arith.addf %31, %34 : vector<8x8xf32>
    %c0_31 = arith.constant 0 : index
    %c0_32 = arith.constant 0 : index
    %c0_33 = arith.constant 0 : index
    %36 = vector.load %arg11[%c0_31, %c0_32, %c0_33] : memref<4x32x8xf32, #tpu.memory_space<vmem>>, vector<1x32x8xf32>
    %37 = vector.shape_cast %36 : vector<1x32x8xf32> to vector<32x8xf32>
    %cst_34 = arith.constant dense<0.000000e+00> : vector<8x8xf32>
    %38 = tpu.matmul %9, %37, %cst_34 {dimension_numbers = #tpu.dot_dimension_numbers<[1], [0], [0], [1], [0, 0, 1, 1], [], []>} : vector<8x32xf32>, vector<32x8xf32>, vector<8x8xf32> -> vector<8x8xf32>
    %c0_35 = arith.constant 0 : index
    %c0_36 = arith.constant 0 : index
    %c0_37 = arith.constant 0 : index
    %39 = vector.load %arg12[%c0_35, %c0_36, %c0_37] : memref<4x1x8xf32, #tpu.memory_space<vmem>>, vector<1x1x8xf32>
    %40 = vector.shape_cast %39 : vector<1x1x8xf32> to vector<1x8xf32>
    %41 = vector.broadcast %40 : vector<1x8xf32> to vector<8x8xf32>
    %42 = arith.addf %38, %41 : vector<8x8xf32>
    %cst_38 = arith.constant dense<0.000000e+00> : vector<8x8xf32>
    %43 = tpu.matmul %28, %35, %cst_38 {dimension_numbers = #tpu.dot_dimension_numbers<[1], [1], [0], [0], [0, 0, 1, 0], [], []>} : vector<8x8xf32>, vector<8x8xf32>, vector<8x8xf32> -> vector<8x8xf32>
    %cst_39 = arith.constant 0.353553385 : f32
    %44 = vector.broadcast %cst_39 : f32 to vector<8x8xf32>
    %45 = arith.mulf %43, %44 : vector<8x8xf32>
    %cst_40 = arith.constant -1.000000e+30 : f32
    %46 = vector.broadcast %cst_40 : f32 to vector<8x8xf32>
    %47 = arith.select %20, %46, %45 : vector<8x8xi1>, vector<8x8xf32>
    %cst_41 = arith.constant dense<0xFF800000> : vector<8xf32>
    %48 = vector.multi_reduction <maximumf>, %47, %cst_41 [1] : vector<8x8xf32> to vector<8xf32>
    %49 = vector.shape_cast %48 : vector<8xf32> to vector<8x1xf32>
    %50 = vector.broadcast %49 : vector<8x1xf32> to vector<8x8xf32>
    %51 = arith.subf %47, %50 : vector<8x8xf32>
    %52 = math.exp %51 : vector<8x8xf32>
    %cst_42 = arith.constant dense<0.000000e+00> : vector<8xf32>
    %53 = vector.multi_reduction <add>, %52, %cst_42 [1] : vector<8x8xf32> to vector<8xf32>
    %54 = vector.shape_cast %53 : vector<8xf32> to vector<8x1xf32>
    %55 = tpu.reciprocal %54 {approx = true} : vector<8x1xf32> -> vector<8x1xf32>
    %56 = vector.broadcast %55 : vector<8x1xf32> to vector<8x8xf32>
    %57 = arith.mulf %52, %56 : vector<8x8xf32>
    %cst_43 = arith.constant dense<0.000000e+00> : vector<8x8xf32>
    %58 = tpu.matmul %57, %42, %cst_43 {dimension_numbers = #tpu.dot_dimension_numbers<[1], [0], [0], [1], [0, 0, 1, 1], [], []>} : vector<8x8xf32>, vector<8x8xf32>, vector<8x8xf32> -> vector<8x8xf32>
    %c0_44 = arith.constant 0 : index
    %c0_45 = arith.constant 0 : index
    %c0_46 = arith.constant 0 : index
    %59 = vector.load %arg13[%c0_44, %c0_45, %c0_46] : memref<4x8x32xf32, #tpu.memory_space<vmem>>, vector<1x8x32xf32>
    %60 = vector.shape_cast %59 : vector<1x8x32xf32> to vector<8x32xf32>
    %cst_47 = arith.constant dense<0.000000e+00> : vector<8x32xf32>
    %61 = tpu.matmul %58, %60, %cst_47 {dimension_numbers = #tpu.dot_dimension_numbers<[1], [0], [0], [1], [0, 0, 1, 1], [], []>} : vector<8x8xf32>, vector<8x32xf32>, vector<8x32xf32> -> vector<8x32xf32>
    %62 = arith.addf %21, %61 : vector<8x32xf32>
    %c1 = arith.constant 1 : index
    %c0_48 = arith.constant 0 : index
    %c0_49 = arith.constant 0 : index
    %63 = vector.load %arg7[%c1, %c0_48, %c0_49] : memref<4x32x8xf32, #tpu.memory_space<vmem>>, vector<1x32x8xf32>
    %64 = vector.shape_cast %63 : vector<1x32x8xf32> to vector<32x8xf32>
    %cst_50 = arith.constant dense<0.000000e+00> : vector<8x8xf32>
    %65 = tpu.matmul %9, %64, %cst_50 {dimension_numbers = #tpu.dot_dimension_numbers<[1], [0], [0], [1], [0, 0, 1, 1], [], []>} : vector<8x32xf32>, vector<32x8xf32>, vector<8x8xf32> -> vector<8x8xf32>
    %c1_51 = arith.constant 1 : index
    %c0_52 = arith.constant 0 : index
    %c0_53 = arith.constant 0 : index
    %66 = vector.load %arg8[%c1_51, %c0_52, %c0_53] : memref<4x1x8xf32, #tpu.memory_space<vmem>>, vector<1x1x8xf32>
    %67 = vector.shape_cast %66 : vector<1x1x8xf32> to vector<1x8xf32>
    %68 = vector.broadcast %67 : vector<1x8xf32> to vector<8x8xf32>
    %69 = arith.addf %65, %68 : vector<8x8xf32>
    %c1_54 = arith.constant 1 : index
    %c0_55 = arith.constant 0 : index
    %c0_56 = arith.constant 0 : index
    %70 = vector.load %arg9[%c1_54, %c0_55, %c0_56] : memref<4x32x8xf32, #tpu.memory_space<vmem>>, vector<1x32x8xf32>
    %71 = vector.shape_cast %70 : vector<1x32x8xf32> to vector<32x8xf32>
    %cst_57 = arith.constant dense<0.000000e+00> : vector<8x8xf32>
    %72 = tpu.matmul %9, %71, %cst_57 {dimension_numbers = #tpu.dot_dimension_numbers<[1], [0], [0], [1], [0, 0, 1, 1], [], []>} : vector<8x32xf32>, vector<32x8xf32>, vector<8x8xf32> -> vector<8x8xf32>
    %c1_58 = arith.constant 1 : index
    %c0_59 = arith.constant 0 : index
    %c0_60 = arith.constant 0 : index
    %73 = vector.load %arg10[%c1_58, %c0_59, %c0_60] : memref<4x1x8xf32, #tpu.memory_space<vmem>>, vector<1x1x8xf32>
    %74 = vector.shape_cast %73 : vector<1x1x8xf32> to vector<1x8xf32>
    %75 = vector.broadcast %74 : vector<1x8xf32> to vector<8x8xf32>
    %76 = arith.addf %72, %75 : vector<8x8xf32>
    %c1_61 = arith.constant 1 : index
    %c0_62 = arith.constant 0 : index
    %c0_63 = arith.constant 0 : index
    %77 = vector.load %arg11[%c1_61, %c0_62, %c0_63] : memref<4x32x8xf32, #tpu.memory_space<vmem>>, vector<1x32x8xf32>
    %78 = vector.shape_cast %77 : vector<1x32x8xf32> to vector<32x8xf32>
    %cst_64 = arith.constant dense<0.000000e+00> : vector<8x8xf32>
    %79 = tpu.matmul %9, %78, %cst_64 {dimension_numbers = #tpu.dot_dimension_numbers<[1], [0], [0], [1], [0, 0, 1, 1], [], []>} : vector<8x32xf32>, vector<32x8xf32>, vector<8x8xf32> -> vector<8x8xf32>
    %c1_65 = arith.constant 1 : index
    %c0_66 = arith.constant 0 : index
    %c0_67 = arith.constant 0 : index
    %80 = vector.load %arg12[%c1_65, %c0_66, %c0_67] : memref<4x1x8xf32, #tpu.memory_space<vmem>>, vector<1x1x8xf32>
    %81 = vector.shape_cast %80 : vector<1x1x8xf32> to vector<1x8xf32>
    %82 = vector.broadcast %81 : vector<1x8xf32> to vector<8x8xf32>
    %83 = arith.addf %79, %82 : vector<8x8xf32>
    %cst_68 = arith.constant dense<0.000000e+00> : vector<8x8xf32>
    %84 = tpu.matmul %69, %76, %cst_68 {dimension_numbers = #tpu.dot_dimension_numbers<[1], [1], [0], [0], [0, 0, 1, 0], [], []>} : vector<8x8xf32>, vector<8x8xf32>, vector<8x8xf32> -> vector<8x8xf32>
    %cst_69 = arith.constant 0.353553385 : f32
    %85 = vector.broadcast %cst_69 : f32 to vector<8x8xf32>
    %86 = arith.mulf %84, %85 : vector<8x8xf32>
    %cst_70 = arith.constant -1.000000e+30 : f32
    %87 = vector.broadcast %cst_70 : f32 to vector<8x8xf32>
    %88 = arith.select %20, %87, %86 : vector<8x8xi1>, vector<8x8xf32>
    %cst_71 = arith.constant dense<0xFF800000> : vector<8xf32>
    %89 = vector.multi_reduction <maximumf>, %88, %cst_71 [1] : vector<8x8xf32> to vector<8xf32>
    %90 = vector.shape_cast %89 : vector<8xf32> to vector<8x1xf32>
    %91 = vector.broadcast %90 : vector<8x1xf32> to vector<8x8xf32>
    %92 = arith.subf %88, %91 : vector<8x8xf32>
    %93 = math.exp %92 : vector<8x8xf32>
    %cst_72 = arith.constant dense<0.000000e+00> : vector<8xf32>
    %94 = vector.multi_reduction <add>, %93, %cst_72 [1] : vector<8x8xf32> to vector<8xf32>
    %95 = vector.shape_cast %94 : vector<8xf32> to vector<8x1xf32>
    %96 = tpu.reciprocal %95 {approx = true} : vector<8x1xf32> -> vector<8x1xf32>
    %97 = vector.broadcast %96 : vector<8x1xf32> to vector<8x8xf32>
    %98 = arith.mulf %93, %97 : vector<8x8xf32>
    %cst_73 = arith.constant dense<0.000000e+00> : vector<8x8xf32>
    %99 = tpu.matmul %98, %83, %cst_73 {dimension_numbers = #tpu.dot_dimension_numbers<[1], [0], [0], [1], [0, 0, 1, 1], [], []>} : vector<8x8xf32>, vector<8x8xf32>, vector<8x8xf32> -> vector<8x8xf32>
    %c1_74 = arith.constant 1 : index
    %c0_75 = arith.constant 0 : index
    %c0_76 = arith.constant 0 : index
    %100 = vector.load %arg13[%c1_74, %c0_75, %c0_76] : memref<4x8x32xf32, #tpu.memory_space<vmem>>, vector<1x8x32xf32>
    %101 = vector.shape_cast %100 : vector<1x8x32xf32> to vector<8x32xf32>
    %cst_77 = arith.constant dense<0.000000e+00> : vector<8x32xf32>
    %102 = tpu.matmul %99, %101, %cst_77 {dimension_numbers = #tpu.dot_dimension_numbers<[1], [0], [0], [1], [0, 0, 1, 1], [], []>} : vector<8x8xf32>, vector<8x32xf32>, vector<8x32xf32> -> vector<8x32xf32>
    %103 = arith.addf %62, %102 : vector<8x32xf32>
    %c2 = arith.constant 2 : index
    %c0_78 = arith.constant 0 : index
    %c0_79 = arith.constant 0 : index
    %104 = vector.load %arg7[%c2, %c0_78, %c0_79] : memref<4x32x8xf32, #tpu.memory_space<vmem>>, vector<1x32x8xf32>
    %105 = vector.shape_cast %104 : vector<1x32x8xf32> to vector<32x8xf32>
    %cst_80 = arith.constant dense<0.000000e+00> : vector<8x8xf32>
    %106 = tpu.matmul %9, %105, %cst_80 {dimension_numbers = #tpu.dot_dimension_numbers<[1], [0], [0], [1], [0, 0, 1, 1], [], []>} : vector<8x32xf32>, vector<32x8xf32>, vector<8x8xf32> -> vector<8x8xf32>
    %c2_81 = arith.constant 2 : index
    %c0_82 = arith.constant 0 : index
    %c0_83 = arith.constant 0 : index
    %107 = vector.load %arg8[%c2_81, %c0_82, %c0_83] : memref<4x1x8xf32, #tpu.memory_space<vmem>>, vector<1x1x8xf32>
    %108 = vector.shape_cast %107 : vector<1x1x8xf32> to vector<1x8xf32>
    %109 = vector.broadcast %108 : vector<1x8xf32> to vector<8x8xf32>
    %110 = arith.addf %106, %109 : vector<8x8xf32>
    %c2_84 = arith.constant 2 : index
    %c0_85 = arith.constant 0 : index
    %c0_86 = arith.constant 0 : index
    %111 = vector.load %arg9[%c2_84, %c0_85, %c0_86] : memref<4x32x8xf32, #tpu.memory_space<vmem>>, vector<1x32x8xf32>
    %112 = vector.shape_cast %111 : vector<1x32x8xf32> to vector<32x8xf32>
    %cst_87 = arith.constant dense<0.000000e+00> : vector<8x8xf32>
    %113 = tpu.matmul %9, %112, %cst_87 {dimension_numbers = #tpu.dot_dimension_numbers<[1], [0], [0], [1], [0, 0, 1, 1], [], []>} : vector<8x32xf32>, vector<32x8xf32>, vector<8x8xf32> -> vector<8x8xf32>
    %c2_88 = arith.constant 2 : index
    %c0_89 = arith.constant 0 : index
    %c0_90 = arith.constant 0 : index
    %114 = vector.load %arg10[%c2_88, %c0_89, %c0_90] : memref<4x1x8xf32, #tpu.memory_space<vmem>>, vector<1x1x8xf32>
    %115 = vector.shape_cast %114 : vector<1x1x8xf32> to vector<1x8xf32>
    %116 = vector.broadcast %115 : vector<1x8xf32> to vector<8x8xf32>
    %117 = arith.addf %113, %116 : vector<8x8xf32>
    %c2_91 = arith.constant 2 : index
    %c0_92 = arith.constant 0 : index
    %c0_93 = arith.constant 0 : index
    %118 = vector.load %arg11[%c2_91, %c0_92, %c0_93] : memref<4x32x8xf32, #tpu.memory_space<vmem>>, vector<1x32x8xf32>
    %119 = vector.shape_cast %118 : vector<1x32x8xf32> to vector<32x8xf32>
    %cst_94 = arith.constant dense<0.000000e+00> : vector<8x8xf32>
    %120 = tpu.matmul %9, %119, %cst_94 {dimension_numbers = #tpu.dot_dimension_numbers<[1], [0], [0], [1], [0, 0, 1, 1], [], []>} : vector<8x32xf32>, vector<32x8xf32>, vector<8x8xf32> -> vector<8x8xf32>
    %c2_95 = arith.constant 2 : index
    %c0_96 = arith.constant 0 : index
    %c0_97 = arith.constant 0 : index
    %121 = vector.load %arg12[%c2_95, %c0_96, %c0_97] : memref<4x1x8xf32, #tpu.memory_space<vmem>>, vector<1x1x8xf32>
    %122 = vector.shape_cast %121 : vector<1x1x8xf32> to vector<1x8xf32>
    %123 = vector.broadcast %122 : vector<1x8xf32> to vector<8x8xf32>
    %124 = arith.addf %120, %123 : vector<8x8xf32>
    %cst_98 = arith.constant dense<0.000000e+00> : vector<8x8xf32>
    %125 = tpu.matmul %110, %117, %cst_98 {dimension_numbers = #tpu.dot_dimension_numbers<[1], [1], [0], [0], [0, 0, 1, 0], [], []>} : vector<8x8xf32>, vector<8x8xf32>, vector<8x8xf32> -> vector<8x8xf32>
    %cst_99 = arith.constant 0.353553385 : f32
    %126 = vector.broadcast %cst_99 : f32 to vector<8x8xf32>
    %127 = arith.mulf %125, %126 : vector<8x8xf32>
    %cst_100 = arith.constant -1.000000e+30 : f32
    %128 = vector.broadcast %cst_100 : f32 to vector<8x8xf32>
    %129 = arith.select %20, %128, %127 : vector<8x8xi1>, vector<8x8xf32>
    %cst_101 = arith.constant dense<0xFF800000> : vector<8xf32>
    %130 = vector.multi_reduction <maximumf>, %129, %cst_101 [1] : vector<8x8xf32> to vector<8xf32>
    %131 = vector.shape_cast %130 : vector<8xf32> to vector<8x1xf32>
    %132 = vector.broadcast %131 : vector<8x1xf32> to vector<8x8xf32>
    %133 = arith.subf %129, %132 : vector<8x8xf32>
    %134 = math.exp %133 : vector<8x8xf32>
    %cst_102 = arith.constant dense<0.000000e+00> : vector<8xf32>
    %135 = vector.multi_reduction <add>, %134, %cst_102 [1] : vector<8x8xf32> to vector<8xf32>
    %136 = vector.shape_cast %135 : vector<8xf32> to vector<8x1xf32>
    %137 = tpu.reciprocal %136 {approx = true} : vector<8x1xf32> -> vector<8x1xf32>
    %138 = vector.broadcast %137 : vector<8x1xf32> to vector<8x8xf32>
    %139 = arith.mulf %134, %138 : vector<8x8xf32>
    %cst_103 = arith.constant dense<0.000000e+00> : vector<8x8xf32>
    %140 = tpu.matmul %139, %124, %cst_103 {dimension_numbers = #tpu.dot_dimension_numbers<[1], [0], [0], [1], [0, 0, 1, 1], [], []>} : vector<8x8xf32>, vector<8x8xf32>, vector<8x8xf32> -> vector<8x8xf32>
    %c2_104 = arith.constant 2 : index
    %c0_105 = arith.constant 0 : index
    %c0_106 = arith.constant 0 : index
    %141 = vector.load %arg13[%c2_104, %c0_105, %c0_106] : memref<4x8x32xf32, #tpu.memory_space<vmem>>, vector<1x8x32xf32>
    %142 = vector.shape_cast %141 : vector<1x8x32xf32> to vector<8x32xf32>
    %cst_107 = arith.constant dense<0.000000e+00> : vector<8x32xf32>
    %143 = tpu.matmul %140, %142, %cst_107 {dimension_numbers = #tpu.dot_dimension_numbers<[1], [0], [0], [1], [0, 0, 1, 1], [], []>} : vector<8x8xf32>, vector<8x32xf32>, vector<8x32xf32> -> vector<8x32xf32>
    %144 = arith.addf %103, %143 : vector<8x32xf32>
    %c3 = arith.constant 3 : index
    %c0_108 = arith.constant 0 : index
    %c0_109 = arith.constant 0 : index
    %145 = vector.load %arg7[%c3, %c0_108, %c0_109] : memref<4x32x8xf32, #tpu.memory_space<vmem>>, vector<1x32x8xf32>
    %146 = vector.shape_cast %145 : vector<1x32x8xf32> to vector<32x8xf32>
    %cst_110 = arith.constant dense<0.000000e+00> : vector<8x8xf32>
    %147 = tpu.matmul %9, %146, %cst_110 {dimension_numbers = #tpu.dot_dimension_numbers<[1], [0], [0], [1], [0, 0, 1, 1], [], []>} : vector<8x32xf32>, vector<32x8xf32>, vector<8x8xf32> -> vector<8x8xf32>
    %c3_111 = arith.constant 3 : index
    %c0_112 = arith.constant 0 : index
    %c0_113 = arith.constant 0 : index
    %148 = vector.load %arg8[%c3_111, %c0_112, %c0_113] : memref<4x1x8xf32, #tpu.memory_space<vmem>>, vector<1x1x8xf32>
    %149 = vector.shape_cast %148 : vector<1x1x8xf32> to vector<1x8xf32>
    %150 = vector.broadcast %149 : vector<1x8xf32> to vector<8x8xf32>
    %151 = arith.addf %147, %150 : vector<8x8xf32>
    %c3_114 = arith.constant 3 : index
    %c0_115 = arith.constant 0 : index
    %c0_116 = arith.constant 0 : index
    %152 = vector.load %arg9[%c3_114, %c0_115, %c0_116] : memref<4x32x8xf32, #tpu.memory_space<vmem>>, vector<1x32x8xf32>
    %153 = vector.shape_cast %152 : vector<1x32x8xf32> to vector<32x8xf32>
    %cst_117 = arith.constant dense<0.000000e+00> : vector<8x8xf32>
    %154 = tpu.matmul %9, %153, %cst_117 {dimension_numbers = #tpu.dot_dimension_numbers<[1], [0], [0], [1], [0, 0, 1, 1], [], []>} : vector<8x32xf32>, vector<32x8xf32>, vector<8x8xf32> -> vector<8x8xf32>
    %c3_118 = arith.constant 3 : index
    %c0_119 = arith.constant 0 : index
    %c0_120 = arith.constant 0 : index
    %155 = vector.load %arg10[%c3_118, %c0_119, %c0_120] : memref<4x1x8xf32, #tpu.memory_space<vmem>>, vector<1x1x8xf32>
    %156 = vector.shape_cast %155 : vector<1x1x8xf32> to vector<1x8xf32>
    %157 = vector.broadcast %156 : vector<1x8xf32> to vector<8x8xf32>
    %158 = arith.addf %154, %157 : vector<8x8xf32>
    %c3_121 = arith.constant 3 : index
    %c0_122 = arith.constant 0 : index
    %c0_123 = arith.constant 0 : index
    %159 = vector.load %arg11[%c3_121, %c0_122, %c0_123] : memref<4x32x8xf32, #tpu.memory_space<vmem>>, vector<1x32x8xf32>
    %160 = vector.shape_cast %159 : vector<1x32x8xf32> to vector<32x8xf32>
    %cst_124 = arith.constant dense<0.000000e+00> : vector<8x8xf32>
    %161 = tpu.matmul %9, %160, %cst_124 {dimension_numbers = #tpu.dot_dimension_numbers<[1], [0], [0], [1], [0, 0, 1, 1], [], []>} : vector<8x32xf32>, vector<32x8xf32>, vector<8x8xf32> -> vector<8x8xf32>
    %c3_125 = arith.constant 3 : index
    %c0_126 = arith.constant 0 : index
    %c0_127 = arith.constant 0 : index
    %162 = vector.load %arg12[%c3_125, %c0_126, %c0_127] : memref<4x1x8xf32, #tpu.memory_space<vmem>>, vector<1x1x8xf32>
    %163 = vector.shape_cast %162 : vector<1x1x8xf32> to vector<1x8xf32>
    %164 = vector.broadcast %163 : vector<1x8xf32> to vector<8x8xf32>
    %165 = arith.addf %161, %164 : vector<8x8xf32>
    %cst_128 = arith.constant dense<0.000000e+00> : vector<8x8xf32>
    %166 = tpu.matmul %151, %158, %cst_128 {dimension_numbers = #tpu.dot_dimension_numbers<[1], [1], [0], [0], [0, 0, 1, 0], [], []>} : vector<8x8xf32>, vector<8x8xf32>, vector<8x8xf32> -> vector<8x8xf32>
    %cst_129 = arith.constant 0.353553385 : f32
    %167 = vector.broadcast %cst_129 : f32 to vector<8x8xf32>
    %168 = arith.mulf %166, %167 : vector<8x8xf32>
    %cst_130 = arith.constant -1.000000e+30 : f32
    %169 = vector.broadcast %cst_130 : f32 to vector<8x8xf32>
    %170 = arith.select %20, %169, %168 : vector<8x8xi1>, vector<8x8xf32>
    %cst_131 = arith.constant dense<0xFF800000> : vector<8xf32>
    %171 = vector.multi_reduction <maximumf>, %170, %cst_131 [1] : vector<8x8xf32> to vector<8xf32>
    %172 = vector.shape_cast %171 : vector<8xf32> to vector<8x1xf32>
    %173 = vector.broadcast %172 : vector<8x1xf32> to vector<8x8xf32>
    %174 = arith.subf %170, %173 : vector<8x8xf32>
    %175 = math.exp %174 : vector<8x8xf32>
    %cst_132 = arith.constant dense<0.000000e+00> : vector<8xf32>
    %176 = vector.multi_reduction <add>, %175, %cst_132 [1] : vector<8x8xf32> to vector<8xf32>
    %177 = vector.shape_cast %176 : vector<8xf32> to vector<8x1xf32>
    %178 = tpu.reciprocal %177 {approx = true} : vector<8x1xf32> -> vector<8x1xf32>
    %179 = vector.broadcast %178 : vector<8x1xf32> to vector<8x8xf32>
    %180 = arith.mulf %175, %179 : vector<8x8xf32>
    %cst_133 = arith.constant dense<0.000000e+00> : vector<8x8xf32>
    %181 = tpu.matmul %180, %165, %cst_133 {dimension_numbers = #tpu.dot_dimension_numbers<[1], [0], [0], [1], [0, 0, 1, 1], [], []>} : vector<8x8xf32>, vector<8x8xf32>, vector<8x8xf32> -> vector<8x8xf32>
    %c3_134 = arith.constant 3 : index
    %c0_135 = arith.constant 0 : index
    %c0_136 = arith.constant 0 : index
    %182 = vector.load %arg13[%c3_134, %c0_135, %c0_136] : memref<4x8x32xf32, #tpu.memory_space<vmem>>, vector<1x8x32xf32>
    %183 = vector.shape_cast %182 : vector<1x8x32xf32> to vector<8x32xf32>
    %cst_137 = arith.constant dense<0.000000e+00> : vector<8x32xf32>
    %184 = tpu.matmul %181, %183, %cst_137 {dimension_numbers = #tpu.dot_dimension_numbers<[1], [0], [0], [1], [0, 0, 1, 1], [], []>} : vector<8x8xf32>, vector<8x32xf32>, vector<8x32xf32> -> vector<8x32xf32>
    %185 = arith.addf %144, %184 : vector<8x32xf32>
    %c0_138 = arith.constant 0 : index
    %c0_139 = arith.constant 0 : index
    %186 = vector.load %arg14[%c0_138, %c0_139] : memref<1x32xf32, #tpu.memory_space<vmem>>, vector<1x32xf32>
    %187 = vector.broadcast %186 : vector<1x32xf32> to vector<8x32xf32>
    %188 = arith.addf %185, %187 : vector<8x32xf32>
    %189 = arith.addf %9, %188 : vector<8x32xf32>
    %c0_140 = arith.constant 0 : index
    %c0_141 = arith.constant 0 : index
    %190 = vector.load %arg15[%c0_140, %c0_141] : memref<1x32xf32, #tpu.memory_space<vmem>>, vector<1x32xf32>
    %c0_142 = arith.constant 0 : index
    %c0_143 = arith.constant 0 : index
    %191 = vector.load %arg16[%c0_142, %c0_143] : memref<1x32xf32, #tpu.memory_space<vmem>>, vector<1x32xf32>
    %cst_144 = arith.constant dense<0.000000e+00> : vector<8xf32>
    %192 = vector.multi_reduction <add>, %189, %cst_144 [1] : vector<8x32xf32> to vector<8xf32>
    %193 = vector.shape_cast %192 : vector<8xf32> to vector<8x1xf32>
    %cst_145 = arith.constant 3.200000e+01 : f32
    %194 = vector.broadcast %cst_145 : f32 to vector<8x1xf32>
    %195 = arith.divf %193, %194 : vector<8x1xf32>
    %196 = vector.broadcast %195 : vector<8x1xf32> to vector<8x32xf32>
    %197 = arith.subf %189, %196 : vector<8x32xf32>
    %198 = arith.mulf %197, %197 : vector<8x32xf32>
    %cst_146 = arith.constant dense<0.000000e+00> : vector<8xf32>
    %199 = vector.multi_reduction <add>, %198, %cst_146 [1] : vector<8x32xf32> to vector<8xf32>
    %200 = vector.shape_cast %199 : vector<8xf32> to vector<8x1xf32>
    %cst_147 = arith.constant 3.200000e+01 : f32
    %201 = vector.broadcast %cst_147 : f32 to vector<8x1xf32>
    %202 = arith.divf %200, %201 : vector<8x1xf32>
    %203 = vector.broadcast %195 : vector<8x1xf32> to vector<8x32xf32>
    %204 = arith.subf %189, %203 : vector<8x32xf32>
    %cst_148 = arith.constant 9.99999974E-6 : f32
    %205 = vector.broadcast %cst_148 : f32 to vector<8x1xf32>
    %206 = arith.addf %202, %205 : vector<8x1xf32>
    %207 = math.rsqrt %206 : vector<8x1xf32>
    %208 = vector.broadcast %207 : vector<8x1xf32> to vector<8x32xf32>
    %209 = arith.mulf %204, %208 : vector<8x32xf32>
    %210 = vector.broadcast %190 : vector<1x32xf32> to vector<8x32xf32>
    %211 = arith.mulf %209, %210 : vector<8x32xf32>
    %212 = vector.broadcast %191 : vector<1x32xf32> to vector<8x32xf32>
    %213 = arith.addf %211, %212 : vector<8x32xf32>
    %214 = arith.addf %9, %213 : vector<8x32xf32>
    %c0_149 = arith.constant 0 : index
    %c0_150 = arith.constant 0 : index
    %215 = vector.load %arg17[%c0_149, %c0_150] : memref<1x32xf32, #tpu.memory_space<vmem>>, vector<1x32xf32>
    %c0_151 = arith.constant 0 : index
    %c0_152 = arith.constant 0 : index
    %216 = vector.load %arg18[%c0_151, %c0_152] : memref<1x32xf32, #tpu.memory_space<vmem>>, vector<1x32xf32>
    %cst_153 = arith.constant dense<0.000000e+00> : vector<8xf32>
    %217 = vector.multi_reduction <add>, %214, %cst_153 [1] : vector<8x32xf32> to vector<8xf32>
    %218 = vector.shape_cast %217 : vector<8xf32> to vector<8x1xf32>
    %cst_154 = arith.constant 3.200000e+01 : f32
    %219 = vector.broadcast %cst_154 : f32 to vector<8x1xf32>
    %220 = arith.divf %218, %219 : vector<8x1xf32>
    %221 = vector.broadcast %220 : vector<8x1xf32> to vector<8x32xf32>
    %222 = arith.subf %214, %221 : vector<8x32xf32>
    %223 = arith.mulf %222, %222 : vector<8x32xf32>
    %cst_155 = arith.constant dense<0.000000e+00> : vector<8xf32>
    %224 = vector.multi_reduction <add>, %223, %cst_155 [1] : vector<8x32xf32> to vector<8xf32>
    %225 = vector.shape_cast %224 : vector<8xf32> to vector<8x1xf32>
    %cst_156 = arith.constant 3.200000e+01 : f32
    %226 = vector.broadcast %cst_156 : f32 to vector<8x1xf32>
    %227 = arith.divf %225, %226 : vector<8x1xf32>
    %228 = vector.broadcast %220 : vector<8x1xf32> to vector<8x32xf32>
    %229 = arith.subf %214, %228 : vector<8x32xf32>
    %cst_157 = arith.constant 9.99999974E-6 : f32
    %230 = vector.broadcast %cst_157 : f32 to vector<8x1xf32>
    %231 = arith.addf %227, %230 : vector<8x1xf32>
    %232 = math.rsqrt %231 : vector<8x1xf32>
    %233 = vector.broadcast %232 : vector<8x1xf32> to vector<8x32xf32>
    %234 = arith.mulf %229, %233 : vector<8x32xf32>
    %235 = vector.broadcast %215 : vector<1x32xf32> to vector<8x32xf32>
    %236 = arith.mulf %234, %235 : vector<8x32xf32>
    %237 = vector.broadcast %216 : vector<1x32xf32> to vector<8x32xf32>
    %238 = arith.addf %236, %237 : vector<8x32xf32>
    %239 = vector.broadcast %11 : vector<8x1xf32> to vector<8x32xf32>
    %240 = arith.mulf %238, %239 : vector<8x32xf32>
    %c0_158 = arith.constant 0 : index
    %c0_159 = arith.constant 0 : index
    %241 = vector.load %arg19[%c0_158, %c0_159] : memref<32x64xf32, #tpu.memory_space<vmem>>, vector<32x64xf32>
    %cst_160 = arith.constant dense<0.000000e+00> : vector<8x64xf32>
    %242 = tpu.matmul %240, %241, %cst_160 {dimension_numbers = #tpu.dot_dimension_numbers<[1], [0], [0], [1], [0, 0, 1, 1], [], []>} : vector<8x32xf32>, vector<32x64xf32>, vector<8x64xf32> -> vector<8x64xf32>
    %c0_161 = arith.constant 0 : index
    %c0_162 = arith.constant 0 : index
    %243 = vector.load %arg20[%c0_161, %c0_162] : memref<1x64xf32, #tpu.memory_space<vmem>>, vector<1x64xf32>
    %244 = vector.broadcast %243 : vector<1x64xf32> to vector<8x64xf32>
    %245 = arith.addf %242, %244 : vector<8x64xf32>
    %cst_163 = arith.constant 0.000000e+00 : f32
    %246 = vector.broadcast %cst_163 : f32 to vector<8x64xf32>
    %247 = arith.maximumf %245, %246 : vector<8x64xf32>
    %c0_164 = arith.constant 0 : index
    %c0_165 = arith.constant 0 : index
    %248 = vector.load %arg21[%c0_164, %c0_165] : memref<64x32xf32, #tpu.memory_space<vmem>>, vector<64x32xf32>
    %cst_166 = arith.constant dense<0.000000e+00> : vector<8x32xf32>
    %249 = tpu.matmul %247, %248, %cst_166 {dimension_numbers = #tpu.dot_dimension_numbers<[1], [0], [0], [1], [0, 0, 1, 1], [], []>} : vector<8x64xf32>, vector<64x32xf32>, vector<8x32xf32> -> vector<8x32xf32>
    %c0_167 = arith.constant 0 : index
    %c0_168 = arith.constant 0 : index
    %250 = vector.load %arg22[%c0_167, %c0_168] : memref<1x32xf32, #tpu.memory_space<vmem>>, vector<1x32xf32>
    %251 = vector.broadcast %250 : vector<1x32xf32> to vector<8x32xf32>
    %252 = arith.addf %249, %251 : vector<8x32xf32>
    %253 = arith.addf %240, %252 : vector<8x32xf32>
    %c0_169 = arith.constant 0 : index
    %c0_170 = arith.constant 0 : index
    %254 = vector.load %arg23[%c0_169, %c0_170] : memref<1x32xf32, #tpu.memory_space<vmem>>, vector<1x32xf32>
    %c0_171 = arith.constant 0 : index
    %c0_172 = arith.constant 0 : index
    %255 = vector.load %arg24[%c0_171, %c0_172] : memref<1x32xf32, #tpu.memory_space<vmem>>, vector<1x32xf32>
    %cst_173 = arith.constant dense<0.000000e+00> : vector<8xf32>
    %256 = vector.multi_reduction <add>, %253, %cst_173 [1] : vector<8x32xf32> to vector<8xf32>
    %257 = vector.shape_cast %256 : vector<8xf32> to vector<8x1xf32>
    %cst_174 = arith.constant 3.200000e+01 : f32
    %258 = vector.broadcast %cst_174 : f32 to vector<8x1xf32>
    %259 = arith.divf %257, %258 : vector<8x1xf32>
    %260 = vector.broadcast %259 : vector<8x1xf32> to vector<8x32xf32>
    %261 = arith.subf %253, %260 : vector<8x32xf32>
    %262 = arith.mulf %261, %261 : vector<8x32xf32>
    %cst_175 = arith.constant dense<0.000000e+00> : vector<8xf32>
    %263 = vector.multi_reduction <add>, %262, %cst_175 [1] : vector<8x32xf32> to vector<8xf32>
    %264 = vector.shape_cast %263 : vector<8xf32> to vector<8x1xf32>
    %cst_176 = arith.constant 3.200000e+01 : f32
    %265 = vector.broadcast %cst_176 : f32 to vector<8x1xf32>
    %266 = arith.divf %264, %265 : vector<8x1xf32>
    %267 = vector.broadcast %259 : vector<8x1xf32> to vector<8x32xf32>
    %268 = arith.subf %253, %267 : vector<8x32xf32>
    %cst_177 = arith.constant 9.99999974E-6 : f32
    %269 = vector.broadcast %cst_177 : f32 to vector<8x1xf32>
    %270 = arith.addf %266, %269 : vector<8x1xf32>
    %271 = math.rsqrt %270 : vector<8x1xf32>
    %272 = vector.broadcast %271 : vector<8x1xf32> to vector<8x32xf32>
    %273 = arith.mulf %268, %272 : vector<8x32xf32>
    %274 = vector.broadcast %254 : vector<1x32xf32> to vector<8x32xf32>
    %275 = arith.mulf %273, %274 : vector<8x32xf32>
    %276 = vector.broadcast %255 : vector<1x32xf32> to vector<8x32xf32>
    %277 = arith.addf %275, %276 : vector<8x32xf32>
    %278 = vector.broadcast %11 : vector<8x1xf32> to vector<8x32xf32>
    %279 = arith.mulf %277, %278 : vector<8x32xf32>
    %c0_178 = arith.constant 0 : index
    %c0_179 = arith.constant 0 : index
    %c0_180 = arith.constant 0 : index
    %280 = vector.load %arg28[%c0_178, %c0_179, %c0_180] : memref<1x8x32xf32, #tpu.memory_space<vmem>>, vector<1x8x32xf32>
    %281 = vector.shape_cast %280 : vector<1x8x32xf32> to vector<8x32xf32>
    %282 = vector.shape_cast %279 : vector<8x32xf32> to vector<1x8x32xf32>
    tpu.vector_store %arg28[%c0_178, %c0_179, %c0_180], %282 {strides = array<i32>} : memref<1x8x32xf32, #tpu.memory_space<vmem>>, vector<1x8x32xf32>,
    %c0_181 = arith.constant 0 : index
    %c0_182 = arith.constant 0 : index
    %283 = vector.load %arg25[%c0_181, %c0_182] : memref<32x128xf32, #tpu.memory_space<vmem>>, vector<32x128xf32>
    %cst_183 = arith.constant dense<0.000000e+00> : vector<8x128xf32>
    %284 = tpu.matmul %279, %283, %cst_183 {dimension_numbers = #tpu.dot_dimension_numbers<[1], [0], [0], [1], [0, 0, 1, 1], [], []>} : vector<8x32xf32>, vector<32x128xf32>, vector<8x128xf32> -> vector<8x128xf32>
    %c0_184 = arith.constant 0 : index
    %c0_185 = arith.constant 0 : index
    %285 = vector.load %arg26[%c0_184, %c0_185] : memref<1x128xf32, #tpu.memory_space<vmem>>, vector<1x128xf32>
    %286 = vector.broadcast %285 : vector<1x128xf32> to vector<8x128xf32>
    %287 = arith.addf %284, %286 : vector<8x128xf32>
    %cst_186 = arith.constant dense<0xFF800000> : vector<8xf32>
    %288 = vector.multi_reduction <maximumf>, %287, %cst_186 [1] : vector<8x128xf32> to vector<8xf32>
    %289 = vector.shape_cast %288 : vector<8xf32> to vector<8x1xf32>
    %290 = vector.broadcast %289 : vector<8x1xf32> to vector<8x128xf32>
    %291 = arith.subf %287, %290 : vector<8x128xf32>
    %292 = math.exp %291 : vector<8x128xf32>
    %cst_187 = arith.constant dense<0.000000e+00> : vector<8xf32>
    %293 = vector.multi_reduction <add>, %292, %cst_187 [1] : vector<8x128xf32> to vector<8xf32>
    %294 = vector.shape_cast %293 : vector<8xf32> to vector<8x1xf32>
    %295 = math.log %294 : vector<8x1xf32>
    %296 = arith.addf %295, %289 : vector<8x1xf32>
    %297 = vector.broadcast %296 : vector<8x1xf32> to vector<8x128xf32>
    %298 = arith.subf %287, %297 : vector<8x128xf32>
    %c0_188 = arith.constant 0 : index
    %c0_189 = arith.constant 0 : index
    %c0_190 = arith.constant 0 : index
    %299 = vector.load %arg27[%c0_188, %c0_189, %c0_190] : memref<1x8x128xf32, #tpu.memory_space<vmem>>, vector<1x8x128xf32>
    %300 = vector.shape_cast %299 : vector<1x8x128xf32> to vector<8x128xf32>
    %301 = vector.shape_cast %298 : vector<8x128xf32> to vector<1x8x128xf32>
    tpu.vector_store %arg27[%c0_188, %c0_189, %c0_190], %301 {strides = array<i32>} : memref<1x8x128xf32, #tpu.memory_space<vmem>>, vector<1x8x128xf32>,
    return
  }
  func.func @transform_0(%arg0: i32) -> (i32, i32, i32) {
    %c0_i32 = arith.constant 0 : i32
    %c0_i32_0 = arith.constant 0 : i32
    %c0_i32_1 = arith.constant 0 : i32
    return %arg0, %c0_i32, %c0_i32_0 : i32, i32, i32
  }
  func.func @transform_1(%arg0: i32) -> (i32, i32, i32) {
    %c0_i32 = arith.constant 0 : i32
    %c0_i32_0 = arith.constant 0 : i32
    %c0_i32_1 = arith.constant 0 : i32
    return %arg0, %c0_i32, %c0_i32_0 : i32, i32, i32
  }
  func.func @transform_2(%arg0: i32) -> (i32, i32, i32) {
    %c0_i32 = arith.constant 0 : i32
    %c0_i32_0 = arith.constant 0 : i32
    %c0_i32_1 = arith.constant 0 : i32
    return %arg0, %c0_i32, %c0_i32_0 : i32, i32, i32
  }
  func.func @transform_3(%arg0: i32) -> (i32, i32, i32) {
    %c0_i32 = arith.constant 0 : i32
    %c0_i32_0 = arith.constant 0 : i32
    %c0_i32_1 = arith.constant 0 : i32
    return %arg0, %c0_i32, %c0_i32_0 : i32, i32, i32
  }
  func.func @transform_4(%arg0: i32) -> (i32, i32) {
    %c0_i32 = arith.constant 0 : i32
    %c0_i32_0 = arith.constant 0 : i32
    %c0_i32_1 = arith.constant 0 : i32
    return %c0_i32, %c0_i32_0 : i32, i32
  }
  func.func @transform_5(%arg0: i32) -> (i32, i32) {
    %c0_i32 = arith.constant 0 : i32
    %c0_i32_0 = arith.constant 0 : i32
    %c0_i32_1 = arith.constant 0 : i32
    return %c0_i32, %c0_i32_0 : i32, i32
  }
  func.func @transform_6(%arg0: i32) -> (i32, i32, i32) {
    %c0_i32 = arith.constant 0 : i32
    %c0_i32_0 = arith.constant 0 : i32
    %c0_i32_1 = arith.constant 0 : i32
    %c0_i32_2 = arith.constant 0 : i32
    return %c0_i32, %c0_i32_0, %c0_i32_1 : i32, i32, i32
  }
  func.func @transform_7(%arg0: i32) -> (i32, i32, i32) {
    %c0_i32 = arith.constant 0 : i32
    %c0_i32_0 = arith.constant 0 : i32
    %c0_i32_1 = arith.constant 0 : i32
    %c0_i32_2 = arith.constant 0 : i32
    return %c0_i32, %c0_i32_0, %c0_i32_1 : i32, i32, i32
  }
  func.func @transform_8(%arg0: i32) -> (i32, i32, i32) {
    %c0_i32 = arith.constant 0 : i32
    %c0_i32_0 = arith.constant 0 : i32
    %c0_i32_1 = arith.constant 0 : i32
    %c0_i32_2 = arith.constant 0 : i32
    return %c0_i32, %c0_i32_0, %c0_i32_1 : i32, i32, i32
  }
  func.func @transform_9(%arg0: i32) -> (i32, i32, i32) {
    %c0_i32 = arith.constant 0 : i32
    %c0_i32_0 = arith.constant 0 : i32
    %c0_i32_1 = arith.constant 0 : i32
    %c0_i32_2 = arith.constant 0 : i32
    return %c0_i32, %c0_i32_0, %c0_i32_1 : i32, i32, i32
  }
  func.func @transform_10(%arg0: i32) -> (i32, i32, i32) {
    %c0_i32 = arith.constant 0 : i32
    %c0_i32_0 = arith.constant 0 : i32
    %c0_i32_1 = arith.constant 0 : i32
    %c0_i32_2 = arith.constant 0 : i32
    return %c0_i32, %c0_i32_0, %c0_i32_1 : i32, i32, i32
  }
  func.func @transform_11(%arg0: i32) -> (i32, i32, i32) {
    %c0_i32 = arith.constant 0 : i32
    %c0_i32_0 = arith.constant 0 : i32
    %c0_i32_1 = arith.constant 0 : i32
    %c0_i32_2 = arith.constant 0 : i32
    return %c0_i32, %c0_i32_0, %c0_i32_1 : i32, i32, i32
  }
  func.func @transform_12(%arg0: i32) -> (i32, i32, i32) {
    %c0_i32 = arith.constant 0 : i32
    %c0_i32_0 = arith.constant 0 : i32
    %c0_i32_1 = arith.constant 0 : i32
    %c0_i32_2 = arith.constant 0 : i32
    return %c0_i32, %c0_i32_0, %c0_i32_1 : i32, i32, i32
  }
  func.func @transform_13(%arg0: i32) -> (i32, i32) {
    %c0_i32 = arith.constant 0 : i32
    %c0_i32_0 = arith.constant 0 : i32
    %c0_i32_1 = arith.constant 0 : i32
    return %c0_i32, %c0_i32_0 : i32, i32
  }
  func.func @transform_14(%arg0: i32) -> (i32, i32) {
    %c0_i32 = arith.constant 0 : i32
    %c0_i32_0 = arith.constant 0 : i32
    %c0_i32_1 = arith.constant 0 : i32
    return %c0_i32, %c0_i32_0 : i32, i32
  }
  func.func @transform_15(%arg0: i32) -> (i32, i32) {
    %c0_i32 = arith.constant 0 : i32
    %c0_i32_0 = arith.constant 0 : i32
    %c0_i32_1 = arith.constant 0 : i32
    return %c0_i32, %c0_i32_0 : i32, i32
  }
  func.func @transform_16(%arg0: i32) -> (i32, i32) {
    %c0_i32 = arith.constant 0 : i32
    %c0_i32_0 = arith.constant 0 : i32
    %c0_i32_1 = arith.constant 0 : i32
    return %c0_i32, %c0_i32_0 : i32, i32
  }
  func.func @transform_17(%arg0: i32) -> (i32, i32) {
    %c0_i32 = arith.constant 0 : i32
    %c0_i32_0 = arith.constant 0 : i32
    %c0_i32_1 = arith.constant 0 : i32
    return %c0_i32, %c0_i32_0 : i32, i32
  }
  func.func @transform_18(%arg0: i32) -> (i32, i32) {
    %c0_i32 = arith.constant 0 : i32
    %c0_i32_0 = arith.constant 0 : i32
    %c0_i32_1 = arith.constant 0 : i32
    return %c0_i32, %c0_i32_0 : i32, i32
  }
  func.func @transform_19(%arg0: i32) -> (i32, i32) {
    %c0_i32 = arith.constant 0 : i32
    %c0_i32_0 = arith.constant 0 : i32
    %c0_i32_1 = arith.constant 0 : i32
    return %c0_i32, %c0_i32_0 : i32, i32
  }
  func.func @transform_20(%arg0: i32) -> (i32, i32) {
    %c0_i32 = arith.constant 0 : i32
    %c0_i32_0 = arith.constant 0 : i32
    %c0_i32_1 = arith.constant 0 : i32
    return %c0_i32, %c0_i32_0 : i32, i32
  }
  func.func @transform_21(%arg0: i32) -> (i32, i32) {
    %c0_i32 = arith.constant 0 : i32
    %c0_i32_0 = arith.constant 0 : i32
    %c0_i32_1 = arith.constant 0 : i32
    return %c0_i32, %c0_i32_0 : i32, i32
  }
  func.func @transform_22(%arg0: i32) -> (i32, i32) {
    %c0_i32 = arith.constant 0 : i32
    %c0_i32_0 = arith.constant 0 : i32
    %c0_i32_1 = arith.constant 0 : i32
    return %c0_i32, %c0_i32_0 : i32, i32
  }
  func.func @transform_23(%arg0: i32) -> (i32, i32) {
    %c0_i32 = arith.constant 0 : i32
    %c0_i32_0 = arith.constant 0 : i32
    %c0_i32_1 = arith.constant 0 : i32
    return %c0_i32, %c0_i32_0 : i32, i32
  }
  func.func @transform_24(%arg0: i32) -> (i32, i32) {
    %c0_i32 = arith.constant 0 : i32
    %c0_i32_0 = arith.constant 0 : i32
    %c0_i32_1 = arith.constant 0 : i32
    return %c0_i32, %c0_i32_0 : i32, i32
  }
  func.func @transform_25(%arg0: i32) -> (i32, i32) {
    %c0_i32 = arith.constant 0 : i32
    %c0_i32_0 = arith.constant 0 : i32
    %c0_i32_1 = arith.constant 0 : i32
    return %c0_i32, %c0_i32_0 : i32, i32
  }
  func.func @transform_26(%arg0: i32) -> (i32, i32, i32) {
    %c0_i32 = arith.constant 0 : i32
    %c0_i32_0 = arith.constant 0 : i32
    %c0_i32_1 = arith.constant 0 : i32
    return %arg0, %c0_i32, %c0_i32_0 : i32, i32, i32
  }
  func.func @transform_27(%arg0: i32) -> (i32, i32, i32) {
    %c0_i32 = arith.constant 0 : i32
    %c0_i32_0 = arith.constant 0 : i32
    %c0_i32_1 = arith.constant 0 : i32
    return %arg0, %c0_i32, %c0_i32_0 : i32, i32, i32
  }
}

</mosaic_0001>

<llo_original>
// kernel: custom-call.1
$region0: #{custom-call.1}
  %s0 = inlined_call_operand.vmem [shape: u32[24], index: 0, kind: output, shape index: {}]

// kernel: language_model_forward.1
$region0: #{language_model_forward.1}
  #allocation0 [shape = 'u32[]', space=smem, size = 0x4, offset = 0x4, fixed_abs, tag = 'smem constant byte address 0x4 - core index']
  #allocation1 [shape = 'u32[144,128]{1,0:T(1,128)}', space=vmem, size = 0x12000, scoped, tag = 'internal scratch']
  %s0 = inlined_call_operand.vmem [shape: f32[2,8,48], index: 0, kind: input, shape index: {}]
  %s1 = inlined_call_operand.vmem [shape: f32[2,8,32], index: 1, kind: input, shape index: {}]
  %s2 = inlined_call_operand.vmem [shape: f32[2,8,1], index: 2, kind: input, shape index: {}]
  %s3 = inlined_call_operand.vmem [shape: f32[2,1,8], index: 3, kind: input, shape index: {}]
  %s4 = inlined_call_operand.vmem [shape: f32[48,32], index: 4, kind: input, shape index: {}]
  %s5 = inlined_call_operand.vmem [shape: f32[1,32], index: 5, kind: input, shape index: {}]
  %s6 = inlined_call_operand.vmem [shape: f32[4,32,8], index: 6, kind: input, shape index: {}]
  %s7 = inlined_call_operand.vmem [shape: f32[4,1,8], index: 7, kind: input, shape index: {}]
  %s8 = inlined_call_operand.vmem [shape: f32[4,32,8], index: 8, kind: input, shape index: {}]
  %s9 = inlined_call_operand.vmem [shape: f32[4,1,8], index: 9, kind: input, shape index: {}]
  %s10 = inlined_call_operand.vmem [shape: f32[4,32,8], index: 10, kind: input, shape index: {}]
  %s11 = inlined_call_operand.vmem [shape: f32[4,1,8], index: 11, kind: input, shape index: {}]
  %s12 = inlined_call_operand.vmem [shape: f32[4,8,32], index: 12, kind: input, shape index: {}]
  %s13 = inlined_call_operand.vmem [shape: f32[1,32], index: 13, kind: input, shape index: {}]
  %s14 = inlined_call_operand.vmem [shape: f32[1,32], index: 14, kind: input, shape index: {}]
  %s15 = inlined_call_operand.vmem [shape: f32[1,32], index: 15, kind: input, shape index: {}]
  %s16 = inlined_call_operand.vmem [shape: f32[1,32], index: 16, kind: input, shape index: {}]
  %s17 = inlined_call_operand.vmem [shape: f32[1,32], index: 17, kind: input, shape index: {}]
  %s18 = inlined_call_operand.vmem [shape: f32[32,64], index: 18, kind: input, shape index: {}]
  %s19 = inlined_call_operand.vmem [shape: f32[1,64], index: 19, kind: input, shape index: {}]
  %s20 = inlined_call_operand.vmem [shape: f32[64,32], index: 20, kind: input, shape index: {}]
  %s21 = inlined_call_operand.vmem [shape: f32[1,32], index: 21, kind: input, shape index: {}]
  %s22 = inlined_call_operand.vmem [shape: f32[1,32], index: 22, kind: input, shape index: {}]
  %s23 = inlined_call_operand.vmem [shape: f32[1,32], index: 23, kind: input, shape index: {}]
  %s24 = inlined_call_operand.vmem [shape: f32[32,128], index: 24, kind: input, shape index: {}]
  %s25 = inlined_call_operand.vmem [shape: f32[1,128], index: 25, kind: input, shape index: {}]
  %s26 = inlined_call_operand.hbm [shape: f32[2,8,128], index: 26, kind: output, shape index: {0}]
  %s27 = inlined_call_operand.hbm [shape: f32[2,8,32], index: 27, kind: output, shape index: {1}]
  %28 = xla_tuple %s26, %s27
  %s29 = sld [smem:[#allocation0]]
  $region145: #{language_model_forward.1} parent=0
    _
  %s31 = ssub.s32 1, %s29
  %s32 = scalar_select 0, %s31, %s29
  $region1: #{language_model_forward.1} parent=0
    #allocation2 [shape = 'u8[8192]{0}', space=vmem, size = 0x2000, scoped, tag = 'output window, operand 0']
    #allocation3 [shape = 's32[2]{0}', space=sflag, size = 0x8, scoped, tag = 'scoped memory for language_model_forward.1']
    #allocation4 [shape = 'u8[8192]{0}', space=vmem, size = 0x2000, scoped, tag = 'output window, operand 1']
    #allocation5 [shape = 's32[2]{0}', space=sflag, size = 0x8, scoped, tag = 'scoped memory for language_model_forward.1']
    %33 = vsyncpa [#allocation3], 0
    %s34 = scalar_lea.sflag [#allocation3], 1
    %35 = vsyncpa %s34, 0
    %36 = vsyncpa [#allocation5], 0
    %s37 = scalar_lea.sflag [#allocation5], 1
    %38 = vsyncpa %s37, 0
    loop: start=0, step=1, limit=4
    $region2: #{language_model_forward.1} parent=1 // loop_pre_header
      _
    $region3: #{language_model_forward.1} parent=1 // loop_header
      %s40 = sphi 0, %s44
      %p41 = scmp.ge.s32.totalorder %s40, 4
      %s50 = sphi 0, %s52
      %s53 = sphi 0, %s50
      %s54 = sphi 0, %s53
      %s70 = sphi 0, %s54
      %s76 = sphi 0, %s78
      %s79 = sphi 0, %s76
      %s80 = sphi 0, %s79
      %s96 = sphi 0, %s80
      %s102 = sphi 0, %s104
      %s105 = sphi 0, %s102
      %s106 = sphi 0, %s105
      %s122 = sphi 0, %s106
      %s128 = sphi 0, %s130
      %s131 = sphi 0, %s128
      %s132 = sphi 0, %s131
      %s148 = sphi 0, %s132
      %s152 = sphi 0, %s152
      %s154 = sphi 0, %s152
      %s155 = sphi 0, %s154
      %s169 = sphi 0, %s155
      %s173 = sphi 0, %s173
      %s175 = sphi 0, %s173
      %s176 = sphi 0, %s175
      %s190 = sphi 0, %s176
      %s194 = sphi 0, %s194
      %s196 = sphi 0, %s194
      %s197 = sphi 0, %s196
      %s211 = sphi 0, %s197
      %s215 = sphi 0, %s215
      %s217 = sphi 0, %s215
      %s218 = sphi 0, %s217
      %s232 = sphi 0, %s218
      %s236 = sphi 0, %s236
      %s238 = sphi 0, %s236
      %s239 = sphi 0, %s238
      %s253 = sphi 0, %s239
      %s257 = sphi 0, %s257
      %s259 = sphi 0, %s257
      %s260 = sphi 0, %s259
      %s274 = sphi 0, %s260
      %s278 = sphi 0, %s278
      %s280 = sphi 0, %s278
      %s281 = sphi 0, %s280
      %s295 = sphi 0, %s281
      %s299 = sphi 0, %s299
      %s301 = sphi 0, %s299
      %s302 = sphi 0, %s301
      %s316 = sphi 0, %s302
      %s320 = sphi 0, %s320
      %s322 = sphi 0, %s320
      %s323 = sphi 0, %s322
      %s337 = sphi 0, %s323
      %s341 = sphi 0, %s341
      %s343 = sphi 0, %s341
      %s344 = sphi 0, %s343
      %s358 = sphi 0, %s344
      %s362 = sphi 0, %s362
      %s364 = sphi 0, %s362
      %s365 = sphi 0, %s364
      %s379 = sphi 0, %s365
      %s383 = sphi 0, %s383
      %s385 = sphi 0, %s383
      %s386 = sphi 0, %s385
      %s400 = sphi 0, %s386
      %s404 = sphi 0, %s404
      %s406 = sphi 0, %s404
      %s407 = sphi 0, %s406
      %s421 = sphi 0, %s407
      %s425 = sphi 0, %s425
      %s427 = sphi 0, %s425
      %s428 = sphi 0, %s427
      %s442 = sphi 0, %s428
      %s446 = sphi 0, %s446
      %s448 = sphi 0, %s446
      %s449 = sphi 0, %s448
      %s463 = sphi 0, %s449
      %s467 = sphi 0, %s467
      %s469 = sphi 0, %s467
      %s470 = sphi 0, %s469
      %s484 = sphi 0, %s470
      %s488 = sphi 0, %s488
      %s490 = sphi 0, %s488
      %s491 = sphi 0, %s490
      %s505 = sphi 0, %s491
      %s509 = sphi 0, %s509
      %s511 = sphi 0, %s509
      %s512 = sphi 0, %s511
      %s526 = sphi 0, %s512
      %s530 = sphi 0, %s530
      %s532 = sphi 0, %s530
      %s533 = sphi 0, %s532
      %s547 = sphi 0, %s533
      %s551 = sphi 0, %s551
      %s553 = sphi 0, %s551
      %s554 = sphi 0, %s553
      %s568 = sphi 0, %s554
      %s572 = sphi 0, %s572
      %s574 = sphi 0, %s572
      %s575 = sphi 0, %s574
      %s589 = sphi 0, %s575
      %s593 = sphi 0, %s593
      %s595 = sphi 0, %s593
      %s596 = sphi 0, %s595
      %s610 = sphi 0, %s596
      %s616 = sphi 0, %s618
      %s619 = sphi 0, %s616
      %s620 = sphi 0, %s619
      %s636 = sphi 0, %s620
      %s642 = sphi 0, %s644
      %s645 = sphi 0, %s642
      %s646 = sphi 0, %s645
      %s662 = sphi 0, %s646
    $region4: #{language_model_forward.1} parent=1 // loop_header_branch
      %43 = sbr.rel (%p41) target = $region8
    $region5: #{language_model_forward.1} parent=1 // loop_body
      %s45 = ssub.s32 %s40, 1
      %s46 = ssub.s32 %s40, 2
      %s47 = sadd.s32 %s40, 1
      %s48 = ssub.s32 %s40, %s47
      %p49 = scmp.eq.s32.totalorder %s48, 0
      %s51 = sadd.s32 %s50, 1
      %s52 = scalar_select %p49, %s50, %s51
      %p55 = pneg %p49
      %p56 = scmp.eq.s32.totalorder %s40, 1
      %p57 = por %p55, %p56
      %p58 = scmp.ne.s32.totalorder %s50, %s53
      %p59 = scmp.eq.s32.totalorder %s40, 0
      %p60 = por %p58, %p59
      %p61 = scmp.ne.s32.totalorder %s50, %s53
      %p62 = scmp.eq.s32.totalorder %s45, 1
      %p63 = por %p61, %p62
      %p64 = scmp.ne.s32.totalorder %s53, %s54
      %p65 = scmp.eq.s32.totalorder %s45, 0
      %p66 = por %p64, %p65
      %p67 = scmp.ne.s32.totalorder %s53, %s54
      %p68 = scmp.eq.s32.totalorder %s46, 1
      %p69 = por %p67, %p68
      %p71 = scmp.ne.s32.totalorder %s54, %s70
      %p72 = scmp.eq.s32.totalorder %s46, 0
      %p73 = por %p71, %p72
      %s74 = ssub.s32 %s40, %s47
      %p75 = scmp.eq.s32.totalorder %s74, 0
      %s77 = sadd.s32 %s76, 1
      %s78 = scalar_select %p75, %s76, %s77
      %p81 = pneg %p75
      %p82 = scmp.eq.s32.totalorder %s40, 1
      %p83 = por %p81, %p82
      %p84 = scmp.ne.s32.totalorder %s76, %s79
      %p85 = scmp.eq.s32.totalorder %s40, 0
      %p86 = por %p84, %p85
      %p87 = scmp.ne.s32.totalorder %s76, %s79
      %p88 = scmp.eq.s32.totalorder %s45, 1
      %p89 = por %p87, %p88
      %p90 = scmp.ne.s32.totalorder %s79, %s80
      %p91 = scmp.eq.s32.totalorder %s45, 0
      %p92 = por %p90, %p91
      %p93 = scmp.ne.s32.totalorder %s79, %s80
      %p94 = scmp.eq.s32.totalorder %s46, 1
      %p95 = por %p93, %p94
      %p97 = scmp.ne.s32.totalorder %s80, %s96
      %p98 = scmp.eq.s32.totalorder %s46, 0
      %p99 = por %p97, %p98
      %s100 = ssub.s32 %s40, %s47
      %p101 = scmp.eq.s32.totalorder %s100, 0
      %s103 = sadd.s32 %s102, 1
      %s104 = scalar_select %p101, %s102, %s103
      %p107 = pneg %p101
      %p108 = scmp.eq.s32.totalorder %s40, 1
      %p109 = por %p107, %p108
      %p110 = scmp.ne.s32.totalorder %s102, %s105
      %p111 = scmp.eq.s32.totalorder %s40, 0
      %p112 = por %p110, %p111
      %p113 = scmp.ne.s32.totalorder %s102, %s105
      %p114 = scmp.eq.s32.totalorder %s45, 1
      %p115 = por %p113, %p114
      %p116 = scmp.ne.s32.totalorder %s105, %s106
      %p117 = scmp.eq.s32.totalorder %s45, 0
      %p118 = por %p116, %p117
      %p119 = scmp.ne.s32.totalorder %s105, %s106
      %p120 = scmp.eq.s32.totalorder %s46, 1
      %p121 = por %p119, %p120
      %p123 = scmp.ne.s32.totalorder %s106, %s122
      %p124 = scmp.eq.s32.totalorder %s46, 0
      %p125 = por %p123, %p124
      %s126 = ssub.s32 %s40, %s47
      %p127 = scmp.eq.s32.totalorder %s126, 0
      %s129 = sadd.s32 %s128, 1
      %s130 = scalar_select %p127, %s128, %s129
      %p133 = pneg %p127
      %p134 = scmp.eq.s32.totalorder %s40, 1
      %p135 = por %p133, %p134
      %p136 = scmp.ne.s32.totalorder %s128, %s131
      %p137 = scmp.eq.s32.totalorder %s40, 0
      %p138 = por %p136, %p137
      %p139 = scmp.ne.s32.totalorder %s128, %s131
      %p140 = scmp.eq.s32.totalorder %s45, 1
      %p141 = por %p139, %p140
      %p142 = scmp.ne.s32.totalorder %s131, %s132
      %p143 = scmp.eq.s32.totalorder %s45, 0
      %p144 = por %p142, %p143
      %p145 = scmp.ne.s32.totalorder %s131, %s132
      %p146 = scmp.eq.s32.totalorder %s46, 1
      %p147 = por %p145, %p146
      %p149 = scmp.ne.s32.totalorder %s132, %s148
      %p150 = scmp.eq.s32.totalorder %s46, 0
      %p151 = por %p149, %p150
      %s153 = sadd.s32 %s152, 1
      %p156 = scmp.eq.s32.totalorder %s40, 1
      %p157 = scmp.ne.s32.totalorder %s152, %s154
      %p158 = scmp.eq.s32.totalorder %s40, 0
      %p159 = por %p157, %p158
      %p160 = scmp.ne.s32.totalorder %s152, %s154
      %p161 = scmp.eq.s32.totalorder %s45, 1
      %p162 = por %p160, %p161
      %p163 = scmp.ne.s32.totalorder %s154, %s155
      %p164 = scmp.eq.s32.totalorder %s45, 0
      %p165 = por %p163, %p164
      %p166 = scmp.ne.s32.totalorder %s154, %s155
      %p167 = scmp.eq.s32.totalorder %s46, 1
      %p168 = por %p166, %p167
      %p170 = scmp.ne.s32.totalorder %s155, %s169
      %p171 = scmp.eq.s32.totalorder %s46, 0
      %p172 = por %p170, %p171
      %s174 = sadd.s32 %s173, 1
      %p177 = scmp.eq.s32.totalorder %s40, 1
      %p178 = scmp.ne.s32.totalorder %s173, %s175
      %p179 = scmp.eq.s32.totalorder %s40, 0
      %p180 = por %p178, %p179
      %p181 = scmp.ne.s32.totalorder %s173, %s175
      %p182 = scmp.eq.s32.totalorder %s45, 1
      %p183 = por %p181, %p182
      %p184 = scmp.ne.s32.totalorder %s175, %s176
      %p185 = scmp.eq.s32.totalorder %s45, 0
      %p186 = por %p184, %p185
      %p187 = scmp.ne.s32.totalorder %s175, %s176
      %p188 = scmp.eq.s32.totalorder %s46, 1
      %p189 = por %p187, %p188
      %p191 = scmp.ne.s32.totalorder %s176, %s190
      %p192 = scmp.eq.s32.totalorder %s46, 0
      %p193 = por %p191, %p192
      %s195 = sadd.s32 %s194, 1
      %p198 = scmp.eq.s32.totalorder %s40, 1
      %p199 = scmp.ne.s32.totalorder %s194, %s196
      %p200 = scmp.eq.s32.totalorder %s40, 0
      %p201 = por %p199, %p200
      %p202 = scmp.ne.s32.totalorder %s194, %s196
      %p203 = scmp.eq.s32.totalorder %s45, 1
      %p204 = por %p202, %p203
      %p205 = scmp.ne.s32.totalorder %s196, %s197
      %p206 = scmp.eq.s32.totalorder %s45, 0
      %p207 = por %p205, %p206
      %p208 = scmp.ne.s32.totalorder %s196, %s197
      %p209 = scmp.eq.s32.totalorder %s46, 1
      %p210 = por %p208, %p209
      %p212 = scmp.ne.s32.totalorder %s197, %s211
      %p213 = scmp.eq.s32.totalorder %s46, 0
      %p214 = por %p212, %p213
      %s216 = sadd.s32 %s215, 1
      %p219 = scmp.eq.s32.totalorder %s40, 1
      %p220 = scmp.ne.s32.totalorder %s215, %s217
      %p221 = scmp.eq.s32.totalorder %s40, 0
      %p222 = por %p220, %p221
      %p223 = scmp.ne.s32.totalorder %s215, %s217
      %p224 = scmp.eq.s32.totalorder %s45, 1
      %p225 = por %p223, %p224
      %p226 = scmp.ne.s32.totalorder %s217, %s218
      %p227 = scmp.eq.s32.totalorder %s45, 0
      %p228 = por %p226, %p227
      %p229 = scmp.ne.s32.totalorder %s217, %s218
      %p230 = scmp.eq.s32.totalorder %s46, 1
      %p231 = por %p229, %p230
      %p233 = scmp.ne.s32.totalorder %s218, %s232
      %p234 = scmp.eq.s32.totalorder %s46, 0
      %p235 = por %p233, %p234
      %s237 = sadd.s32 %s236, 1
      %p240 = scmp.eq.s32.totalorder %s40, 1
      %p241 = scmp.ne.s32.totalorder %s236, %s238
      %p242 = scmp.eq.s32.totalorder %s40, 0
      %p243 = por %p241, %p242
      %p244 = scmp.ne.s32.totalorder %s236, %s238
      %p245 = scmp.eq.s32.totalorder %s45, 1
      %p246 = por %p244, %p245
      %p247 = scmp.ne.s32.totalorder %s238, %s239
      %p248 = scmp.eq.s32.totalorder %s45, 0
      %p249 = por %p247, %p248
      %p250 = scmp.ne.s32.totalorder %s238, %s239
      %p251 = scmp.eq.s32.totalorder %s46, 1
      %p252 = por %p250, %p251
      %p254 = scmp.ne.s32.totalorder %s239, %s253
      %p255 = scmp.eq.s32.totalorder %s46, 0
      %p256 = por %p254, %p255
      %s258 = sadd.s32 %s257, 1
      %p261 = scmp.eq.s32.totalorder %s40, 1
      %p262 = scmp.ne.s32.totalorder %s257, %s259
      %p263 = scmp.eq.s32.totalorder %s40, 0
      %p264 = por %p262, %p263
      %p265 = scmp.ne.s32.totalorder %s257, %s259
      %p266 = scmp.eq.s32.totalorder %s45, 1
      %p267 = por %p265, %p266
      %p268 = scmp.ne.s32.totalorder %s259, %s260
      %p269 = scmp.eq.s32.totalorder %s45, 0
      %p270 = por %p268, %p269
      %p271 = scmp.ne.s32.totalorder %s259, %s260
      %p272 = scmp.eq.s32.totalorder %s46, 1
      %p273 = por %p271, %p272
      %p275 = scmp.ne.s32.totalorder %s260, %s274
      %p276 = scmp.eq.s32.totalorder %s46, 0
      %p277 = por %p275, %p276
      %s279 = sadd.s32 %s278, 1
      %p282 = scmp.eq.s32.totalorder %s40, 1
      %p283 = scmp.ne.s32.totalorder %s278, %s280
      %p284 = scmp.eq.s32.totalorder %s40, 0
      %p285 = por %p283, %p284
      %p286 = scmp.ne.s32.totalorder %s278, %s280
      %p287 = scmp.eq.s32.totalorder %s45, 1
      %p288 = por %p286, %p287
      %p289 = scmp.ne.s32.totalorder %s280, %s281
      %p290 = scmp.eq.s32.totalorder %s45, 0
      %p291 = por %p289, %p290
      %p292 = scmp.ne.s32.totalorder %s280, %s281
      %p293 = scmp.eq.s32.totalorder %s46, 1
      %p294 = por %p292, %p293
      %p296 = scmp.ne.s32.totalorder %s281, %s295
      %p297 = scmp.eq.s32.totalorder %s46, 0
      %p298 = por %p296, %p297
      %s300 = sadd.s32 %s299, 1
      %p303 = scmp.eq.s32.totalorder %s40, 1
      %p304 = scmp.ne.s32.totalorder %s299, %s301
      %p305 = scmp.eq.s32.totalorder %s40, 0
      %p306 = por %p304, %p305
      %p307 = scmp.ne.s32.totalorder %s299, %s301
      %p308 = scmp.eq.s32.totalorder %s45, 1
      %p309 = por %p307, %p308
      %p310 = scmp.ne.s32.totalorder %s301, %s302
      %p311 = scmp.eq.s32.totalorder %s45, 0
      %p312 = por %p310, %p311
      %p313 = scmp.ne.s32.totalorder %s301, %s302
      %p314 = scmp.eq.s32.totalorder %s46, 1
      %p315 = por %p313, %p314
      %p317 = scmp.ne.s32.totalorder %s302, %s316
      %p318 = scmp.eq.s32.totalorder %s46, 0
      %p319 = por %p317, %p318
      %s321 = sadd.s32 %s320, 1
      %p324 = scmp.eq.s32.totalorder %s40, 1
      %p325 = scmp.ne.s32.totalorder %s320, %s322
      %p326 = scmp.eq.s32.totalorder %s40, 0
      %p327 = por %p325, %p326
      %p328 = scmp.ne.s32.totalorder %s320, %s322
      %p329 = scmp.eq.s32.totalorder %s45, 1
      %p330 = por %p328, %p329
      %p331 = scmp.ne.s32.totalorder %s322, %s323
      %p332 = scmp.eq.s32.totalorder %s45, 0
      %p333 = por %p331, %p332
      %p334 = scmp.ne.s32.totalorder %s322, %s323
      %p335 = scmp.eq.s32.totalorder %s46, 1
      %p336 = por %p334, %p335
      %p338 = scmp.ne.s32.totalorder %s323, %s337
      %p339 = scmp.eq.s32.totalorder %s46, 0
      %p340 = por %p338, %p339
      %s342 = sadd.s32 %s341, 1
      %p345 = scmp.eq.s32.totalorder %s40, 1
      %p346 = scmp.ne.s32.totalorder %s341, %s343
      %p347 = scmp.eq.s32.totalorder %s40, 0
      %p348 = por %p346, %p347
      %p349 = scmp.ne.s32.totalorder %s341, %s343
      %p350 = scmp.eq.s32.totalorder %s45, 1
      %p351 = por %p349, %p350
      %p352 = scmp.ne.s32.totalorder %s343, %s344
      %p353 = scmp.eq.s32.totalorder %s45, 0
      %p354 = por %p352, %p353
      %p355 = scmp.ne.s32.totalorder %s343, %s344
      %p356 = scmp.eq.s32.totalorder %s46, 1
      %p357 = por %p355, %p356
      %p359 = scmp.ne.s32.totalorder %s344, %s358
      %p360 = scmp.eq.s32.totalorder %s46, 0
      %p361 = por %p359, %p360
      %s363 = sadd.s32 %s362, 1
      %p366 = scmp.eq.s32.totalorder %s40, 1
      %p367 = scmp.ne.s32.totalorder %s362, %s364
      %p368 = scmp.eq.s32.totalorder %s40, 0
      %p369 = por %p367, %p368
      %p370 = scmp.ne.s32.totalorder %s362, %s364
      %p371 = scmp.eq.s32.totalorder %s45, 1
      %p372 = por %p370, %p371
      %p373 = scmp.ne.s32.totalorder %s364, %s365
      %p374 = scmp.eq.s32.totalorder %s45, 0
      %p375 = por %p373, %p374
      %p376 = scmp.ne.s32.totalorder %s364, %s365
      %p377 = scmp.eq.s32.totalorder %s46, 1
      %p378 = por %p376, %p377
      %p380 = scmp.ne.s32.totalorder %s365, %s379
      %p381 = scmp.eq.s32.totalorder %s46, 0
      %p382 = por %p380, %p381
      %s384 = sadd.s32 %s383, 1
      %p387 = scmp.eq.s32.totalorder %s40, 1
      %p388 = scmp.ne.s32.totalorder %s383, %s385
      %p389 = scmp.eq.s32.totalorder %s40, 0
      %p390 = por %p388, %p389
      %p391 = scmp.ne.s32.totalorder %s383, %s385
      %p392 = scmp.eq.s32.totalorder %s45, 1
      %p393 = por %p391, %p392
      %p394 = scmp.ne.s32.totalorder %s385, %s386
      %p395 = scmp.eq.s32.totalorder %s45, 0
      %p396 = por %p394, %p395
      %p397 = scmp.ne.s32.totalorder %s385, %s386
      %p398 = scmp.eq.s32.totalorder %s46, 1
      %p399 = por %p397, %p398
      %p401 = scmp.ne.s32.totalorder %s386, %s400
      %p402 = scmp.eq.s32.totalorder %s46, 0
      %p403 = por %p401, %p402
      %s405 = sadd.s32 %s404, 1
      %p408 = scmp.eq.s32.totalorder %s40, 1
      %p409 = scmp.ne.s32.totalorder %s404, %s406
      %p410 = scmp.eq.s32.totalorder %s40, 0
      %p411 = por %p409, %p410
      %p412 = scmp.ne.s32.totalorder %s404, %s406
      %p413 = scmp.eq.s32.totalorder %s45, 1
      %p414 = por %p412, %p413
      %p415 = scmp.ne.s32.totalorder %s406, %s407
      %p416 = scmp.eq.s32.totalorder %s45, 0
      %p417 = por %p415, %p416
      %p418 = scmp.ne.s32.totalorder %s406, %s407
      %p419 = scmp.eq.s32.totalorder %s46, 1
      %p420 = por %p418, %p419
      %p422 = scmp.ne.s32.totalorder %s407, %s421
      %p423 = scmp.eq.s32.totalorder %s46, 0
      %p424 = por %p422, %p423
      %s426 = sadd.s32 %s425, 1
      %p429 = scmp.eq.s32.totalorder %s40, 1
      %p430 = scmp.ne.s32.totalorder %s425, %s427
      %p431 = scmp.eq.s32.totalorder %s40, 0
      %p432 = por %p430, %p431
      %p433 = scmp.ne.s32.totalorder %s425, %s427
      %p434 = scmp.eq.s32.totalorder %s45, 1
      %p435 = por %p433, %p434
      %p436 = scmp.ne.s32.totalorder %s427, %s428
      %p437 = scmp.eq.s32.totalorder %s45, 0
      %p438 = por %p436, %p437
      %p439 = scmp.ne.s32.totalorder %s427, %s428
      %p440 = scmp.eq.s32.totalorder %s46, 1
      %p441 = por %p439, %p440
      %p443 = scmp.ne.s32.totalorder %s428, %s442
      %p444 = scmp.eq.s32.totalorder %s46, 0
      %p445 = por %p443, %p444
      %s447 = sadd.s32 %s446, 1
      %p450 = scmp.eq.s32.totalorder %s40, 1
      %p451 = scmp.ne.s32.totalorder %s446, %s448
      %p452 = scmp.eq.s32.totalorder %s40, 0
      %p453 = por %p451, %p452
      %p454 = scmp.ne.s32.totalorder %s446, %s448
      %p455 = scmp.eq.s32.totalorder %s45, 1
      %p456 = por %p454, %p455
      %p457 = scmp.ne.s32.totalorder %s448, %s449
      %p458 = scmp.eq.s32.totalorder %s45, 0
      %p459 = por %p457, %p458
      %p460 = scmp.ne.s32.totalorder %s448, %s449
      %p461 = scmp.eq.s32.totalorder %s46, 1
      %p462 = por %p460, %p461
      %p464 = scmp.ne.s32.totalorder %s449, %s463
      %p465 = scmp.eq.s32.totalorder %s46, 0
      %p466 = por %p464, %p465
      %s468 = sadd.s32 %s467, 1
      %p471 = scmp.eq.s32.totalorder %s40, 1
      %p472 = scmp.ne.s32.totalorder %s467, %s469
      %p473 = scmp.eq.s32.totalorder %s40, 0
      %p474 = por %p472, %p473
      %p475 = scmp.ne.s32.totalorder %s467, %s469
      %p476 = scmp.eq.s32.totalorder %s45, 1
      %p477 = por %p475, %p476
      %p478 = scmp.ne.s32.totalorder %s469, %s470
      %p479 = scmp.eq.s32.totalorder %s45, 0
      %p480 = por %p478, %p479
      %p481 = scmp.ne.s32.totalorder %s469, %s470
      %p482 = scmp.eq.s32.totalorder %s46, 1
      %p483 = por %p481, %p482
      %p485 = scmp.ne.s32.totalorder %s470, %s484
      %p486 = scmp.eq.s32.totalorder %s46, 0
      %p487 = por %p485, %p486
      %s489 = sadd.s32 %s488, 1
      %p492 = scmp.eq.s32.totalorder %s40, 1
      %p493 = scmp.ne.s32.totalorder %s488, %s490
      %p494 = scmp.eq.s32.totalorder %s40, 0
      %p495 = por %p493, %p494
      %p496 = scmp.ne.s32.totalorder %s488, %s490
      %p497 = scmp.eq.s32.totalorder %s45, 1
      %p498 = por %p496, %p497
      %p499 = scmp.ne.s32.totalorder %s490, %s491
      %p500 = scmp.eq.s32.totalorder %s45, 0
      %p501 = por %p499, %p500
      %p502 = scmp.ne.s32.totalorder %s490, %s491
      %p503 = scmp.eq.s32.totalorder %s46, 1
      %p504 = por %p502, %p503
      %p506 = scmp.ne.s32.totalorder %s491, %s505
      %p507 = scmp.eq.s32.totalorder %s46, 0
      %p508 = por %p506, %p507
      %s510 = sadd.s32 %s509, 1
      %p513 = scmp.eq.s32.totalorder %s40, 1
      %p514 = scmp.ne.s32.totalorder %s509, %s511
      %p515 = scmp.eq.s32.totalorder %s40, 0
      %p516 = por %p514, %p515
      %p517 = scmp.ne.s32.totalorder %s509, %s511
      %p518 = scmp.eq.s32.totalorder %s45, 1
      %p519 = por %p517, %p518
      %p520 = scmp.ne.s32.totalorder %s511, %s512
      %p521 = scmp.eq.s32.totalorder %s45, 0
      %p522 = por %p520, %p521
      %p523 = scmp.ne.s32.totalorder %s511, %s512
      %p524 = scmp.eq.s32.totalorder %s46, 1
      %p525 = por %p523, %p524
      %p527 = scmp.ne.s32.totalorder %s512, %s526
      %p528 = scmp.eq.s32.totalorder %s46, 0
      %p529 = por %p527, %p528
      %s531 = sadd.s32 %s530, 1
      %p534 = scmp.eq.s32.totalorder %s40, 1
      %p535 = scmp.ne.s32.totalorder %s530, %s532
      %p536 = scmp.eq.s32.totalorder %s40, 0
      %p537 = por %p535, %p536
      %p538 = scmp.ne.s32.totalorder %s530, %s532
      %p539 = scmp.eq.s32.totalorder %s45, 1
      %p540 = por %p538, %p539
      %p541 = scmp.ne.s32.totalorder %s532, %s533
      %p542 = scmp.eq.s32.totalorder %s45, 0
      %p543 = por %p541, %p542
      %p544 = scmp.ne.s32.totalorder %s532, %s533
      %p545 = scmp.eq.s32.totalorder %s46, 1
      %p546 = por %p544, %p545
      %p548 = scmp.ne.s32.totalorder %s533, %s547
      %p549 = scmp.eq.s32.totalorder %s46, 0
      %p550 = por %p548, %p549
      %s552 = sadd.s32 %s551, 1
      %p555 = scmp.eq.s32.totalorder %s40, 1
      %p556 = scmp.ne.s32.totalorder %s551, %s553
      %p557 = scmp.eq.s32.totalorder %s40, 0
      %p558 = por %p556, %p557
      %p559 = scmp.ne.s32.totalorder %s551, %s553
      %p560 = scmp.eq.s32.totalorder %s45, 1
      %p561 = por %p559, %p560
      %p562 = scmp.ne.s32.totalorder %s553, %s554
      %p563 = scmp.eq.s32.totalorder %s45, 0
      %p564 = por %p562, %p563
      %p565 = scmp.ne.s32.totalorder %s553, %s554
      %p566 = scmp.eq.s32.totalorder %s46, 1
      %p567 = por %p565, %p566
      %p569 = scmp.ne.s32.totalorder %s554, %s568
      %p570 = scmp.eq.s32.totalorder %s46, 0
      %p571 = por %p569, %p570
      %s573 = sadd.s32 %s572, 1
      %p576 = scmp.eq.s32.totalorder %s40, 1
      %p577 = scmp.ne.s32.totalorder %s572, %s574
      %p578 = scmp.eq.s32.totalorder %s40, 0
      %p579 = por %p577, %p578
      %p580 = scmp.ne.s32.totalorder %s572, %s574
      %p581 = scmp.eq.s32.totalorder %s45, 1
      %p582 = por %p580, %p581
      %p583 = scmp.ne.s32.totalorder %s574, %s575
      %p584 = scmp.eq.s32.totalorder %s45, 0
      %p585 = por %p583, %p584
      %p586 = scmp.ne.s32.totalorder %s574, %s575
      %p587 = scmp.eq.s32.totalorder %s46, 1
      %p588 = por %p586, %p587
      %p590 = scmp.ne.s32.totalorder %s575, %s589
      %p591 = scmp.eq.s32.totalorder %s46, 0
      %p592 = por %p590, %p591
      %s594 = sadd.s32 %s593, 1
      %p597 = scmp.eq.s32.totalorder %s40, 1
      %p598 = scmp.ne.s32.totalorder %s593, %s595
      %p599 = scmp.eq.s32.totalorder %s40, 0
      %p600 = por %p598, %p599
      %p601 = scmp.ne.s32.totalorder %s593, %s595
      %p602 = scmp.eq.s32.totalorder %s45, 1
      %p603 = por %p601, %p602
      %p604 = scmp.ne.s32.totalorder %s595, %s596
      %p605 = scmp.eq.s32.totalorder %s45, 0
      %p606 = por %p604, %p605
      %p607 = scmp.ne.s32.totalorder %s595, %s596
      %p608 = scmp.eq.s32.totalorder %s46, 1
      %p609 = por %p607, %p608
      %p611 = scmp.ne.s32.totalorder %s596, %s610
      %p612 = scmp.eq.s32.totalorder %s46, 0
      %p613 = por %p611, %p612
      %s614 = ssub.s32 %s40, %s47
      %p615 = scmp.eq.s32.totalorder %s614, 0
      %s617 = sadd.s32 %s616, 1
      %s618 = scalar_select %p615, %s616, %s617
      %p621 = pneg %p615
      %p622 = scmp.eq.s32.totalorder %s40, 1
      %p623 = por %p621, %p622
      %p624 = scmp.ne.s32.totalorder %s616, %s619
      %p625 = scmp.eq.s32.totalorder %s40, 0
      %p626 = por %p624, %p625
      %p627 = scmp.ne.s32.totalorder %s616, %s619
      %p628 = scmp.eq.s32.totalorder %s45, 1
      %p629 = por %p627, %p628
      %p630 = scmp.ne.s32.totalorder %s619, %s620
      %p631 = scmp.eq.s32.totalorder %s45, 0
      %p632 = por %p630, %p631
      %p633 = scmp.ne.s32.totalorder %s619, %s620
      %p634 = scmp.eq.s32.totalorder %s46, 1
      %p635 = por %p633, %p634
      %p637 = scmp.ne.s32.totalorder %s620, %s636
      %p638 = scmp.eq.s32.totalorder %s46, 0
      %p639 = por %p637, %p638
      %s640 = ssub.s32 %s40, %s47
      %p641 = scmp.eq.s32.totalorder %s640, 0
      %s643 = sadd.s32 %s642, 1
      %s644 = scalar_select %p641, %s642, %s643
      %p647 = pneg %p641
      %p648 = scmp.eq.s32.totalorder %s40, 1
      %p649 = por %p647, %p648
      %p650 = scmp.ne.s32.totalorder %s642, %s645
      %p651 = scmp.eq.s32.totalorder %s40, 0
      %p652 = por %p650, %p651
      %p653 = scmp.ne.s32.totalorder %s642, %s645
      %p654 = scmp.eq.s32.totalorder %s45, 1
      %p655 = por %p653, %p654
      %p656 = scmp.ne.s32.totalorder %s645, %s646
      %p657 = scmp.eq.s32.totalorder %s45, 0
      %p658 = por %p656, %p657
      %p659 = scmp.ne.s32.totalorder %s645, %s646
      %p660 = scmp.eq.s32.totalorder %s46, 1
      %p661 = por %p659, %p660
      %p663 = scmp.ne.s32.totalorder %s646, %s662
      %p664 = scmp.eq.s32.totalorder %s46, 0
      %p665 = por %p663, %p664
      %p666 = scmp.le.s32.totalorder 1, %s40
      %p667 = scmp.lt.s32.totalorder %s40, 3
      %p668 = pnand %p666, %p667
      %p669 = pneg %p668
      // Predicated region
      $region9: #{language_model_forward.1} parent=5 // pred_check
        _
      $region10: #{language_model_forward.1} parent=5 // pred_check_branch
        %671 = sbr.rel (%p668) target = $region12
      $region11: #{language_model_forward.1} parent=5 // pred_region
        %s672 = ssub.s32 %s40, 1
        // Predicated region
        $region13: #{language_model_forward.1} parent=11 // pred_check
          %p673 = pneg %p165
        $region14: #{language_model_forward.1} parent=11 // pred_check_branch
          %675 = sbr.rel (%p673) target = $region16
        $region15: #{language_model_forward.1} parent=11 // pred_region
          _
        $region16: #{language_model_forward.1} parent=11 // pred_fallthru
          _
        // Predicated region
        $region17: #{language_model_forward.1} parent=11 // pred_check
          %p676 = pneg %p186
        $region18: #{language_model_forward.1} parent=11 // pred_check_branch
          %678 = sbr.rel (%p676) target = $region20
        $region19: #{language_model_forward.1} parent=11 // pred_region
          _
        $region20: #{language_model_forward.1} parent=11 // pred_fallthru
          _
        // Predicated region
        $region21: #{language_model_forward.1} parent=11 // pred_check
          %p679 = pneg %p207
        $region22: #{language_model_forward.1} parent=11 // pred_check_branch
          %681 = sbr.rel (%p679) target = $region24
        $region23: #{language_model_forward.1} parent=11 // pred_region
          _
        $region24: #{language_model_forward.1} parent=11 // pred_fallthru
          _
        // Predicated region
        $region25: #{language_model_forward.1} parent=11 // pred_check
          %p682 = pneg %p228
        $region26: #{language_model_forward.1} parent=11 // pred_check_branch
          %684 = sbr.rel (%p682) target = $region28
        $region27: #{language_model_forward.1} parent=11 // pred_region
          _
        $region28: #{language_model_forward.1} parent=11 // pred_fallthru
          _
        // Predicated region
        $region29: #{language_model_forward.1} parent=11 // pred_check
          %p685 = pneg %p249
        $region30: #{language_model_forward.1} parent=11 // pred_check_branch
          %687 = sbr.rel (%p685) target = $region32
        $region31: #{language_model_forward.1} parent=11 // pred_region
          _
        $region32: #{language_model_forward.1} parent=11 // pred_fallthru
          _
        // Predicated region
        $region33: #{language_model_forward.1} parent=11 // pred_check
          %p688 = pneg %p270
        $region34: #{language_model_forward.1} parent=11 // pred_check_branch
          %690 = sbr.rel (%p688) target = $region36
        $region35: #{language_model_forward.1} parent=11 // pred_region
          _
        $region36: #{language_model_forward.1} parent=11 // pred_fallthru
          _
        // Predicated region
        $region37: #{language_model_forward.1} parent=11 // pred_check
          %p691 = pneg %p291
        $region38: #{language_model_forward.1} parent=11 // pred_check_branch
          %693 = sbr.rel (%p691) target = $region40
        $region39: #{language_model_forward.1} parent=11 // pred_region
          _
        $region40: #{language_model_forward.1} parent=11 // pred_fallthru
          _
        // Predicated region
        $region41: #{language_model_forward.1} parent=11 // pred_check
          %p694 = pneg %p312
        $region42: #{language_model_forward.1} parent=11 // pred_check_branch
          %696 = sbr.rel (%p694) target = $region44
        $region43: #{language_model_forward.1} parent=11 // pred_region
          _
        $region44: #{language_model_forward.1} parent=11 // pred_fallthru
          _
        // Predicated region
        $region45: #{language_model_forward.1} parent=11 // pred_check
          %p697 = pneg %p333
        $region46: #{language_model_forward.1} parent=11 // pred_check_branch
          %699 = sbr.rel (%p697) target = $region48
        $region47: #{language_model_forward.1} parent=11 // pred_region
          _
        $region48: #{language_model_forward.1} parent=11 // pred_fallthru
          _
        // Predicated region
        $region49: #{language_model_forward.1} parent=11 // pred_check
          %p700 = pneg %p354
        $region50: #{language_model_forward.1} parent=11 // pred_check_branch
          %702 = sbr.rel (%p700) target = $region52
        $region51: #{language_model_forward.1} parent=11 // pred_region
          _
        $region52: #{language_model_forward.1} parent=11 // pred_fallthru
          _
        // Predicated region
        $region53: #{language_model_forward.1} parent=11 // pred_check
          %p703 = pneg %p375
        $region54: #{language_model_forward.1} parent=11 // pred_check_branch
          %705 = sbr.rel (%p703) target = $region56
        $region55: #{language_model_forward.1} parent=11 // pred_region
          _
        $region56: #{language_model_forward.1} parent=11 // pred_fallthru
          _
        // Predicated region
        $region57: #{language_model_forward.1} parent=11 // pred_check
          %p706 = pneg %p396
        $region58: #{language_model_forward.1} parent=11 // pred_check_branch
          %708 = sbr.rel (%p706) target = $region60
        $region59: #{language_model_forward.1} parent=11 // pred_region
          _
        $region60: #{language_model_forward.1} parent=11 // pred_fallthru
          _
        // Predicated region
        $region61: #{language_model_forward.1} parent=11 // pred_check
          %p709 = pneg %p417
        $region62: #{language_model_forward.1} parent=11 // pred_check_branch
          %711 = sbr.rel (%p709) target = $region64
        $region63: #{language_model_forward.1} parent=11 // pred_region
          _
        $region64: #{language_model_forward.1} parent=11 // pred_fallthru
          _
        // Predicated region
        $region65: #{language_model_forward.1} parent=11 // pred_check
          %p712 = pneg %p438
        $region66: #{language_model_forward.1} parent=11 // pred_check_branch
          %714 = sbr.rel (%p712) target = $region68
        $region67: #{language_model_forward.1} parent=11 // pred_region
          _
        $region68: #{language_model_forward.1} parent=11 // pred_fallthru
          _
        // Predicated region
        $region69: #{language_model_forward.1} parent=11 // pred_check
          %p715 = pneg %p459
        $region70: #{language_model_forward.1} parent=11 // pred_check_branch
          %717 = sbr.rel (%p715) target = $region72
        $region71: #{language_model_forward.1} parent=11 // pred_region
          _
        $region72: #{language_model_forward.1} parent=11 // pred_fallthru
          _
        // Predicated region
        $region73: #{language_model_forward.1} parent=11 // pred_check
          %p718 = pneg %p480
        $region74: #{language_model_forward.1} parent=11 // pred_check_branch
          %720 = sbr.rel (%p718) target = $region76
        $region75: #{language_model_forward.1} parent=11 // pred_region
          _
        $region76: #{language_model_forward.1} parent=11 // pred_fallthru
          _
        // Predicated region
        $region77: #{language_model_forward.1} parent=11 // pred_check
          %p721 = pneg %p501
        $region78: #{language_model_forward.1} parent=11 // pred_check_branch
          %723 = sbr.rel (%p721) target = $region80
        $region79: #{language_model_forward.1} parent=11 // pred_region
          _
        $region80: #{language_model_forward.1} parent=11 // pred_fallthru
          _
        // Predicated region
        $region81: #{language_model_forward.1} parent=11 // pred_check
          %p724 = pneg %p522
        $region82: #{language_model_forward.1} parent=11 // pred_check_branch
          %726 = sbr.rel (%p724) target = $region84
        $region83: #{language_model_forward.1} parent=11 // pred_region
          _
        $region84: #{language_model_forward.1} parent=11 // pred_fallthru
          _
        // Predicated region
        $region85: #{language_model_forward.1} parent=11 // pred_check
          %p727 = pneg %p543
        $region86: #{language_model_forward.1} parent=11 // pred_check_branch
          %729 = sbr.rel (%p727) target = $region88
        $region87: #{language_model_forward.1} parent=11 // pred_region
          _
        $region88: #{language_model_forward.1} parent=11 // pred_fallthru
          _
        // Predicated region
        $region89: #{language_model_forward.1} parent=11 // pred_check
          %p730 = pneg %p564
        $region90: #{language_model_forward.1} parent=11 // pred_check_branch
          %732 = sbr.rel (%p730) target = $region92
        $region91: #{language_model_forward.1} parent=11 // pred_region
          _
        $region92: #{language_model_forward.1} parent=11 // pred_fallthru
          _
        // Predicated region
        $region93: #{language_model_forward.1} parent=11 // pred_check
          %p733 = pneg %p585
        $region94: #{language_model_forward.1} parent=11 // pred_check_branch
          %735 = sbr.rel (%p733) target = $region96
        $region95: #{language_model_forward.1} parent=11 // pred_region
          _
        $region96: #{language_model_forward.1} parent=11 // pred_fallthru
          _
        // Predicated region
        $region97: #{language_model_forward.1} parent=11 // pred_check
          %p736 = pneg %p606
        $region98: #{language_model_forward.1} parent=11 // pred_check_branch
          %738 = sbr.rel (%p736) target = $region100
        $region99: #{language_model_forward.1} parent=11 // pred_region
          _
        $region100: #{language_model_forward.1} parent=11 // pred_fallthru
          _
      $region12: #{language_model_forward.1} parent=5 // pred_fallthru
        _
      %p739 = scmp.lt.s32.totalorder %s40, 2
      // Predicated region
      $region101: #{language_model_forward.1} parent=5 // pred_check
        %p740 = pneg %p739
      $region102: #{language_model_forward.1} parent=5 // pred_check_branch
        %742 = sbr.rel (%p740) target = $region104
      $region103: #{language_model_forward.1} parent=5 // pred_region
        // Predicated region
        $region105: #{language_model_forward.1} parent=103 // pred_check
          %p743 = pneg %p60
        $region106: #{language_model_forward.1} parent=103 // pred_check_branch
          %745 = sbr.rel (%p743) target = $region108
        $region107: #{language_model_forward.1} parent=103 // pred_region
          %p746 = scmp.lt.s32.totalorder %s40, 1
          %s747 = scalar_select %p746, %s40, 1
          %s748 = smul.addr %s747, 8
          %s749 = scalar_lea.vmem %s0, %s748
        $region108: #{language_model_forward.1} parent=103 // pred_fallthru
          _
        // Predicated region
        $region109: #{language_model_forward.1} parent=103 // pred_check
          %p750 = pneg %p86
        $region110: #{language_model_forward.1} parent=103 // pred_check_branch
          %752 = sbr.rel (%p750) target = $region112
        $region111: #{language_model_forward.1} parent=103 // pred_region
          %p753 = scmp.lt.s32.totalorder %s40, 1
          %s754 = scalar_select %p753, %s40, 1
          %s755 = smul.addr %s754, 8
          %s756 = scalar_lea.vmem %s1, %s755
        $region112: #{language_model_forward.1} parent=103 // pred_fallthru
          _
        // Predicated region
        $region113: #{language_model_forward.1} parent=103 // pred_check
          %p757 = pneg %p112
        $region114: #{language_model_forward.1} parent=103 // pred_check_branch
          %759 = sbr.rel (%p757) target = $region116
        $region115: #{language_model_forward.1} parent=103 // pred_region
          %p760 = scmp.lt.s32.totalorder %s40, 1
          %s761 = scalar_select %p760, %s40, 1
          %s762 = smul.addr %s761, 8
          %s763 = scalar_lea.vmem %s2, %s762
        $region116: #{language_model_forward.1} parent=103 // pred_fallthru
          _
        // Predicated region
        $region117: #{language_model_forward.1} parent=103 // pred_check
          %p764 = pneg %p138
        $region118: #{language_model_forward.1} parent=103 // pred_check_branch
          %766 = sbr.rel (%p764) target = $region120
        $region119: #{language_model_forward.1} parent=103 // pred_region
          %p767 = scmp.lt.s32.totalorder %s40, 1
          %s768 = scalar_select %p767, %s40, 1
          %s769 = scalar_lea.vmem %s3, %s768
        $region120: #{language_model_forward.1} parent=103 // pred_fallthru
          _
      $region104: #{language_model_forward.1} parent=5 // pred_fallthru
        _
      %p770 = scmp.le.s32.totalorder 1, %s40
      %p771 = scmp.lt.s32.totalorder %s40, 3
      %p772 = pnand %p770, %p771
      %p773 = pneg %p772
      // Predicated region
      $region121: #{language_model_forward.1} parent=5 // pred_check
        _
      $region122: #{language_model_forward.1} parent=5 // pred_check_branch
        %775 = sbr.rel (%p772) target = $region124
      $region123: #{language_model_forward.1} parent=5 // pred_region
        %s776 = ssub.s32 %s40, 1
        %p777 = scmp.lt.s32.totalorder %s45, 1
        %s778 = scalar_select %p777, %s45, 1
        %s779 = smul.addr %s778, 8
        %s780 = scalar_lea.vmem %s0, %s779
        %p781 = pneg %p66
        %p782 = pneg %p63
        %p783 = scmp.lt.s32.totalorder %s45, 1
        %s784 = scalar_select %p783, %s45, 1
        %s785 = smul.addr %s784, 8
        %s786 = scalar_lea.vmem %s1, %s785
        %p787 = pneg %p92
        %p788 = pneg %p89
        %p789 = scmp.lt.s32.totalorder %s45, 1
        %s790 = scalar_select %p789, %s45, 1
        %s791 = smul.addr %s790, 8
        %s792 = scalar_lea.vmem %s2, %s791
        %p793 = pneg %p118
        %p794 = pneg %p115
        %p795 = scmp.lt.s32.totalorder %s45, 1
        %s796 = scalar_select %p795, %s45, 1
        %s797 = scalar_lea.vmem %s3, %s796
        %p798 = pneg %p144
        %p799 = pneg %p141
        %p800 = pneg %p165
        %p801 = pneg %p162
        %p802 = pneg %p186
        %p803 = pneg %p183
        %p804 = pneg %p207
        %p805 = pneg %p204
        %p806 = pneg %p228
        %p807 = pneg %p225
        %p808 = pneg %p249
        %p809 = pneg %p246
        %p810 = pneg %p270
        %p811 = pneg %p267
        %p812 = pneg %p291
        %p813 = pneg %p288
        %p814 = pneg %p312
        %p815 = pneg %p309
        %p816 = pneg %p333
        %p817 = pneg %p330
        %p818 = pneg %p354
        %p819 = pneg %p351
        %p820 = pneg %p375
        %p821 = pneg %p372
        %p822 = pneg %p396
        %p823 = pneg %p393
        %p824 = pneg %p417
        %p825 = pneg %p414
        %p826 = pneg %p438
        %p827 = pneg %p435
        %p828 = pneg %p459
        %p829 = pneg %p456
        %p830 = pneg %p480
        %p831 = pneg %p477
        %p832 = pneg %p501
        %p833 = pneg %p498
        %p834 = pneg %p522
        %p835 = pneg %p519
        %p836 = pneg %p543
        %p837 = pneg %p540
        %p838 = pneg %p564
        %p839 = pneg %p561
        %p840 = pneg %p585
        %p841 = pneg %p582
        %p842 = pneg %p606
        %p843 = pneg %p603
        %p844 = pneg %p632
        %p845 = pneg %p629
        %s846 = sand.u32 %s619, 1
        %s847 = scalar_lea.sflag [#allocation3], %s846
        %s848 = sand.u32 %s619, 1
        %s849 = smul.addr %s848, 8
        %s850 = scalar_lea.vmem [#allocation2], %s849
        %p851 = pneg %p658
        %p852 = pneg %p655
        %s853 = sand.u32 %s645, 1
        %s854 = scalar_lea.sflag [#allocation5], %s853
        %s855 = sand.u32 %s645, 1
        %s856 = smul.addr %s855, 8
        %s857 = scalar_lea.vmem [#allocation4], %s856
        %p858 = scmp.lt.s32.totalorder %s45, 1
        %s859 = scalar_select %p858, %s45, 1
        %s860 = smul.addr %s859, 8
        %s861 = scalar_lea.vmem %s0, %s860
        %p862 = scmp.lt.s32.totalorder %s45, 1
        %s863 = scalar_select %p862, %s45, 1
        %s864 = smul.addr %s863, 8
        %s865 = scalar_lea.vmem %s1, %s864
        %p866 = scmp.lt.s32.totalorder %s45, 1
        %s867 = scalar_select %p866, %s45, 1
        %s868 = smul.addr %s867, 8
        %s869 = scalar_lea.vmem %s2, %s868
        %p870 = scmp.lt.s32.totalorder %s45, 1
        %s871 = scalar_select %p870, %s45, 1
        %s872 = scalar_lea.vmem %s3, %s871
        %v873 = vld [vmem:[%s861] sm:$0xff]
        %v874 = vld [vmem:[%s4] sm:$0xff]
        %v875 = vld [vmem:[%s4 + $0x8] sm:$0xff]
        %v876 = vld [vmem:[%s4 + $0x10] sm:$0xff]
        %v877 = vld [vmem:[%s4 + $0x18] sm:$0xff]
        %v878 = vld [vmem:[%s4 + $0x20] sm:$0xff]
        %v879 = vld [vmem:[%s4 + $0x28] sm:$0xff]
        %v880 = vld [vmem:[%s5] sm:$0x1]
        %v882 = vlaneseq
        %v883 = vshrl.u32 %v882, 7
        %v884 = vsub.s32 0, %v883
        %v885 = vrot.slane %v880, %v884
        %vm887 = vcmask 392192
        %v889 = vsel %vm887, %v873, 0
        %891 = vmatprep.subr.mxu0 0.0
        %892 = vmatpush1.msra.mxu0 0.0
        %893 = vmatprep.subr.mxu0 0.0
        %894 = vmatpush1.msra.mxu0 0.0
        %895 = vmatprep.subr.mxu0 0.0
        %896 = vmatpush1.msra.mxu0 0.0
        %897 = vmatprep.subr.mxu0 0.0
        %898 = vmatpush1.msra.mxu0 0.0
        %899 = vmatprep.subr.mxu0 0.0
        %900 = vmatpush1.msra.mxu0 0.0
        %901 = vmatprep.subr.mxu0 0.0
        %902 = vmatpush1.msra.mxu0 0.0
        %903 = vmatprep.subr.mxu0 0.0
        %904 = vmatpush1.msra.mxu0 0.0
        %905 = vmatprep.subr.mxu0 0.0
        %906 = vmatpush1.msra.mxu0 0.0
        %907 = vmatprep.subr.mxu0 0.0
        %908 = vmatpush1.msra.mxu0 0.0
        %909 = vmatprep.subr.mxu0 0.0
        %910 = vmatpush1.msra.mxu0 0.0
        %911 = vmatprep.subr.mxu0 0.0
        %912 = vmatpush1.msra.mxu0 %v879
        %913 = vmatprep.subr.mxu0 0.0
        %914 = vmatpush1.msra.mxu0 %v878
        %915 = vmatprep.subr.mxu0 0.0
        %916 = vmatpush1.msra.mxu0 %v877
        %917 = vmatprep.subr.mxu0 0.0
        %918 = vmatpush1.msra.mxu0 %v876
        %919 = vmatprep.subr.mxu0 0.0
        %920 = vmatpush1.msra.mxu0 %v875
        %921 = vmatprep.subr.mxu0 0.0
        %922 = vmatpush1.msra.mxu0 %v874
        %923 = vmatprep.subr.mxu0 0.0
        %924 = vmatpush2.msra.mxu0 0.0
        %925 = vmatprep.subr.mxu0 0.0
        %926 = vmatpush2.msra.mxu0 0.0
        %927 = vmatprep.subr.mxu0 0.0
        %928 = vmatpush2.msra.mxu0 0.0
        %929 = vmatprep.subr.mxu0 0.0
        %930 = vmatpush2.msra.mxu0 0.0
        %931 = vmatprep.subr.mxu0 0.0
        %932 = vmatpush2.msra.mxu0 0.0
        %933 = vmatprep.subr.mxu0 0.0
        %934 = vmatpush2.msra.mxu0 0.0
        %935 = vmatprep.subr.mxu0 0.0
        %936 = vmatpush2.msra.mxu0 0.0
        %937 = vmatprep.subr.mxu0 0.0
        %938 = vmatpush2.msra.mxu0 0.0
        %939 = vmatprep.subr.mxu0 0.0
        %940 = vmatpush2.msra.mxu0 0.0
        %941 = vmatprep.subr.mxu0 0.0
        %942 = vmatpush2.msra.mxu0 0.0
        %943 = vmatprep.subr.mxu0 0.0
        %944 = vmatpush2.msra.mxu0 0.0
        %945 = vmatprep.subr.mxu0 0.0
        %946 = vmatpush2.msra.mxu0 0.0
        %947 = vmatprep.subr.mxu0 0.0
        %948 = vmatpush2.msra.mxu0 0.0
        %949 = vmatprep.subr.mxu0 0.0
        %950 = vmatpush2.msra.mxu0 0.0
        %951 = vmatprep.subr.mxu0 0.0
        %952 = vmatpush2.msra.mxu0 0.0
        %953 = vmatprep.subr.mxu0 0.0
        %954 = vmatpush2.msra.mxu0 0.0
        %955 = vmatprep.mubr.f32.mxu0 0.0
        %956 = vmatmul.mubr.f32.gmra.mxu0 %v889
        %v957 = vpop.f32.mrf.mxu0
        %v958 = vadd.f32 %v885, %v957
        %v959 = vpop.f32.mrf.mxu0
        %960 = vdwg.mxu0
        %v961 = vld [vmem:[%s865] sm:$0xff]
        %v962 = vadd.f32 %v958, %v961
        %v963 = vld [vmem:[%s869] sm:$0xff]
        %v964 = vld [vmem:[%s872] sm:$0x1]
        %v965 = vlaneseq
        %v966 = vshrl.u32 %v965, 7
        %v967 = vlaneseq
        %v968 = vand.u32 %v967, 127
        %vm969 = vcmp.gt.s32.totalorder %v968, %v966
        %vm970 = vcmp.le.f32.partialorder %v964, 0.0
        %v971 = vsel %vm970, 1, 0
        %v972 = vlaneseq
        %v973 = vshrl.u32 %v972, 7
        %v974 = vsub.s32 0, %v973
        %v975 = vrot.slane %v971, %v974
        %vm976 = vcmp.eq.s32.totalorder %v975, 1
        %vm977 = vmor %vm969, %vm976
        %v978 = vld [vmem:[%s6] sm:$0xff]
        %v979 = vld [vmem:[%s6 + $0x8] sm:$0xff]
        %v980 = vld [vmem:[%s6 + $0x10] sm:$0xff]
        %v981 = vld [vmem:[%s6 + $0x18] sm:$0xff]
        %v982 = vld [vmem:[%s7] sm:$0x1]
        %v984 = vlaneseq
        %v985 = vshrl.u32 %v984, 7
        %v986 = vsub.s32 0, %v985
        %v987 = vrot.slane %v982, %v986
        %vm989 = vcmask 261120
        %v991 = vsel %vm989, %v962, 0
        %993 = vmatprep.subr.mxu0 0.0
        %994 = vmatpush1.msra.mxu0 0.0
        %995 = vmatprep.subr.mxu0 0.0
        %996 = vmatpush1.msra.mxu0 0.0
        %997 = vmatprep.subr.mxu0 0.0
        %998 = vmatpush1.msra.mxu0 0.0
        %999 = vmatprep.subr.mxu0 0.0
        %1000 = vmatpush1.msra.mxu0 0.0
        %1001 = vmatprep.subr.mxu0 0.0
        %1002 = vmatpush1.msra.mxu0 0.0
        %1003 = vmatprep.subr.mxu0 0.0
        %1004 = vmatpush1.msra.mxu0 0.0
        %1005 = vmatprep.subr.mxu0 0.0
        %1006 = vmatpush1.msra.mxu0 0.0
        %1007 = vmatprep.subr.mxu0 0.0
        %1008 = vmatpush1.msra.mxu0 0.0
        %1009 = vmatprep.subr.mxu0 0.0
        %1010 = vmatpush1.msra.mxu0 0.0
        %1011 = vmatprep.subr.mxu0 0.0
        %1012 = vmatpush1.msra.mxu0 0.0
        %1013 = vmatprep.subr.mxu0 0.0
        %1014 = vmatpush1.msra.mxu0 0.0
        %1015 = vmatprep.subr.mxu0 0.0
        %1016 = vmatpush1.msra.mxu0 0.0
        %1017 = vmatprep.subr.mxu0 0.0
        %1018 = vmatpush1.msra.mxu0 %v981
        %1019 = vmatprep.subr.mxu0 0.0
        %1020 = vmatpush1.msra.mxu0 %v980
        %1021 = vmatprep.subr.mxu0 0.0
        %1022 = vmatpush1.msra.mxu0 %v979
        %1023 = vmatprep.subr.mxu0 0.0
        %1024 = vmatpush1.msra.mxu0 %v978
        %1025 = vmatprep.subr.mxu0 0.0
        %1026 = vmatpush2.msra.mxu0 0.0
        %1027 = vmatprep.subr.mxu0 0.0
        %1028 = vmatpush2.msra.mxu0 0.0
        %1029 = vmatprep.subr.mxu0 0.0
        %1030 = vmatpush2.msra.mxu0 0.0
        %1031 = vmatprep.subr.mxu0 0.0
        %1032 = vmatpush2.msra.mxu0 0.0
        %1033 = vmatprep.subr.mxu0 0.0
        %1034 = vmatpush2.msra.mxu0 0.0
        %1035 = vmatprep.subr.mxu0 0.0
        %1036 = vmatpush2.msra.mxu0 0.0
        %1037 = vmatprep.subr.mxu0 0.0
        %1038 = vmatpush2.msra.mxu0 0.0
        %1039 = vmatprep.subr.mxu0 0.0
        %1040 = vmatpush2.msra.mxu0 0.0
        %1041 = vmatprep.subr.mxu0 0.0
        %1042 = vmatpush2.msra.mxu0 0.0
        %1043 = vmatprep.subr.mxu0 0.0
        %1044 = vmatpush2.msra.mxu0 0.0
        %1045 = vmatprep.subr.mxu0 0.0
        %1046 = vmatpush2.msra.mxu0 0.0
        %1047 = vmatprep.subr.mxu0 0.0
        %1048 = vmatpush2.msra.mxu0 0.0
        %1049 = vmatprep.subr.mxu0 0.0
        %1050 = vmatpush2.msra.mxu0 0.0
        %1051 = vmatprep.subr.mxu0 0.0
        %1052 = vmatpush2.msra.mxu0 0.0
        %1053 = vmatprep.subr.mxu0 0.0
        %1054 = vmatpush2.msra.mxu0 0.0
        %1055 = vmatprep.subr.mxu0 0.0
        %1056 = vmatpush2.msra.mxu0 0.0
        %1057 = vmatprep.mubr.f32.mxu0 0.0
        %1058 = vmatmul.mubr.f32.gmra.mxu0 %v991
        %v1059 = vpop.f32.mrf.mxu0
        %v1060 = vadd.f32 %v987, %v1059
        %v1061 = vpop.f32.mrf.mxu0
        %1062 = vdwg.mxu0
        %v1063 = vld [vmem:[%s8] sm:$0xff]
        %v1064 = vld [vmem:[%s8 + $0x8] sm:$0xff]
        %v1065 = vld [vmem:[%s8 + $0x10] sm:$0xff]
        %v1066 = vld [vmem:[%s8 + $0x18] sm:$0xff]
        %v1067 = vld [vmem:[%s9] sm:$0x1]
        %v1069 = vlaneseq
        %v1070 = vshrl.u32 %v1069, 7
        %v1071 = vsub.s32 0, %v1070
        %v1072 = vrot.slane %v1067, %v1071
        %1074 = vmatprep.subr.mxu0 0.0
        %1075 = vmatpush1.msra.mxu0 0.0
        %1076 = vmatprep.subr.mxu0 0.0
        %1077 = vmatpush1.msra.mxu0 0.0
        %1078 = vmatprep.subr.mxu0 0.0
        %1079 = vmatpush1.msra.mxu0 0.0
        %1080 = vmatprep.subr.mxu0 0.0
        %1081 = vmatpush1.msra.mxu0 0.0
        %1082 = vmatprep.subr.mxu0 0.0
        %1083 = vmatpush1.msra.mxu0 0.0
        %1084 = vmatprep.subr.mxu0 0.0
        %1085 = vmatpush1.msra.mxu0 0.0
        %1086 = vmatprep.subr.mxu0 0.0
        %1087 = vmatpush1.msra.mxu0 0.0
        %1088 = vmatprep.subr.mxu0 0.0
        %1089 = vmatpush1.msra.mxu0 0.0
        %1090 = vmatprep.subr.mxu0 0.0
        %1091 = vmatpush1.msra.mxu0 0.0
        %1092 = vmatprep.subr.mxu0 0.0
        %1093 = vmatpush1.msra.mxu0 0.0
        %1094 = vmatprep.subr.mxu0 0.0
        %1095 = vmatpush1.msra.mxu0 0.0
        %1096 = vmatprep.subr.mxu0 0.0
        %1097 = vmatpush1.msra.mxu0 0.0
        %1098 = vmatprep.subr.mxu0 0.0
        %1099 = vmatpush1.msra.mxu0 %v1066
        %1100 = vmatprep.subr.mxu0 0.0
        %1101 = vmatpush1.msra.mxu0 %v1065
        %1102 = vmatprep.subr.mxu0 0.0
        %1103 = vmatpush1.msra.mxu0 %v1064
        %1104 = vmatprep.subr.mxu0 0.0
        %1105 = vmatpush1.msra.mxu0 %v1063
        %1106 = vmatprep.subr.mxu0 0.0
        %1107 = vmatpush2.msra.mxu0 0.0
        %1108 = vmatprep.subr.mxu0 0.0
        %1109 = vmatpush2.msra.mxu0 0.0
        %1110 = vmatprep.subr.mxu0 0.0
        %1111 = vmatpush2.msra.mxu0 0.0
        %1112 = vmatprep.subr.mxu0 0.0
        %1113 = vmatpush2.msra.mxu0 0.0
        %1114 = vmatprep.subr.mxu0 0.0
        %1115 = vmatpush2.msra.mxu0 0.0
        %1116 = vmatprep.subr.mxu0 0.0
        %1117 = vmatpush2.msra.mxu0 0.0
        %1118 = vmatprep.subr.mxu0 0.0
        %1119 = vmatpush2.msra.mxu0 0.0
        %1120 = vmatprep.subr.mxu0 0.0
        %1121 = vmatpush2.msra.mxu0 0.0
        %1122 = vmatprep.subr.mxu0 0.0
        %1123 = vmatpush2.msra.mxu0 0.0
        %1124 = vmatprep.subr.mxu0 0.0
        %1125 = vmatpush2.msra.mxu0 0.0
        %1126 = vmatprep.subr.mxu0 0.0
        %1127 = vmatpush2.msra.mxu0 0.0
        %1128 = vmatprep.subr.mxu0 0.0
        %1129 = vmatpush2.msra.mxu0 0.0
        %1130 = vmatprep.subr.mxu0 0.0
        %1131 = vmatpush2.msra.mxu0 0.0
        %1132 = vmatprep.subr.mxu0 0.0
        %1133 = vmatpush2.msra.mxu0 0.0
        %1134 = vmatprep.subr.mxu0 0.0
        %1135 = vmatpush2.msra.mxu0 0.0
        %1136 = vmatprep.subr.mxu0 0.0
        %1137 = vmatpush2.msra.mxu0 0.0
        %1138 = vmatprep.mubr.f32.mxu0 0.0
        %1139 = vmatmul.mubr.f32.gmra.mxu0 %v991
        %v1140 = vpop.f32.mrf.mxu0
        %v1141 = vadd.f32 %v1072, %v1140
        %v1142 = vpop.f32.mrf.mxu0
        %1143 = vdwg.mxu0
        %v1144 = vld [vmem:[%s10] sm:$0xff]
        %v1145 = vld [vmem:[%s10 + $0x8] sm:$0xff]
        %v1146 = vld [vmem:[%s10 + $0x10] sm:$0xff]
        %v1147 = vld [vmem:[%s10 + $0x18] sm:$0xff]
        %v1148 = vld [vmem:[%s11] sm:$0x1]
        %v1150 = vlaneseq
        %v1151 = vshrl.u32 %v1150, 7
        %v1152 = vsub.s32 0, %v1151
        %v1153 = vrot.slane %v1148, %v1152
        %1155 = vmatprep.subr.mxu0 0.0
        %1156 = vmatpush1.msra.mxu0 0.0
        %1157 = vmatprep.subr.mxu0 0.0
        %1158 = vmatpush1.msra.mxu0 0.0
        %1159 = vmatprep.subr.mxu0 0.0
        %1160 = vmatpush1.msra.mxu0 0.0
        %1161 = vmatprep.subr.mxu0 0.0
        %1162 = vmatpush1.msra.mxu0 0.0
        %1163 = vmatprep.subr.mxu0 0.0
        %1164 = vmatpush1.msra.mxu0 0.0
        %1165 = vmatprep.subr.mxu0 0.0
        %1166 = vmatpush1.msra.mxu0 0.0
        %1167 = vmatprep.subr.mxu0 0.0
        %1168 = vmatpush1.msra.mxu0 0.0
        %1169 = vmatprep.subr.mxu0 0.0
        %1170 = vmatpush1.msra.mxu0 0.0
        %1171 = vmatprep.subr.mxu0 0.0
        %1172 = vmatpush1.msra.mxu0 0.0
        %1173 = vmatprep.subr.mxu0 0.0
        %1174 = vmatpush1.msra.mxu0 0.0
        %1175 = vmatprep.subr.mxu0 0.0
        %1176 = vmatpush1.msra.mxu0 0.0
        %1177 = vmatprep.subr.mxu0 0.0
        %1178 = vmatpush1.msra.mxu0 0.0
        %1179 = vmatprep.subr.mxu0 0.0
        %1180 = vmatpush1.msra.mxu0 %v1147
        %1181 = vmatprep.subr.mxu0 0.0
        %1182 = vmatpush1.msra.mxu0 %v1146
        %1183 = vmatprep.subr.mxu0 0.0
        %1184 = vmatpush1.msra.mxu0 %v1145
        %1185 = vmatprep.subr.mxu0 0.0
        %1186 = vmatpush1.msra.mxu0 %v1144
        %1187 = vmatprep.subr.mxu0 0.0
        %1188 = vmatpush2.msra.mxu0 0.0
        %1189 = vmatprep.subr.mxu0 0.0
        %1190 = vmatpush2.msra.mxu0 0.0
        %1191 = vmatprep.subr.mxu0 0.0
        %1192 = vmatpush2.msra.mxu0 0.0
        %1193 = vmatprep.subr.mxu0 0.0
        %1194 = vmatpush2.msra.mxu0 0.0
        %1195 = vmatprep.subr.mxu0 0.0
        %1196 = vmatpush2.msra.mxu0 0.0
        %1197 = vmatprep.subr.mxu0 0.0
        %1198 = vmatpush2.msra.mxu0 0.0
        %1199 = vmatprep.subr.mxu0 0.0
        %1200 = vmatpush2.msra.mxu0 0.0
        %1201 = vmatprep.subr.mxu0 0.0
        %1202 = vmatpush2.msra.mxu0 0.0
        %1203 = vmatprep.subr.mxu0 0.0
        %1204 = vmatpush2.msra.mxu0 0.0
        %1205 = vmatprep.subr.mxu0 0.0
        %1206 = vmatpush2.msra.mxu0 0.0
        %1207 = vmatprep.subr.mxu0 0.0
        %1208 = vmatpush2.msra.mxu0 0.0
        %1209 = vmatprep.subr.mxu0 0.0
        %1210 = vmatpush2.msra.mxu0 0.0
        %1211 = vmatprep.subr.mxu0 0.0
        %1212 = vmatpush2.msra.mxu0 0.0
        %1213 = vmatprep.subr.mxu0 0.0
        %1214 = vmatpush2.msra.mxu0 0.0
        %1215 = vmatprep.subr.mxu0 0.0
        %1216 = vmatpush2.msra.mxu0 0.0
        %1217 = vmatprep.subr.mxu0 0.0
        %1218 = vmatpush2.msra.mxu0 0.0
        %1219 = vmatprep.mubr.f32.mxu0 0.0
        %1220 = vmatmul.mubr.f32.gmra.mxu0 %v991
        %v1221 = vpop.f32.mrf.mxu0
        %v1222 = vadd.f32 %v1153, %v1221
        %v1223 = vpop.f32.mrf.mxu0
        %1224 = vdwg.mxu0
        %vm1225 = vcmask 64512
        %v1227 = vsel %vm1225, %v1060, 0
        %v1230 = vsel %vm1225, %v1141, 0
        %1232 = vmatprep.subr.mxu0 0.0
        %1233 = vmatpush1.xpose.msra.mxu0 0.0
        %1234 = vmatprep.subr.mxu0 0.0
        %1235 = vmatpush1.xpose.msra.mxu0 0.0
        %1236 = vmatprep.subr.mxu0 0.0
        %1237 = vmatpush1.xpose.msra.mxu0 0.0
        %1238 = vmatprep.subr.mxu0 0.0
        %1239 = vmatpush1.xpose.msra.mxu0 0.0
        %1240 = vmatprep.subr.mxu0 0.0
        %1241 = vmatpush1.xpose.msra.mxu0 0.0
        %1242 = vmatprep.subr.mxu0 0.0
        %1243 = vmatpush1.xpose.msra.mxu0 0.0
        %1244 = vmatprep.subr.mxu0 0.0
        %1245 = vmatpush1.xpose.msra.mxu0 0.0
        %1246 = vmatprep.subr.mxu0 0.0
        %1247 = vmatpush1.xpose.msra.mxu0 0.0
        %1248 = vmatprep.subr.mxu0 0.0
        %1249 = vmatpush1.xpose.msra.mxu0 0.0
        %1250 = vmatprep.subr.mxu0 0.0
        %1251 = vmatpush1.xpose.msra.mxu0 0.0
        %1252 = vmatprep.subr.mxu0 0.0
        %1253 = vmatpush1.xpose.msra.mxu0 0.0
        %1254 = vmatprep.subr.mxu0 0.0
        %1255 = vmatpush1.xpose.msra.mxu0 0.0
        %1256 = vmatprep.subr.mxu0 0.0
        %1257 = vmatpush1.xpose.msra.mxu0 0.0
        %1258 = vmatprep.subr.mxu0 0.0
        %1259 = vmatpush1.xpose.msra.mxu0 0.0
        %1260 = vmatprep.subr.mxu0 0.0
        %1261 = vmatpush1.xpose.msra.mxu0 0.0
        %1262 = vmatprep.subr.mxu0 0.0
        %1263 = vmatpush1.xpose.msra.mxu0 %v1230
        %1264 = vmatprep.subr.mxu0 0.0
        %1265 = vmatpush2.xpose.msra.mxu0 0.0
        %1266 = vmatprep.subr.mxu0 0.0
        %1267 = vmatpush2.xpose.msra.mxu0 0.0
        %1268 = vmatprep.subr.mxu0 0.0
        %1269 = vmatpush2.xpose.msra.mxu0 0.0
        %1270 = vmatprep.subr.mxu0 0.0
        %1271 = vmatpush2.xpose.msra.mxu0 0.0
        %1272 = vmatprep.subr.mxu0 0.0
        %1273 = vmatpush2.xpose.msra.mxu0 0.0
        %1274 = vmatprep.subr.mxu0 0.0
        %1275 = vmatpush2.xpose.msra.mxu0 0.0
        %1276 = vmatprep.subr.mxu0 0.0
        %1277 = vmatpush2.xpose.msra.mxu0 0.0
        %1278 = vmatprep.subr.mxu0 0.0
        %1279 = vmatpush2.xpose.msra.mxu0 0.0
        %1280 = vmatprep.subr.mxu0 0.0
        %1281 = vmatpush2.xpose.msra.mxu0 0.0
        %1282 = vmatprep.subr.mxu0 0.0
        %1283 = vmatpush2.xpose.msra.mxu0 0.0
        %1284 = vmatprep.subr.mxu0 0.0
        %1285 = vmatpush2.xpose.msra.mxu0 0.0
        %1286 = vmatprep.subr.mxu0 0.0
        %1287 = vmatpush2.xpose.msra.mxu0 0.0
        %1288 = vmatprep.subr.mxu0 0.0
        %1289 = vmatpush2.xpose.msra.mxu0 0.0
        %1290 = vmatprep.subr.mxu0 0.0
        %1291 = vmatpush2.xpose.msra.mxu0 0.0
        %1292 = vmatprep.subr.mxu0 0.0
        %1293 = vmatpush2.xpose.msra.mxu0 0.0
        %1294 = vmatprep.subr.mxu0 0.0
        %1295 = vmatpush2.xpose.msra.mxu0 0.0
        %1296 = vmatprep.mubr.f32.mxu0 0.0
        %1297 = vmatmul.mubr.f32.gmra.mxu0 %v1227
        %v1298 = vpop.f32.mrf.mxu0
        %v1299 = vadd.f32 0.0, %v1298
        %v1300 = vpop.f32.mrf.mxu0
        %1301 = vdwg.mxu0
        %v1302 = vmul.f32 %v1299, 0.35355338
        %v1303 = vsel %vm977, -1e+30, %v1302
        %v1304 = vsel %vm1225, %v1303, -inf
        %1305 = vmax.xlane.f32.xlu0 %v1304
        %v1306 = vpop.xlane.xlu0 %1305
        %v1307 = vsub.f32 %v1303, %v1306
        %v1308 = vmul.f32 %v1307, 1.442695
        %v1309 = vpow.pop %v1308
        %v1310 = vsel %vm1225, %v1309, 0.0
        %1311 = vadd.xlane.f32.xlu0 %v1310
        %v1312 = vpop.xlane.xlu0 %1311
        %v1313 = vrcp.pop %v1312
        %v1314 = vmul.f32 %v1309, %v1313
        %v1316 = vsel %vm1225, %v1314, 0
        %1318 = vmatprep.subr.mxu0 0.0
        %1319 = vmatpush1.msra.mxu0 0.0
        %1320 = vmatprep.subr.mxu0 0.0
        %1321 = vmatpush1.msra.mxu0 0.0
        %1322 = vmatprep.subr.mxu0 0.0
        %1323 = vmatpush1.msra.mxu0 0.0
        %1324 = vmatprep.subr.mxu0 0.0
        %1325 = vmatpush1.msra.mxu0 0.0
        %1326 = vmatprep.subr.mxu0 0.0
        %1327 = vmatpush1.msra.mxu0 0.0
        %1328 = vmatprep.subr.mxu0 0.0
        %1329 = vmatpush1.msra.mxu0 0.0
        %1330 = vmatprep.subr.mxu0 0.0
        %1331 = vmatpush1.msra.mxu0 0.0
        %1332 = vmatprep.subr.mxu0 0.0
        %1333 = vmatpush1.msra.mxu0 0.0
        %1334 = vmatprep.subr.mxu0 0.0
        %1335 = vmatpush1.msra.mxu0 0.0
        %1336 = vmatprep.subr.mxu0 0.0
        %1337 = vmatpush1.msra.mxu0 0.0
        %1338 = vmatprep.subr.mxu0 0.0
        %1339 = vmatpush1.msra.mxu0 0.0
        %1340 = vmatprep.subr.mxu0 0.0
        %1341 = vmatpush1.msra.mxu0 0.0
        %1342 = vmatprep.subr.mxu0 0.0
        %1343 = vmatpush1.msra.mxu0 0.0
        %1344 = vmatprep.subr.mxu0 0.0
        %1345 = vmatpush1.msra.mxu0 0.0
        %1346 = vmatprep.subr.mxu0 0.0
        %1347 = vmatpush1.msra.mxu0 0.0
        %1348 = vmatprep.subr.mxu0 0.0
        %1349 = vmatpush1.msra.mxu0 %v1222
        %1350 = vmatprep.subr.mxu0 0.0
        %1351 = vmatpush2.msra.mxu0 0.0
        %1352 = vmatprep.subr.mxu0 0.0
        %1353 = vmatpush2.msra.mxu0 0.0
        %1354 = vmatprep.subr.mxu0 0.0
        %1355 = vmatpush2.msra.mxu0 0.0
        %1356 = vmatprep.subr.mxu0 0.0
        %1357 = vmatpush2.msra.mxu0 0.0
        %1358 = vmatprep.subr.mxu0 0.0
        %1359 = vmatpush2.msra.mxu0 0.0
        %1360 = vmatprep.subr.mxu0 0.0
        %1361 = vmatpush2.msra.mxu0 0.0
        %1362 = vmatprep.subr.mxu0 0.0
        %1363 = vmatpush2.msra.mxu0 0.0
        %1364 = vmatprep.subr.mxu0 0.0
        %1365 = vmatpush2.msra.mxu0 0.0
        %1366 = vmatprep.subr.mxu0 0.0
        %1367 = vmatpush2.msra.mxu0 0.0
        %1368 = vmatprep.subr.mxu0 0.0
        %1369 = vmatpush2.msra.mxu0 0.0
        %1370 = vmatprep.subr.mxu0 0.0
        %1371 = vmatpush2.msra.mxu0 0.0
        %1372 = vmatprep.subr.mxu0 0.0
        %1373 = vmatpush2.msra.mxu0 0.0
        %1374 = vmatprep.subr.mxu0 0.0
        %1375 = vmatpush2.msra.mxu0 0.0
        %1376 = vmatprep.subr.mxu0 0.0
        %1377 = vmatpush2.msra.mxu0 0.0
        %1378 = vmatprep.subr.mxu0 0.0
        %1379 = vmatpush2.msra.mxu0 0.0
        %1380 = vmatprep.subr.mxu0 0.0
        %1381 = vmatpush2.msra.mxu0 0.0
        %1382 = vmatprep.mubr.f32.mxu0 0.0
        %1383 = vmatmul.mubr.f32.gmra.mxu0 %v1316
        %v1384 = vpop.f32.mrf.mxu0
        %v1385 = vadd.f32 0.0, %v1384
        %v1386 = vpop.f32.mrf.mxu0
        %1387 = vdwg.mxu0
        %v1388 = vld [vmem:[%s12] sm:$0xff]
        %s1389 = scalar_lea.vmem %s6, 32
        %v1390 = vld [vmem:[%s1389] sm:$0xff]
        %v1391 = vld [vmem:[%s1389 + $0x8] sm:$0xff]
        %v1392 = vld [vmem:[%s1389 + $0x10] sm:$0xff]
        %v1393 = vld [vmem:[%s1389 + $0x18] sm:$0xff]
        %s1394 = scalar_lea.vmem %s7, 1
        %v1395 = vld [vmem:[%s1394] sm:$0x1]
        %v1397 = vlaneseq
        %v1398 = vshrl.u32 %v1397, 7
        %v1399 = vsub.s32 0, %v1398
        %v1400 = vrot.slane %v1395, %v1399
        %1402 = vmatprep.subr.mxu0 0.0
        %1403 = vmatpush1.msra.mxu0 0.0
        %1404 = vmatprep.subr.mxu0 0.0
        %1405 = vmatpush1.msra.mxu0 0.0
        %1406 = vmatprep.subr.mxu0 0.0
        %1407 = vmatpush1.msra.mxu0 0.0
        %1408 = vmatprep.subr.mxu0 0.0
        %1409 = vmatpush1.msra.mxu0 0.0
        %1410 = vmatprep.subr.mxu0 0.0
        %1411 = vmatpush1.msra.mxu0 0.0
        %1412 = vmatprep.subr.mxu0 0.0
        %1413 = vmatpush1.msra.mxu0 0.0
        %1414 = vmatprep.subr.mxu0 0.0
        %1415 = vmatpush1.msra.mxu0 0.0
        %1416 = vmatprep.subr.mxu0 0.0
        %1417 = vmatpush1.msra.mxu0 0.0
        %1418 = vmatprep.subr.mxu0 0.0
        %1419 = vmatpush1.msra.mxu0 0.0
        %1420 = vmatprep.subr.mxu0 0.0
        %1421 = vmatpush1.msra.mxu0 0.0
        %1422 = vmatprep.subr.mxu0 0.0
        %1423 = vmatpush1.msra.mxu0 0.0
        %1424 = vmatprep.subr.mxu0 0.0
        %1425 = vmatpush1.msra.mxu0 0.0
        %1426 = vmatprep.subr.mxu0 0.0
        %1427 = vmatpush1.msra.mxu0 %v1393
        %1428 = vmatprep.subr.mxu0 0.0
        %1429 = vmatpush1.msra.mxu0 %v1392
        %1430 = vmatprep.subr.mxu0 0.0
        %1431 = vmatpush1.msra.mxu0 %v1391
        %1432 = vmatprep.subr.mxu0 0.0
        %1433 = vmatpush1.msra.mxu0 %v1390
        %1434 = vmatprep.subr.mxu0 0.0
        %1435 = vmatpush2.msra.mxu0 0.0
        %1436 = vmatprep.subr.mxu0 0.0
        %1437 = vmatpush2.msra.mxu0 0.0
        %1438 = vmatprep.subr.mxu0 0.0
        %1439 = vmatpush2.msra.mxu0 0.0
        %1440 = vmatprep.subr.mxu0 0.0
        %1441 = vmatpush2.msra.mxu0 0.0
        %1442 = vmatprep.subr.mxu0 0.0
        %1443 = vmatpush2.msra.mxu0 0.0
        %1444 = vmatprep.subr.mxu0 0.0
        %1445 = vmatpush2.msra.mxu0 0.0
        %1446 = vmatprep.subr.mxu0 0.0
        %1447 = vmatpush2.msra.mxu0 0.0
        %1448 = vmatprep.subr.mxu0 0.0
        %1449 = vmatpush2.msra.mxu0 0.0
        %1450 = vmatprep.subr.mxu0 0.0
        %1451 = vmatpush2.msra.mxu0 0.0
        %1452 = vmatprep.subr.mxu0 0.0
        %1453 = vmatpush2.msra.mxu0 0.0
        %1454 = vmatprep.subr.mxu0 0.0
        %1455 = vmatpush2.msra.mxu0 0.0
        %1456 = vmatprep.subr.mxu0 0.0
        %1457 = vmatpush2.msra.mxu0 0.0
        %1458 = vmatprep.subr.mxu0 0.0
        %1459 = vmatpush2.msra.mxu0 0.0
        %1460 = vmatprep.subr.mxu0 0.0
        %1461 = vmatpush2.msra.mxu0 0.0
        %1462 = vmatprep.subr.mxu0 0.0
        %1463 = vmatpush2.msra.mxu0 0.0
        %1464 = vmatprep.subr.mxu0 0.0
        %1465 = vmatpush2.msra.mxu0 0.0
        %1466 = vmatprep.mubr.f32.mxu0 0.0
        %1467 = vmatmul.mubr.f32.gmra.mxu0 %v991
        %v1468 = vpop.f32.mrf.mxu0
        %v1469 = vadd.f32 %v1400, %v1468
        %v1470 = vpop.f32.mrf.mxu0
        %1471 = vdwg.mxu0
        %s1472 = scalar_lea.vmem %s8, 32
        %v1473 = vld [vmem:[%s1472] sm:$0xff]
        %v1474 = vld [vmem:[%s1472 + $0x8] sm:$0xff]
        %v1475 = vld [vmem:[%s1472 + $0x10] sm:$0xff]
        %v1476 = vld [vmem:[%s1472 + $0x18] sm:$0xff]
        %s1477 = scalar_lea.vmem %s9, 1
        %v1478 = vld [vmem:[%s1477] sm:$0x1]
        %v1480 = vlaneseq
        %v1481 = vshrl.u32 %v1480, 7
        %v1482 = vsub.s32 0, %v1481
        %v1483 = vrot.slane %v1478, %v1482
        %1485 = vmatprep.subr.mxu0 0.0
        %1486 = vmatpush1.msra.mxu0 0.0
        %1487 = vmatprep.subr.mxu0 0.0
        %1488 = vmatpush1.msra.mxu0 0.0
        %1489 = vmatprep.subr.mxu0 0.0
        %1490 = vmatpush1.msra.mxu0 0.0
        %1491 = vmatprep.subr.mxu0 0.0
        %1492 = vmatpush1.msra.mxu0 0.0
        %1493 = vmatprep.subr.mxu0 0.0
        %1494 = vmatpush1.msra.mxu0 0.0
        %1495 = vmatprep.subr.mxu0 0.0
        %1496 = vmatpush1.msra.mxu0 0.0
        %1497 = vmatprep.subr.mxu0 0.0
        %1498 = vmatpush1.msra.mxu0 0.0
        %1499 = vmatprep.subr.mxu0 0.0
        %1500 = vmatpush1.msra.mxu0 0.0
        %1501 = vmatprep.subr.mxu0 0.0
        %1502 = vmatpush1.msra.mxu0 0.0
        %1503 = vmatprep.subr.mxu0 0.0
        %1504 = vmatpush1.msra.mxu0 0.0
        %1505 = vmatprep.subr.mxu0 0.0
        %1506 = vmatpush1.msra.mxu0 0.0
        %1507 = vmatprep.subr.mxu0 0.0
        %1508 = vmatpush1.msra.mxu0 0.0
        %1509 = vmatprep.subr.mxu0 0.0
        %1510 = vmatpush1.msra.mxu0 %v1476
        %1511 = vmatprep.subr.mxu0 0.0
        %1512 = vmatpush1.msra.mxu0 %v1475
        %1513 = vmatprep.subr.mxu0 0.0
        %1514 = vmatpush1.msra.mxu0 %v1474
        %1515 = vmatprep.subr.mxu0 0.0
        %1516 = vmatpush1.msra.mxu0 %v1473
        %1517 = vmatprep.subr.mxu0 0.0
        %1518 = vmatpush2.msra.mxu0 0.0
        %1519 = vmatprep.subr.mxu0 0.0
        %1520 = vmatpush2.msra.mxu0 0.0
        %1521 = vmatprep.subr.mxu0 0.0
        %1522 = vmatpush2.msra.mxu0 0.0
        %1523 = vmatprep.subr.mxu0 0.0
        %1524 = vmatpush2.msra.mxu0 0.0
        %1525 = vmatprep.subr.mxu0 0.0
        %1526 = vmatpush2.msra.mxu0 0.0
        %1527 = vmatprep.subr.mxu0 0.0
        %1528 = vmatpush2.msra.mxu0 0.0
        %1529 = vmatprep.subr.mxu0 0.0
        %1530 = vmatpush2.msra.mxu0 0.0
        %1531 = vmatprep.subr.mxu0 0.0
        %1532 = vmatpush2.msra.mxu0 0.0
        %1533 = vmatprep.subr.mxu0 0.0
        %1534 = vmatpush2.msra.mxu0 0.0
        %1535 = vmatprep.subr.mxu0 0.0
        %1536 = vmatpush2.msra.mxu0 0.0
        %1537 = vmatprep.subr.mxu0 0.0
        %1538 = vmatpush2.msra.mxu0 0.0
        %1539 = vmatprep.subr.mxu0 0.0
        %1540 = vmatpush2.msra.mxu0 0.0
        %1541 = vmatprep.subr.mxu0 0.0
        %1542 = vmatpush2.msra.mxu0 0.0
        %1543 = vmatprep.subr.mxu0 0.0
        %1544 = vmatpush2.msra.mxu0 0.0
        %1545 = vmatprep.subr.mxu0 0.0
        %1546 = vmatpush2.msra.mxu0 0.0
        %1547 = vmatprep.subr.mxu0 0.0
        %1548 = vmatpush2.msra.mxu0 0.0
        %1549 = vmatprep.mubr.f32.mxu0 0.0
        %1550 = vmatmul.mubr.f32.gmra.mxu0 %v991
        %v1551 = vpop.f32.mrf.mxu0
        %v1552 = vadd.f32 %v1483, %v1551
        %v1553 = vpop.f32.mrf.mxu0
        %1554 = vdwg.mxu0
        %s1555 = scalar_lea.vmem %s10, 32
        %v1556 = vld [vmem:[%s1555] sm:$0xff]
        %v1557 = vld [vmem:[%s1555 + $0x8] sm:$0xff]
        %v1558 = vld [vmem:[%s1555 + $0x10] sm:$0xff]
        %v1559 = vld [vmem:[%s1555 + $0x18] sm:$0xff]
        %s1560 = scalar_lea.vmem %s11, 1
        %v1561 = vld [vmem:[%s1560] sm:$0x1]
        %v1563 = vlaneseq
        %v1564 = vshrl.u32 %v1563, 7
        %v1565 = vsub.s32 0, %v1564
        %v1566 = vrot.slane %v1561, %v1565
        %1568 = vmatprep.subr.mxu0 0.0
        %1569 = vmatpush1.msra.mxu0 0.0
        %1570 = vmatprep.subr.mxu0 0.0
        %1571 = vmatpush1.msra.mxu0 0.0
        %1572 = vmatprep.subr.mxu0 0.0
        %1573 = vmatpush1.msra.mxu0 0.0
        %1574 = vmatprep.subr.mxu0 0.0
        %1575 = vmatpush1.msra.mxu0 0.0
        %1576 = vmatprep.subr.mxu0 0.0
        %1577 = vmatpush1.msra.mxu0 0.0
        %1578 = vmatprep.subr.mxu0 0.0
        %1579 = vmatpush1.msra.mxu0 0.0
        %1580 = vmatprep.subr.mxu0 0.0
        %1581 = vmatpush1.msra.mxu0 0.0
        %1582 = vmatprep.subr.mxu0 0.0
        %1583 = vmatpush1.msra.mxu0 0.0
        %1584 = vmatprep.subr.mxu0 0.0
        %1585 = vmatpush1.msra.mxu0 0.0
        %1586 = vmatprep.subr.mxu0 0.0
        %1587 = vmatpush1.msra.mxu0 0.0
        %1588 = vmatprep.subr.mxu0 0.0
        %1589 = vmatpush1.msra.mxu0 0.0
        %1590 = vmatprep.subr.mxu0 0.0
        %1591 = vmatpush1.msra.mxu0 0.0
        %1592 = vmatprep.subr.mxu0 0.0
        %1593 = vmatpush1.msra.mxu0 %v1559
        %1594 = vmatprep.subr.mxu0 0.0
        %1595 = vmatpush1.msra.mxu0 %v1558
        %1596 = vmatprep.subr.mxu0 0.0
        %1597 = vmatpush1.msra.mxu0 %v1557
        %1598 = vmatprep.subr.mxu0 0.0
        %1599 = vmatpush1.msra.mxu0 %v1556
        %1600 = vmatprep.subr.mxu0 0.0
        %1601 = vmatpush2.msra.mxu0 0.0
        %1602 = vmatprep.subr.mxu0 0.0
        %1603 = vmatpush2.msra.mxu0 0.0
        %1604 = vmatprep.subr.mxu0 0.0
        %1605 = vmatpush2.msra.mxu0 0.0
        %1606 = vmatprep.subr.mxu0 0.0
        %1607 = vmatpush2.msra.mxu0 0.0
        %1608 = vmatprep.subr.mxu0 0.0
        %1609 = vmatpush2.msra.mxu0 0.0
        %1610 = vmatprep.subr.mxu0 0.0
        %1611 = vmatpush2.msra.mxu0 0.0
        %1612 = vmatprep.subr.mxu0 0.0
        %1613 = vmatpush2.msra.mxu0 0.0
        %1614 = vmatprep.subr.mxu0 0.0
        %1615 = vmatpush2.msra.mxu0 0.0
        %1616 = vmatprep.subr.mxu0 0.0
        %1617 = vmatpush2.msra.mxu0 0.0
        %1618 = vmatprep.subr.mxu0 0.0
        %1619 = vmatpush2.msra.mxu0 0.0
        %1620 = vmatprep.subr.mxu0 0.0
        %1621 = vmatpush2.msra.mxu0 0.0
        %1622 = vmatprep.subr.mxu0 0.0
        %1623 = vmatpush2.msra.mxu0 0.0
        %1624 = vmatprep.subr.mxu0 0.0
        %1625 = vmatpush2.msra.mxu0 0.0
        %1626 = vmatprep.subr.mxu0 0.0
        %1627 = vmatpush2.msra.mxu0 0.0
        %1628 = vmatprep.subr.mxu0 0.0
        %1629 = vmatpush2.msra.mxu0 0.0
        %1630 = vmatprep.subr.mxu0 0.0
        %1631 = vmatpush2.msra.mxu0 0.0
        %1632 = vmatprep.mubr.f32.mxu0 0.0
        %1633 = vmatmul.mubr.f32.gmra.mxu0 %v991
        %v1634 = vpop.f32.mrf.mxu0
        %v1635 = vadd.f32 %v1566, %v1634
        %v1636 = vpop.f32.mrf.mxu0
        %1637 = vdwg.mxu0
        %v1639 = vsel %vm1225, %v1469, 0
        %v1642 = vsel %vm1225, %v1552, 0
        %1644 = vmatprep.subr.mxu0 0.0
        %1645 = vmatpush1.xpose.msra.mxu0 0.0
        %1646 = vmatprep.subr.mxu0 0.0
        %1647 = vmatpush1.xpose.msra.mxu0 0.0
        %1648 = vmatprep.subr.mxu0 0.0
        %1649 = vmatpush1.xpose.msra.mxu0 0.0
        %1650 = vmatprep.subr.mxu0 0.0
        %1651 = vmatpush1.xpose.msra.mxu0 0.0
        %1652 = vmatprep.subr.mxu0 0.0
        %1653 = vmatpush1.xpose.msra.mxu0 0.0
        %1654 = vmatprep.subr.mxu0 0.0
        %1655 = vmatpush1.xpose.msra.mxu0 0.0
        %1656 = vmatprep.subr.mxu0 0.0
        %1657 = vmatpush1.xpose.msra.mxu0 0.0
        %1658 = vmatprep.subr.mxu0 0.0
        %1659 = vmatpush1.xpose.msra.mxu0 0.0
        %1660 = vmatprep.subr.mxu0 0.0
        %1661 = vmatpush1.xpose.msra.mxu0 0.0
        %1662 = vmatprep.subr.mxu0 0.0
        %1663 = vmatpush1.xpose.msra.mxu0 0.0
        %1664 = vmatprep.subr.mxu0 0.0
        %1665 = vmatpush1.xpose.msra.mxu0 0.0
        %1666 = vmatprep.subr.mxu0 0.0
        %1667 = vmatpush1.xpose.msra.mxu0 0.0
        %1668 = vmatprep.subr.mxu0 0.0
        %1669 = vmatpush1.xpose.msra.mxu0 0.0
        %1670 = vmatprep.subr.mxu0 0.0
        %1671 = vmatpush1.xpose.msra.mxu0 0.0
        %1672 = vmatprep.subr.mxu0 0.0
        %1673 = vmatpush1.xpose.msra.mxu0 0.0
        %1674 = vmatprep.subr.mxu0 0.0
        %1675 = vmatpush1.xpose.msra.mxu0 %v1642
        %1676 = vmatprep.subr.mxu0 0.0
        %1677 = vmatpush2.xpose.msra.mxu0 0.0
        %1678 = vmatprep.subr.mxu0 0.0
        %1679 = vmatpush2.xpose.msra.mxu0 0.0
        %1680 = vmatprep.subr.mxu0 0.0
        %1681 = vmatpush2.xpose.msra.mxu0 0.0
        %1682 = vmatprep.subr.mxu0 0.0
        %1683 = vmatpush2.xpose.msra.mxu0 0.0
        %1684 = vmatprep.subr.mxu0 0.0
        %1685 = vmatpush2.xpose.msra.mxu0 0.0
        %1686 = vmatprep.subr.mxu0 0.0
        %1687 = vmatpush2.xpose.msra.mxu0 0.0
        %1688 = vmatprep.subr.mxu0 0.0
        %1689 = vmatpush2.xpose.msra.mxu0 0.0
        %1690 = vmatprep.subr.mxu0 0.0
        %1691 = vmatpush2.xpose.msra.mxu0 0.0
        %1692 = vmatprep.subr.mxu0 0.0
        %1693 = vmatpush2.xpose.msra.mxu0 0.0
        %1694 = vmatprep.subr.mxu0 0.0
        %1695 = vmatpush2.xpose.msra.mxu0 0.0
        %1696 = vmatprep.subr.mxu0 0.0
        %1697 = vmatpush2.xpose.msra.mxu0 0.0
        %1698 = vmatprep.subr.mxu0 0.0
        %1699 = vmatpush2.xpose.msra.mxu0 0.0
        %1700 = vmatprep.subr.mxu0 0.0
        %1701 = vmatpush2.xpose.msra.mxu0 0.0
        %1702 = vmatprep.subr.mxu0 0.0
        %1703 = vmatpush2.xpose.msra.mxu0 0.0
        %1704 = vmatprep.subr.mxu0 0.0
        %1705 = vmatpush2.xpose.msra.mxu0 0.0
        %1706 = vmatprep.subr.mxu0 0.0
        %1707 = vmatpush2.xpose.msra.mxu0 0.0
        %1708 = vmatprep.mubr.f32.mxu0 0.0
        %1709 = vmatmul.mubr.f32.gmra.mxu0 %v1639
        %v1710 = vpop.f32.mrf.mxu0
        %v1711 = vadd.f32 0.0, %v1710
        %v1712 = vpop.f32.mrf.mxu0
        %1713 = vdwg.mxu0
        %v1714 = vmul.f32 %v1711, 0.35355338
        %v1715 = vsel %vm977, -1e+30, %v1714
        %v1716 = vsel %vm1225, %v1715, -inf
        %1717 = vmax.xlane.f32.xlu0 %v1716
        %v1718 = vpop.xlane.xlu0 %1717
        %v1719 = vsub.f32 %v1715, %v1718
        %v1720 = vmul.f32 %v1719, 1.442695
        %v1721 = vpow.pop %v1720
        %v1722 = vsel %vm1225, %v1721, 0.0
        %1723 = vadd.xlane.f32.xlu0 %v1722
        %v1724 = vpop.xlane.xlu0 %1723
        %v1725 = vrcp.pop %v1724
        %v1726 = vmul.f32 %v1721, %v1725
        %v1728 = vsel %vm1225, %v1726, 0
        %1730 = vmatprep.subr.mxu0 0.0
        %1731 = vmatpush1.msra.mxu0 0.0
        %1732 = vmatprep.subr.mxu0 0.0
        %1733 = vmatpush1.msra.mxu0 0.0
        %1734 = vmatprep.subr.mxu0 0.0
        %1735 = vmatpush1.msra.mxu0 0.0
        %1736 = vmatprep.subr.mxu0 0.0
        %1737 = vmatpush1.msra.mxu0 0.0
        %1738 = vmatprep.subr.mxu0 0.0
        %1739 = vmatpush1.msra.mxu0 0.0
        %1740 = vmatprep.subr.mxu0 0.0
        %1741 = vmatpush1.msra.mxu0 0.0
        %1742 = vmatprep.subr.mxu0 0.0
        %1743 = vmatpush1.msra.mxu0 0.0
        %1744 = vmatprep.subr.mxu0 0.0
        %1745 = vmatpush1.msra.mxu0 0.0
        %1746 = vmatprep.subr.mxu0 0.0
        %1747 = vmatpush1.msra.mxu0 0.0
        %1748 = vmatprep.subr.mxu0 0.0
        %1749 = vmatpush1.msra.mxu0 0.0
        %1750 = vmatprep.subr.mxu0 0.0
        %1751 = vmatpush1.msra.mxu0 0.0
        %1752 = vmatprep.subr.mxu0 0.0
        %1753 = vmatpush1.msra.mxu0 0.0
        %1754 = vmatprep.subr.mxu0 0.0
        %1755 = vmatpush1.msra.mxu0 0.0
        %1756 = vmatprep.subr.mxu0 0.0
        %1757 = vmatpush1.msra.mxu0 0.0
        %1758 = vmatprep.subr.mxu0 0.0
        %1759 = vmatpush1.msra.mxu0 0.0
        %1760 = vmatprep.subr.mxu0 0.0
        %1761 = vmatpush1.msra.mxu0 %v1635
        %1762 = vmatprep.subr.mxu0 0.0
        %1763 = vmatpush2.msra.mxu0 0.0
        %1764 = vmatprep.subr.mxu0 0.0
        %1765 = vmatpush2.msra.mxu0 0.0
        %1766 = vmatprep.subr.mxu0 0.0
        %1767 = vmatpush2.msra.mxu0 0.0
        %1768 = vmatprep.subr.mxu0 0.0
        %1769 = vmatpush2.msra.mxu0 0.0
        %1770 = vmatprep.subr.mxu0 0.0
        %1771 = vmatpush2.msra.mxu0 0.0
        %1772 = vmatprep.subr.mxu0 0.0
        %1773 = vmatpush2.msra.mxu0 0.0
        %1774 = vmatprep.subr.mxu0 0.0
        %1775 = vmatpush2.msra.mxu0 0.0
        %1776 = vmatprep.subr.mxu0 0.0
        %1777 = vmatpush2.msra.mxu0 0.0
        %1778 = vmatprep.subr.mxu0 0.0
        %1779 = vmatpush2.msra.mxu0 0.0
        %1780 = vmatprep.subr.mxu0 0.0
        %1781 = vmatpush2.msra.mxu0 0.0
        %1782 = vmatprep.subr.mxu0 0.0
        %1783 = vmatpush2.msra.mxu0 0.0
        %1784 = vmatprep.subr.mxu0 0.0
        %1785 = vmatpush2.msra.mxu0 0.0
        %1786 = vmatprep.subr.mxu0 0.0
        %1787 = vmatpush2.msra.mxu0 0.0
        %1788 = vmatprep.subr.mxu0 0.0
        %1789 = vmatpush2.msra.mxu0 0.0
        %1790 = vmatprep.subr.mxu0 0.0
        %1791 = vmatpush2.msra.mxu0 0.0
        %1792 = vmatprep.subr.mxu0 0.0
        %1793 = vmatpush2.msra.mxu0 0.0
        %1794 = vmatprep.mubr.f32.mxu0 0.0
        %1795 = vmatmul.mubr.f32.gmra.mxu0 %v1728
        %v1796 = vpop.f32.mrf.mxu0
        %v1797 = vadd.f32 0.0, %v1796
        %v1798 = vpop.f32.mrf.mxu0
        %1799 = vdwg.mxu0
        %s1800 = scalar_lea.vmem %s12, 8
        %v1801 = vld [vmem:[%s1800] sm:$0xff]
        %v1803 = vsel %vm1225, %v1797, 0
        %1805 = vmatprep.subr.mxu0 0.0
        %1806 = vmatpush1.msra.mxu0 0.0
        %1807 = vmatprep.subr.mxu0 0.0
        %1808 = vmatpush1.msra.mxu0 0.0
        %1809 = vmatprep.subr.mxu0 0.0
        %1810 = vmatpush1.msra.mxu0 0.0
        %1811 = vmatprep.subr.mxu0 0.0
        %1812 = vmatpush1.msra.mxu0 0.0
        %1813 = vmatprep.subr.mxu0 0.0
        %1814 = vmatpush1.msra.mxu0 0.0
        %1815 = vmatprep.subr.mxu0 0.0
        %1816 = vmatpush1.msra.mxu0 0.0
        %1817 = vmatprep.subr.mxu0 0.0
        %1818 = vmatpush1.msra.mxu0 0.0
        %1819 = vmatprep.subr.mxu0 0.0
        %1820 = vmatpush1.msra.mxu0 0.0
        %1821 = vmatprep.subr.mxu0 0.0
        %1822 = vmatpush1.msra.mxu0 0.0
        %1823 = vmatprep.subr.mxu0 0.0
        %1824 = vmatpush1.msra.mxu0 0.0
        %1825 = vmatprep.subr.mxu0 0.0
        %1826 = vmatpush1.msra.mxu0 0.0
        %1827 = vmatprep.subr.mxu0 0.0
        %1828 = vmatpush1.msra.mxu0 0.0
        %1829 = vmatprep.subr.mxu0 0.0
        %1830 = vmatpush1.msra.mxu0 0.0
        %1831 = vmatprep.subr.mxu0 0.0
        %1832 = vmatpush1.msra.mxu0 0.0
        %1833 = vmatprep.subr.mxu0 0.0
        %1834 = vmatpush1.msra.mxu0 0.0
        %1835 = vmatprep.subr.mxu0 0.0
        %1836 = vmatpush1.msra.mxu0 %v1801
        %1837 = vmatprep.subr.mxu0 0.0
        %1838 = vmatpush2.msra.mxu0 0.0
        %1839 = vmatprep.subr.mxu0 0.0
        %1840 = vmatpush2.msra.mxu0 0.0
        %1841 = vmatprep.subr.mxu0 0.0
        %1842 = vmatpush2.msra.mxu0 0.0
        %1843 = vmatprep.subr.mxu0 0.0
        %1844 = vmatpush2.msra.mxu0 0.0
        %1845 = vmatprep.subr.mxu0 0.0
        %1846 = vmatpush2.msra.mxu0 0.0
        %1847 = vmatprep.subr.mxu0 0.0
        %1848 = vmatpush2.msra.mxu0 0.0
        %1849 = vmatprep.subr.mxu0 0.0
        %1850 = vmatpush2.msra.mxu0 0.0
        %1851 = vmatprep.subr.mxu0 0.0
        %1852 = vmatpush2.msra.mxu0 0.0
        %1853 = vmatprep.subr.mxu0 0.0
        %1854 = vmatpush2.msra.mxu0 0.0
        %1855 = vmatprep.subr.mxu0 0.0
        %1856 = vmatpush2.msra.mxu0 0.0
        %1857 = vmatprep.subr.mxu0 0.0
        %1858 = vmatpush2.msra.mxu0 0.0
        %1859 = vmatprep.subr.mxu0 0.0
        %1860 = vmatpush2.msra.mxu0 0.0
        %1861 = vmatprep.subr.mxu0 0.0
        %1862 = vmatpush2.msra.mxu0 0.0
        %1863 = vmatprep.subr.mxu0 0.0
        %1864 = vmatpush2.msra.mxu0 0.0
        %1865 = vmatprep.subr.mxu0 0.0
        %1866 = vmatpush2.msra.mxu0 0.0
        %1867 = vmatprep.subr.mxu0 0.0
        %1868 = vmatpush2.msra.mxu0 0.0
        %1869 = vmatprep.mubr.f32.mxu0 0.0
        %1870 = vmatmul.mubr.f32.gmra.mxu0 %v1803
        %v1871 = vpop.f32.mrf.mxu0
        %v1872 = vadd.f32 0.0, %v1871
        %v1873 = vpop.f32.mrf.mxu0
        %1874 = vdwg.mxu0
        %v1876 = vsel %vm1225, %v1385, 0
        %1878 = vmatprep.subr.mxu0 0.0
        %1879 = vmatpush1.msra.mxu0 0.0
        %1880 = vmatprep.subr.mxu0 0.0
        %1881 = vmatpush1.msra.mxu0 0.0
        %1882 = vmatprep.subr.mxu0 0.0
        %1883 = vmatpush1.msra.mxu0 0.0
        %1884 = vmatprep.subr.mxu0 0.0
        %1885 = vmatpush1.msra.mxu0 0.0
        %1886 = vmatprep.subr.mxu0 0.0
        %1887 = vmatpush1.msra.mxu0 0.0
        %1888 = vmatprep.subr.mxu0 0.0
        %1889 = vmatpush1.msra.mxu0 0.0
        %1890 = vmatprep.subr.mxu0 0.0
        %1891 = vmatpush1.msra.mxu0 0.0
        %1892 = vmatprep.subr.mxu0 0.0
        %1893 = vmatpush1.msra.mxu0 0.0
        %1894 = vmatprep.subr.mxu0 0.0
        %1895 = vmatpush1.msra.mxu0 0.0
        %1896 = vmatprep.subr.mxu0 0.0
        %1897 = vmatpush1.msra.mxu0 0.0
        %1898 = vmatprep.subr.mxu0 0.0
        %1899 = vmatpush1.msra.mxu0 0.0
        %1900 = vmatprep.subr.mxu0 0.0
        %1901 = vmatpush1.msra.mxu0 0.0
        %1902 = vmatprep.subr.mxu0 0.0
        %1903 = vmatpush1.msra.mxu0 0.0
        %1904 = vmatprep.subr.mxu0 0.0
        %1905 = vmatpush1.msra.mxu0 0.0
        %1906 = vmatprep.subr.mxu0 0.0
        %1907 = vmatpush1.msra.mxu0 0.0
        %1908 = vmatprep.subr.mxu0 0.0
        %1909 = vmatpush1.msra.mxu0 %v1388
        %1910 = vmatprep.subr.mxu0 0.0
        %1911 = vmatpush2.msra.mxu0 0.0
        %1912 = vmatprep.subr.mxu0 0.0
        %1913 = vmatpush2.msra.mxu0 0.0
        %1914 = vmatprep.subr.mxu0 0.0
        %1915 = vmatpush2.msra.mxu0 0.0
        %1916 = vmatprep.subr.mxu0 0.0
        %1917 = vmatpush2.msra.mxu0 0.0
        %1918 = vmatprep.subr.mxu0 0.0
        %1919 = vmatpush2.msra.mxu0 0.0
        %1920 = vmatprep.subr.mxu0 0.0
        %1921 = vmatpush2.msra.mxu0 0.0
        %1922 = vmatprep.subr.mxu0 0.0
        %1923 = vmatpush2.msra.mxu0 0.0
        %1924 = vmatprep.subr.mxu0 0.0
        %1925 = vmatpush2.msra.mxu0 0.0
        %1926 = vmatprep.subr.mxu0 0.0
        %1927 = vmatpush2.msra.mxu0 0.0
        %1928 = vmatprep.subr.mxu0 0.0
        %1929 = vmatpush2.msra.mxu0 0.0
        %1930 = vmatprep.subr.mxu0 0.0
        %1931 = vmatpush2.msra.mxu0 0.0
        %1932 = vmatprep.subr.mxu0 0.0
        %1933 = vmatpush2.msra.mxu0 0.0
        %1934 = vmatprep.subr.mxu0 0.0
        %1935 = vmatpush2.msra.mxu0 0.0
        %1936 = vmatprep.subr.mxu0 0.0
        %1937 = vmatpush2.msra.mxu0 0.0
        %1938 = vmatprep.subr.mxu0 0.0
        %1939 = vmatpush2.msra.mxu0 0.0
        %1940 = vmatprep.subr.mxu0 0.0
        %1941 = vmatpush2.msra.mxu0 0.0
        %1942 = vmatprep.mubr.f32.mxu0 0.0
        %1943 = vmatmul.mubr.f32.gmra.mxu0 %v1876
        %v1944 = vpop.f32.mrf.mxu0
        %v1945 = vadd.f32 %v1872, %v1944
        %v1946 = vpop.f32.mrf.mxu0
        %1947 = vdwg.mxu0
        %s1948 = scalar_lea.vmem %s6, 64
        %v1949 = vld [vmem:[%s1948] sm:$0xff]
        %v1950 = vld [vmem:[%s1948 + $0x8] sm:$0xff]
        %v1951 = vld [vmem:[%s1948 + $0x10] sm:$0xff]
        %v1952 = vld [vmem:[%s1948 + $0x18] sm:$0xff]
        %s1953 = scalar_lea.vmem %s7, 2
        %v1954 = vld [vmem:[%s1953] sm:$0x1]
        %v1956 = vlaneseq
        %v1957 = vshrl.u32 %v1956, 7
        %v1958 = vsub.s32 0, %v1957
        %v1959 = vrot.slane %v1954, %v1958
        %1961 = vmatprep.subr.mxu0 0.0
        %1962 = vmatpush1.msra.mxu0 0.0
        %1963 = vmatprep.subr.mxu0 0.0
        %1964 = vmatpush1.msra.mxu0 0.0
        %1965 = vmatprep.subr.mxu0 0.0
        %1966 = vmatpush1.msra.mxu0 0.0
        %1967 = vmatprep.subr.mxu0 0.0
        %1968 = vmatpush1.msra.mxu0 0.0
        %1969 = vmatprep.subr.mxu0 0.0
        %1970 = vmatpush1.msra.mxu0 0.0
        %1971 = vmatprep.subr.mxu0 0.0
        %1972 = vmatpush1.msra.mxu0 0.0
        %1973 = vmatprep.subr.mxu0 0.0
        %1974 = vmatpush1.msra.mxu0 0.0
        %1975 = vmatprep.subr.mxu0 0.0
        %1976 = vmatpush1.msra.mxu0 0.0
        %1977 = vmatprep.subr.mxu0 0.0
        %1978 = vmatpush1.msra.mxu0 0.0
        %1979 = vmatprep.subr.mxu0 0.0
        %1980 = vmatpush1.msra.mxu0 0.0
        %1981 = vmatprep.subr.mxu0 0.0
        %1982 = vmatpush1.msra.mxu0 0.0
        %1983 = vmatprep.subr.mxu0 0.0
        %1984 = vmatpush1.msra.mxu0 0.0
        %1985 = vmatprep.subr.mxu0 0.0
        %1986 = vmatpush1.msra.mxu0 %v1952
        %1987 = vmatprep.subr.mxu0 0.0
        %1988 = vmatpush1.msra.mxu0 %v1951
        %1989 = vmatprep.subr.mxu0 0.0
        %1990 = vmatpush1.msra.mxu0 %v1950
        %1991 = vmatprep.subr.mxu0 0.0
        %1992 = vmatpush1.msra.mxu0 %v1949
        %1993 = vmatprep.subr.mxu0 0.0
        %1994 = vmatpush2.msra.mxu0 0.0
        %1995 = vmatprep.subr.mxu0 0.0
        %1996 = vmatpush2.msra.mxu0 0.0
        %1997 = vmatprep.subr.mxu0 0.0
        %1998 = vmatpush2.msra.mxu0 0.0
        %1999 = vmatprep.subr.mxu0 0.0
        %2000 = vmatpush2.msra.mxu0 0.0
        %2001 = vmatprep.subr.mxu0 0.0
        %2002 = vmatpush2.msra.mxu0 0.0
        %2003 = vmatprep.subr.mxu0 0.0
        %2004 = vmatpush2.msra.mxu0 0.0
        %2005 = vmatprep.subr.mxu0 0.0
        %2006 = vmatpush2.msra.mxu0 0.0
        %2007 = vmatprep.subr.mxu0 0.0
        %2008 = vmatpush2.msra.mxu0 0.0
        %2009 = vmatprep.subr.mxu0 0.0
        %2010 = vmatpush2.msra.mxu0 0.0
        %2011 = vmatprep.subr.mxu0 0.0
        %2012 = vmatpush2.msra.mxu0 0.0
        %2013 = vmatprep.subr.mxu0 0.0
        %2014 = vmatpush2.msra.mxu0 0.0
        %2015 = vmatprep.subr.mxu0 0.0
        %2016 = vmatpush2.msra.mxu0 0.0
        %2017 = vmatprep.subr.mxu0 0.0
        %2018 = vmatpush2.msra.mxu0 0.0
        %2019 = vmatprep.subr.mxu0 0.0
        %2020 = vmatpush2.msra.mxu0 0.0
        %2021 = vmatprep.subr.mxu0 0.0
        %2022 = vmatpush2.msra.mxu0 0.0
        %2023 = vmatprep.subr.mxu0 0.0
        %2024 = vmatpush2.msra.mxu0 0.0
        %2025 = vmatprep.mubr.f32.mxu0 0.0
        %2026 = vmatmul.mubr.f32.gmra.mxu0 %v991
        %v2027 = vpop.f32.mrf.mxu0
        %v2028 = vadd.f32 %v1959, %v2027
        %v2029 = vpop.f32.mrf.mxu0
        %2030 = vdwg.mxu0
        %s2031 = scalar_lea.vmem %s8, 64
        %v2032 = vld [vmem:[%s2031] sm:$0xff]
        %v2033 = vld [vmem:[%s2031 + $0x8] sm:$0xff]
        %v2034 = vld [vmem:[%s2031 + $0x10] sm:$0xff]
        %v2035 = vld [vmem:[%s2031 + $0x18] sm:$0xff]
        %s2036 = scalar_lea.vmem %s9, 2
        %v2037 = vld [vmem:[%s2036] sm:$0x1]
        %v2039 = vlaneseq
        %v2040 = vshrl.u32 %v2039, 7
        %v2041 = vsub.s32 0, %v2040
        %v2042 = vrot.slane %v2037, %v2041
        %2044 = vmatprep.subr.mxu0 0.0
        %2045 = vmatpush1.msra.mxu0 0.0
        %2046 = vmatprep.subr.mxu0 0.0
        %2047 = vmatpush1.msra.mxu0 0.0
        %2048 = vmatprep.subr.mxu0 0.0
        %2049 = vmatpush1.msra.mxu0 0.0
        %2050 = vmatprep.subr.mxu0 0.0
        %2051 = vmatpush1.msra.mxu0 0.0
        %2052 = vmatprep.subr.mxu0 0.0
        %2053 = vmatpush1.msra.mxu0 0.0
        %2054 = vmatprep.subr.mxu0 0.0
        %2055 = vmatpush1.msra.mxu0 0.0
        %2056 = vmatprep.subr.mxu0 0.0
        %2057 = vmatpush1.msra.mxu0 0.0
        %2058 = vmatprep.subr.mxu0 0.0
        %2059 = vmatpush1.msra.mxu0 0.0
        %2060 = vmatprep.subr.mxu0 0.0
        %2061 = vmatpush1.msra.mxu0 0.0
        %2062 = vmatprep.subr.mxu0 0.0
        %2063 = vmatpush1.msra.mxu0 0.0
        %2064 = vmatprep.subr.mxu0 0.0
        %2065 = vmatpush1.msra.mxu0 0.0
        %2066 = vmatprep.subr.mxu0 0.0
        %2067 = vmatpush1.msra.mxu0 0.0
        %2068 = vmatprep.subr.mxu0 0.0
        %2069 = vmatpush1.msra.mxu0 %v2035
        %2070 = vmatprep.subr.mxu0 0.0
        %2071 = vmatpush1.msra.mxu0 %v2034
        %2072 = vmatprep.subr.mxu0 0.0
        %2073 = vmatpush1.msra.mxu0 %v2033
        %2074 = vmatprep.subr.mxu0 0.0
        %2075 = vmatpush1.msra.mxu0 %v2032
        %2076 = vmatprep.subr.mxu0 0.0
        %2077 = vmatpush2.msra.mxu0 0.0
        %2078 = vmatprep.subr.mxu0 0.0
        %2079 = vmatpush2.msra.mxu0 0.0
        %2080 = vmatprep.subr.mxu0 0.0
        %2081 = vmatpush2.msra.mxu0 0.0
        %2082 = vmatprep.subr.mxu0 0.0
        %2083 = vmatpush2.msra.mxu0 0.0
        %2084 = vmatprep.subr.mxu0 0.0
        %2085 = vmatpush2.msra.mxu0 0.0
        %2086 = vmatprep.subr.mxu0 0.0
        %2087 = vmatpush2.msra.mxu0 0.0
        %2088 = vmatprep.subr.mxu0 0.0
        %2089 = vmatpush2.msra.mxu0 0.0
        %2090 = vmatprep.subr.mxu0 0.0
        %2091 = vmatpush2.msra.mxu0 0.0
        %2092 = vmatprep.subr.mxu0 0.0
        %2093 = vmatpush2.msra.mxu0 0.0
        %2094 = vmatprep.subr.mxu0 0.0
        %2095 = vmatpush2.msra.mxu0 0.0
        %2096 = vmatprep.subr.mxu0 0.0
        %2097 = vmatpush2.msra.mxu0 0.0
        %2098 = vmatprep.subr.mxu0 0.0
        %2099 = vmatpush2.msra.mxu0 0.0
        %2100 = vmatprep.subr.mxu0 0.0
        %2101 = vmatpush2.msra.mxu0 0.0
        %2102 = vmatprep.subr.mxu0 0.0
        %2103 = vmatpush2.msra.mxu0 0.0
        %2104 = vmatprep.subr.mxu0 0.0
        %2105 = vmatpush2.msra.mxu0 0.0
        %2106 = vmatprep.subr.mxu0 0.0
        %2107 = vmatpush2.msra.mxu0 0.0
        %2108 = vmatprep.mubr.f32.mxu0 0.0
        %2109 = vmatmul.mubr.f32.gmra.mxu0 %v991
        %v2110 = vpop.f32.mrf.mxu0
        %v2111 = vadd.f32 %v2042, %v2110
        %v2112 = vpop.f32.mrf.mxu0
        %2113 = vdwg.mxu0
        %s2114 = scalar_lea.vmem %s10, 64
        %v2115 = vld [vmem:[%s2114] sm:$0xff]
        %v2116 = vld [vmem:[%s2114 + $0x8] sm:$0xff]
        %v2117 = vld [vmem:[%s2114 + $0x10] sm:$0xff]
        %v2118 = vld [vmem:[%s2114 + $0x18] sm:$0xff]
        %s2119 = scalar_lea.vmem %s11, 2
        %v2120 = vld [vmem:[%s2119] sm:$0x1]
        %v2122 = vlaneseq
        %v2123 = vshrl.u32 %v2122, 7
        %v2124 = vsub.s32 0, %v2123
        %v2125 = vrot.slane %v2120, %v2124
        %2127 = vmatprep.subr.mxu0 0.0
        %2128 = vmatpush1.msra.mxu0 0.0
        %2129 = vmatprep.subr.mxu0 0.0
        %2130 = vmatpush1.msra.mxu0 0.0
        %2131 = vmatprep.subr.mxu0 0.0
        %2132 = vmatpush1.msra.mxu0 0.0
        %2133 = vmatprep.subr.mxu0 0.0
        %2134 = vmatpush1.msra.mxu0 0.0
        %2135 = vmatprep.subr.mxu0 0.0
        %2136 = vmatpush1.msra.mxu0 0.0
        %2137 = vmatprep.subr.mxu0 0.0
        %2138 = vmatpush1.msra.mxu0 0.0
        %2139 = vmatprep.subr.mxu0 0.0
        %2140 = vmatpush1.msra.mxu0 0.0
        %2141 = vmatprep.subr.mxu0 0.0
        %2142 = vmatpush1.msra.mxu0 0.0
        %2143 = vmatprep.subr.mxu0 0.0
        %2144 = vmatpush1.msra.mxu0 0.0
        %2145 = vmatprep.subr.mxu0 0.0
        %2146 = vmatpush1.msra.mxu0 0.0
        %2147 = vmatprep.subr.mxu0 0.0
        %2148 = vmatpush1.msra.mxu0 0.0
        %2149 = vmatprep.subr.mxu0 0.0
        %2150 = vmatpush1.msra.mxu0 0.0
        %2151 = vmatprep.subr.mxu0 0.0
        %2152 = vmatpush1.msra.mxu0 %v2118
        %2153 = vmatprep.subr.mxu0 0.0
        %2154 = vmatpush1.msra.mxu0 %v2117
        %2155 = vmatprep.subr.mxu0 0.0
        %2156 = vmatpush1.msra.mxu0 %v2116
        %2157 = vmatprep.subr.mxu0 0.0
        %2158 = vmatpush1.msra.mxu0 %v2115
        %2159 = vmatprep.subr.mxu0 0.0
        %2160 = vmatpush2.msra.mxu0 0.0
        %2161 = vmatprep.subr.mxu0 0.0
        %2162 = vmatpush2.msra.mxu0 0.0
        %2163 = vmatprep.subr.mxu0 0.0
        %2164 = vmatpush2.msra.mxu0 0.0
        %2165 = vmatprep.subr.mxu0 0.0
        %2166 = vmatpush2.msra.mxu0 0.0
        %2167 = vmatprep.subr.mxu0 0.0
        %2168 = vmatpush2.msra.mxu0 0.0
        %2169 = vmatprep.subr.mxu0 0.0
        %2170 = vmatpush2.msra.mxu0 0.0
        %2171 = vmatprep.subr.mxu0 0.0
        %2172 = vmatpush2.msra.mxu0 0.0
        %2173 = vmatprep.subr.mxu0 0.0
        %2174 = vmatpush2.msra.mxu0 0.0
        %2175 = vmatprep.subr.mxu0 0.0
        %2176 = vmatpush2.msra.mxu0 0.0
        %2177 = vmatprep.subr.mxu0 0.0
        %2178 = vmatpush2.msra.mxu0 0.0
        %2179 = vmatprep.subr.mxu0 0.0
        %2180 = vmatpush2.msra.mxu0 0.0
        %2181 = vmatprep.subr.mxu0 0.0
        %2182 = vmatpush2.msra.mxu0 0.0
        %2183 = vmatprep.subr.mxu0 0.0
        %2184 = vmatpush2.msra.mxu0 0.0
        %2185 = vmatprep.subr.mxu0 0.0
        %2186 = vmatpush2.msra.mxu0 0.0
        %2187 = vmatprep.subr.mxu0 0.0
        %2188 = vmatpush2.msra.mxu0 0.0
        %2189 = vmatprep.subr.mxu0 0.0
        %2190 = vmatpush2.msra.mxu0 0.0
        %2191 = vmatprep.mubr.f32.mxu0 0.0
        %2192 = vmatmul.mubr.f32.gmra.mxu0 %v991
        %v2193 = vpop.f32.mrf.mxu0
        %v2194 = vadd.f32 %v2125, %v2193
        %v2195 = vpop.f32.mrf.mxu0
        %2196 = vdwg.mxu0
        %v2198 = vsel %vm1225, %v2028, 0
        %v2201 = vsel %vm1225, %v2111, 0
        %2203 = vmatprep.subr.mxu0 0.0
        %2204 = vmatpush1.xpose.msra.mxu0 0.0
        %2205 = vmatprep.subr.mxu0 0.0
        %2206 = vmatpush1.xpose.msra.mxu0 0.0
        %2207 = vmatprep.subr.mxu0 0.0
        %2208 = vmatpush1.xpose.msra.mxu0 0.0
        %2209 = vmatprep.subr.mxu0 0.0
        %2210 = vmatpush1.xpose.msra.mxu0 0.0
        %2211 = vmatprep.subr.mxu0 0.0
        %2212 = vmatpush1.xpose.msra.mxu0 0.0
        %2213 = vmatprep.subr.mxu0 0.0
        %2214 = vmatpush1.xpose.msra.mxu0 0.0
        %2215 = vmatprep.subr.mxu0 0.0
        %2216 = vmatpush1.xpose.msra.mxu0 0.0
        %2217 = vmatprep.subr.mxu0 0.0
        %2218 = vmatpush1.xpose.msra.mxu0 0.0
        %2219 = vmatprep.subr.mxu0 0.0
        %2220 = vmatpush1.xpose.msra.mxu0 0.0
        %2221 = vmatprep.subr.mxu0 0.0
        %2222 = vmatpush1.xpose.msra.mxu0 0.0
        %2223 = vmatprep.subr.mxu0 0.0
        %2224 = vmatpush1.xpose.msra.mxu0 0.0
        %2225 = vmatprep.subr.mxu0 0.0
        %2226 = vmatpush1.xpose.msra.mxu0 0.0
        %2227 = vmatprep.subr.mxu0 0.0
        %2228 = vmatpush1.xpose.msra.mxu0 0.0
        %2229 = vmatprep.subr.mxu0 0.0
        %2230 = vmatpush1.xpose.msra.mxu0 0.0
        %2231 = vmatprep.subr.mxu0 0.0
        %2232 = vmatpush1.xpose.msra.mxu0 0.0
        %2233 = vmatprep.subr.mxu0 0.0
        %2234 = vmatpush1.xpose.msra.mxu0 %v2201
        %2235 = vmatprep.subr.mxu0 0.0
        %2236 = vmatpush2.xpose.msra.mxu0 0.0
        %2237 = vmatprep.subr.mxu0 0.0
        %2238 = vmatpush2.xpose.msra.mxu0 0.0
        %2239 = vmatprep.subr.mxu0 0.0
        %2240 = vmatpush2.xpose.msra.mxu0 0.0
        %2241 = vmatprep.subr.mxu0 0.0
        %2242 = vmatpush2.xpose.msra.mxu0 0.0
        %2243 = vmatprep.subr.mxu0 0.0
        %2244 = vmatpush2.xpose.msra.mxu0 0.0
        %2245 = vmatprep.subr.mxu0 0.0
        %2246 = vmatpush2.xpose.msra.mxu0 0.0
        %2247 = vmatprep.subr.mxu0 0.0
        %2248 = vmatpush2.xpose.msra.mxu0 0.0
        %2249 = vmatprep.subr.mxu0 0.0
        %2250 = vmatpush2.xpose.msra.mxu0 0.0
        %2251 = vmatprep.subr.mxu0 0.0
        %2252 = vmatpush2.xpose.msra.mxu0 0.0
        %2253 = vmatprep.subr.mxu0 0.0
        %2254 = vmatpush2.xpose.msra.mxu0 0.0
        %2255 = vmatprep.subr.mxu0 0.0
        %2256 = vmatpush2.xpose.msra.mxu0 0.0
        %2257 = vmatprep.subr.mxu0 0.0
        %2258 = vmatpush2.xpose.msra.mxu0 0.0
        %2259 = vmatprep.subr.mxu0 0.0
        %2260 = vmatpush2.xpose.msra.mxu0 0.0
        %2261 = vmatprep.subr.mxu0 0.0
        %2262 = vmatpush2.xpose.msra.mxu0 0.0
        %2263 = vmatprep.subr.mxu0 0.0
        %2264 = vmatpush2.xpose.msra.mxu0 0.0
        %2265 = vmatprep.subr.mxu0 0.0
        %2266 = vmatpush2.xpose.msra.mxu0 0.0
        %2267 = vmatprep.mubr.f32.mxu0 0.0
        %2268 = vmatmul.mubr.f32.gmra.mxu0 %v2198
        %v2269 = vpop.f32.mrf.mxu0
        %v2270 = vadd.f32 0.0, %v2269
        %v2271 = vpop.f32.mrf.mxu0
        %2272 = vdwg.mxu0
        %v2273 = vmul.f32 %v2270, 0.35355338
        %v2274 = vsel %vm977, -1e+30, %v2273
        %v2275 = vsel %vm1225, %v2274, -inf
        %2276 = vmax.xlane.f32.xlu0 %v2275
        %v2277 = vpop.xlane.xlu0 %2276
        %v2278 = vsub.f32 %v2274, %v2277
        %v2279 = vmul.f32 %v2278, 1.442695
        %v2280 = vpow.pop %v2279
        %v2281 = vsel %vm1225, %v2280, 0.0
        %2282 = vadd.xlane.f32.xlu0 %v2281
        %v2283 = vpop.xlane.xlu0 %2282
        %v2284 = vrcp.pop %v2283
        %v2285 = vmul.f32 %v2280, %v2284
        %v2287 = vsel %vm1225, %v2285, 0
        %2289 = vmatprep.subr.mxu0 0.0
        %2290 = vmatpush1.msra.mxu0 0.0
        %2291 = vmatprep.subr.mxu0 0.0
        %2292 = vmatpush1.msra.mxu0 0.0
        %2293 = vmatprep.subr.mxu0 0.0
        %2294 = vmatpush1.msra.mxu0 0.0
        %2295 = vmatprep.subr.mxu0 0.0
        %2296 = vmatpush1.msra.mxu0 0.0
        %2297 = vmatprep.subr.mxu0 0.0
        %2298 = vmatpush1.msra.mxu0 0.0
        %2299 = vmatprep.subr.mxu0 0.0
        %2300 = vmatpush1.msra.mxu0 0.0
        %2301 = vmatprep.subr.mxu0 0.0
        %2302 = vmatpush1.msra.mxu0 0.0
        %2303 = vmatprep.subr.mxu0 0.0
        %2304 = vmatpush1.msra.mxu0 0.0
        %2305 = vmatprep.subr.mxu0 0.0
        %2306 = vmatpush1.msra.mxu0 0.0
        %2307 = vmatprep.subr.mxu0 0.0
        %2308 = vmatpush1.msra.mxu0 0.0
        %2309 = vmatprep.subr.mxu0 0.0
        %2310 = vmatpush1.msra.mxu0 0.0
        %2311 = vmatprep.subr.mxu0 0.0
        %2312 = vmatpush1.msra.mxu0 0.0
        %2313 = vmatprep.subr.mxu0 0.0
        %2314 = vmatpush1.msra.mxu0 0.0
        %2315 = vmatprep.subr.mxu0 0.0
        %2316 = vmatpush1.msra.mxu0 0.0
        %2317 = vmatprep.subr.mxu0 0.0
        %2318 = vmatpush1.msra.mxu0 0.0
        %2319 = vmatprep.subr.mxu0 0.0
        %2320 = vmatpush1.msra.mxu0 %v2194
        %2321 = vmatprep.subr.mxu0 0.0
        %2322 = vmatpush2.msra.mxu0 0.0
        %2323 = vmatprep.subr.mxu0 0.0
        %2324 = vmatpush2.msra.mxu0 0.0
        %2325 = vmatprep.subr.mxu0 0.0
        %2326 = vmatpush2.msra.mxu0 0.0
        %2327 = vmatprep.subr.mxu0 0.0
        %2328 = vmatpush2.msra.mxu0 0.0
        %2329 = vmatprep.subr.mxu0 0.0
        %2330 = vmatpush2.msra.mxu0 0.0
        %2331 = vmatprep.subr.mxu0 0.0
        %2332 = vmatpush2.msra.mxu0 0.0
        %2333 = vmatprep.subr.mxu0 0.0
        %2334 = vmatpush2.msra.mxu0 0.0
        %2335 = vmatprep.subr.mxu0 0.0
        %2336 = vmatpush2.msra.mxu0 0.0
        %2337 = vmatprep.subr.mxu0 0.0
        %2338 = vmatpush2.msra.mxu0 0.0
        %2339 = vmatprep.subr.mxu0 0.0
        %2340 = vmatpush2.msra.mxu0 0.0
        %2341 = vmatprep.subr.mxu0 0.0
        %2342 = vmatpush2.msra.mxu0 0.0
        %2343 = vmatprep.subr.mxu0 0.0
        %2344 = vmatpush2.msra.mxu0 0.0
        %2345 = vmatprep.subr.mxu0 0.0
        %2346 = vmatpush2.msra.mxu0 0.0
        %2347 = vmatprep.subr.mxu0 0.0
        %2348 = vmatpush2.msra.mxu0 0.0
        %2349 = vmatprep.subr.mxu0 0.0
        %2350 = vmatpush2.msra.mxu0 0.0
        %2351 = vmatprep.subr.mxu0 0.0
        %2352 = vmatpush2.msra.mxu0 0.0
        %2353 = vmatprep.mubr.f32.mxu0 0.0
        %2354 = vmatmul.mubr.f32.gmra.mxu0 %v2287
        %v2355 = vpop.f32.mrf.mxu0
        %v2356 = vadd.f32 0.0, %v2355
        %v2357 = vpop.f32.mrf.mxu0
        %2358 = vdwg.mxu0
        %s2359 = scalar_lea.vmem %s12, 16
        %v2360 = vld [vmem:[%s2359] sm:$0xff]
        %v2362 = vsel %vm1225, %v2356, 0
        %2364 = vmatprep.subr.mxu0 0.0
        %2365 = vmatpush1.msra.mxu0 0.0
        %2366 = vmatprep.subr.mxu0 0.0
        %2367 = vmatpush1.msra.mxu0 0.0
        %2368 = vmatprep.subr.mxu0 0.0
        %2369 = vmatpush1.msra.mxu0 0.0
        %2370 = vmatprep.subr.mxu0 0.0
        %2371 = vmatpush1.msra.mxu0 0.0
        %2372 = vmatprep.subr.mxu0 0.0
        %2373 = vmatpush1.msra.mxu0 0.0
        %2374 = vmatprep.subr.mxu0 0.0
        %2375 = vmatpush1.msra.mxu0 0.0
        %2376 = vmatprep.subr.mxu0 0.0
        %2377 = vmatpush1.msra.mxu0 0.0
        %2378 = vmatprep.subr.mxu0 0.0
        %2379 = vmatpush1.msra.mxu0 0.0
        %2380 = vmatprep.subr.mxu0 0.0
        %2381 = vmatpush1.msra.mxu0 0.0
        %2382 = vmatprep.subr.mxu0 0.0
        %2383 = vmatpush1.msra.mxu0 0.0
        %2384 = vmatprep.subr.mxu0 0.0
        %2385 = vmatpush1.msra.mxu0 0.0
        %2386 = vmatprep.subr.mxu0 0.0
        %2387 = vmatpush1.msra.mxu0 0.0
        %2388 = vmatprep.subr.mxu0 0.0
        %2389 = vmatpush1.msra.mxu0 0.0
        %2390 = vmatprep.subr.mxu0 0.0
        %2391 = vmatpush1.msra.mxu0 0.0
        %2392 = vmatprep.subr.mxu0 0.0
        %2393 = vmatpush1.msra.mxu0 0.0
        %2394 = vmatprep.subr.mxu0 0.0
        %2395 = vmatpush1.msra.mxu0 %v2360
        %2396 = vmatprep.subr.mxu0 0.0
        %2397 = vmatpush2.msra.mxu0 0.0
        %2398 = vmatprep.subr.mxu0 0.0
        %2399 = vmatpush2.msra.mxu0 0.0
        %2400 = vmatprep.subr.mxu0 0.0
        %2401 = vmatpush2.msra.mxu0 0.0
        %2402 = vmatprep.subr.mxu0 0.0
        %2403 = vmatpush2.msra.mxu0 0.0
        %2404 = vmatprep.subr.mxu0 0.0
        %2405 = vmatpush2.msra.mxu0 0.0
        %2406 = vmatprep.subr.mxu0 0.0
        %2407 = vmatpush2.msra.mxu0 0.0
        %2408 = vmatprep.subr.mxu0 0.0
        %2409 = vmatpush2.msra.mxu0 0.0
        %2410 = vmatprep.subr.mxu0 0.0
        %2411 = vmatpush2.msra.mxu0 0.0
        %2412 = vmatprep.subr.mxu0 0.0
        %2413 = vmatpush2.msra.mxu0 0.0
        %2414 = vmatprep.subr.mxu0 0.0
        %2415 = vmatpush2.msra.mxu0 0.0
        %2416 = vmatprep.subr.mxu0 0.0
        %2417 = vmatpush2.msra.mxu0 0.0
        %2418 = vmatprep.subr.mxu0 0.0
        %2419 = vmatpush2.msra.mxu0 0.0
        %2420 = vmatprep.subr.mxu0 0.0
        %2421 = vmatpush2.msra.mxu0 0.0
        %2422 = vmatprep.subr.mxu0 0.0
        %2423 = vmatpush2.msra.mxu0 0.0
        %2424 = vmatprep.subr.mxu0 0.0
        %2425 = vmatpush2.msra.mxu0 0.0
        %2426 = vmatprep.subr.mxu0 0.0
        %2427 = vmatpush2.msra.mxu0 0.0
        %2428 = vmatprep.mubr.f32.mxu0 0.0
        %2429 = vmatmul.mubr.f32.gmra.mxu0 %v2362
        %v2430 = vpop.f32.mrf.mxu0
        %v2431 = vadd.f32 0.0, %v2430
        %v2432 = vpop.f32.mrf.mxu0
        %2433 = vdwg.mxu0
        %v2434 = vadd.f32 %v1945, %v2431
        %s2435 = scalar_lea.vmem %s6, 96
        %v2436 = vld [vmem:[%s2435] sm:$0xff]
        %v2437 = vld [vmem:[%s2435 + $0x8] sm:$0xff]
        %v2438 = vld [vmem:[%s2435 + $0x10] sm:$0xff]
        %v2439 = vld [vmem:[%s2435 + $0x18] sm:$0xff]
        %s2440 = scalar_lea.vmem %s7, 3
        %v2441 = vld [vmem:[%s2440] sm:$0x1]
        %v2443 = vlaneseq
        %v2444 = vshrl.u32 %v2443, 7
        %v2445 = vsub.s32 0, %v2444
        %v2446 = vrot.slane %v2441, %v2445
        %2448 = vmatprep.subr.mxu0 0.0
        %2449 = vmatpush1.msra.mxu0 0.0
        %2450 = vmatprep.subr.mxu0 0.0
        %2451 = vmatpush1.msra.mxu0 0.0
        %2452 = vmatprep.subr.mxu0 0.0
        %2453 = vmatpush1.msra.mxu0 0.0
        %2454 = vmatprep.subr.mxu0 0.0
        %2455 = vmatpush1.msra.mxu0 0.0
        %2456 = vmatprep.subr.mxu0 0.0
        %2457 = vmatpush1.msra.mxu0 0.0
        %2458 = vmatprep.subr.mxu0 0.0
        %2459 = vmatpush1.msra.mxu0 0.0
        %2460 = vmatprep.subr.mxu0 0.0
        %2461 = vmatpush1.msra.mxu0 0.0
        %2462 = vmatprep.subr.mxu0 0.0
        %2463 = vmatpush1.msra.mxu0 0.0
        %2464 = vmatprep.subr.mxu0 0.0
        %2465 = vmatpush1.msra.mxu0 0.0
        %2466 = vmatprep.subr.mxu0 0.0
        %2467 = vmatpush1.msra.mxu0 0.0
        %2468 = vmatprep.subr.mxu0 0.0
        %2469 = vmatpush1.msra.mxu0 0.0
        %2470 = vmatprep.subr.mxu0 0.0
        %2471 = vmatpush1.msra.mxu0 0.0
        %2472 = vmatprep.subr.mxu0 0.0
        %2473 = vmatpush1.msra.mxu0 %v2439
        %2474 = vmatprep.subr.mxu0 0.0
        %2475 = vmatpush1.msra.mxu0 %v2438
        %2476 = vmatprep.subr.mxu0 0.0
        %2477 = vmatpush1.msra.mxu0 %v2437
        %2478 = vmatprep.subr.mxu0 0.0
        %2479 = vmatpush1.msra.mxu0 %v2436
        %2480 = vmatprep.subr.mxu0 0.0
        %2481 = vmatpush2.msra.mxu0 0.0
        %2482 = vmatprep.subr.mxu0 0.0
        %2483 = vmatpush2.msra.mxu0 0.0
        %2484 = vmatprep.subr.mxu0 0.0
        %2485 = vmatpush2.msra.mxu0 0.0
        %2486 = vmatprep.subr.mxu0 0.0
        %2487 = vmatpush2.msra.mxu0 0.0
        %2488 = vmatprep.subr.mxu0 0.0
        %2489 = vmatpush2.msra.mxu0 0.0
        %2490 = vmatprep.subr.mxu0 0.0
        %2491 = vmatpush2.msra.mxu0 0.0
        %2492 = vmatprep.subr.mxu0 0.0
        %2493 = vmatpush2.msra.mxu0 0.0
        %2494 = vmatprep.subr.mxu0 0.0
        %2495 = vmatpush2.msra.mxu0 0.0
        %2496 = vmatprep.subr.mxu0 0.0
        %2497 = vmatpush2.msra.mxu0 0.0
        %2498 = vmatprep.subr.mxu0 0.0
        %2499 = vmatpush2.msra.mxu0 0.0
        %2500 = vmatprep.subr.mxu0 0.0
        %2501 = vmatpush2.msra.mxu0 0.0
        %2502 = vmatprep.subr.mxu0 0.0
        %2503 = vmatpush2.msra.mxu0 0.0
        %2504 = vmatprep.subr.mxu0 0.0
        %2505 = vmatpush2.msra.mxu0 0.0
        %2506 = vmatprep.subr.mxu0 0.0
        %2507 = vmatpush2.msra.mxu0 0.0
        %2508 = vmatprep.subr.mxu0 0.0
        %2509 = vmatpush2.msra.mxu0 0.0
        %2510 = vmatprep.subr.mxu0 0.0
        %2511 = vmatpush2.msra.mxu0 0.0
        %2512 = vmatprep.mubr.f32.mxu0 0.0
        %2513 = vmatmul.mubr.f32.gmra.mxu0 %v991
        %v2514 = vpop.f32.mrf.mxu0
        %v2515 = vadd.f32 %v2446, %v2514
        %v2516 = vpop.f32.mrf.mxu0
        %2517 = vdwg.mxu0
        %s2518 = scalar_lea.vmem %s8, 96
        %v2519 = vld [vmem:[%s2518] sm:$0xff]
        %v2520 = vld [vmem:[%s2518 + $0x8] sm:$0xff]
        %v2521 = vld [vmem:[%s2518 + $0x10] sm:$0xff]
        %v2522 = vld [vmem:[%s2518 + $0x18] sm:$0xff]
        %s2523 = scalar_lea.vmem %s9, 3
        %v2524 = vld [vmem:[%s2523] sm:$0x1]
        %v2526 = vlaneseq
        %v2527 = vshrl.u32 %v2526, 7
        %v2528 = vsub.s32 0, %v2527
        %v2529 = vrot.slane %v2524, %v2528
        %2531 = vmatprep.subr.mxu0 0.0
        %2532 = vmatpush1.msra.mxu0 0.0
        %2533 = vmatprep.subr.mxu0 0.0
        %2534 = vmatpush1.msra.mxu0 0.0
        %2535 = vmatprep.subr.mxu0 0.0
        %2536 = vmatpush1.msra.mxu0 0.0
        %2537 = vmatprep.subr.mxu0 0.0
        %2538 = vmatpush1.msra.mxu0 0.0
        %2539 = vmatprep.subr.mxu0 0.0
        %2540 = vmatpush1.msra.mxu0 0.0
        %2541 = vmatprep.subr.mxu0 0.0
        %2542 = vmatpush1.msra.mxu0 0.0
        %2543 = vmatprep.subr.mxu0 0.0
        %2544 = vmatpush1.msra.mxu0 0.0
        %2545 = vmatprep.subr.mxu0 0.0
        %2546 = vmatpush1.msra.mxu0 0.0
        %2547 = vmatprep.subr.mxu0 0.0
        %2548 = vmatpush1.msra.mxu0 0.0
        %2549 = vmatprep.subr.mxu0 0.0
        %2550 = vmatpush1.msra.mxu0 0.0
        %2551 = vmatprep.subr.mxu0 0.0
        %2552 = vmatpush1.msra.mxu0 0.0
        %2553 = vmatprep.subr.mxu0 0.0
        %2554 = vmatpush1.msra.mxu0 0.0
        %2555 = vmatprep.subr.mxu0 0.0
        %2556 = vmatpush1.msra.mxu0 %v2522
        %2557 = vmatprep.subr.mxu0 0.0
        %2558 = vmatpush1.msra.mxu0 %v2521
        %2559 = vmatprep.subr.mxu0 0.0
        %2560 = vmatpush1.msra.mxu0 %v2520
        %2561 = vmatprep.subr.mxu0 0.0
        %2562 = vmatpush1.msra.mxu0 %v2519
        %2563 = vmatprep.subr.mxu0 0.0
        %2564 = vmatpush2.msra.mxu0 0.0
        %2565 = vmatprep.subr.mxu0 0.0
        %2566 = vmatpush2.msra.mxu0 0.0
        %2567 = vmatprep.subr.mxu0 0.0
        %2568 = vmatpush2.msra.mxu0 0.0
        %2569 = vmatprep.subr.mxu0 0.0
        %2570 = vmatpush2.msra.mxu0 0.0
        %2571 = vmatprep.subr.mxu0 0.0
        %2572 = vmatpush2.msra.mxu0 0.0
        %2573 = vmatprep.subr.mxu0 0.0
        %2574 = vmatpush2.msra.mxu0 0.0
        %2575 = vmatprep.subr.mxu0 0.0
        %2576 = vmatpush2.msra.mxu0 0.0
        %2577 = vmatprep.subr.mxu0 0.0
        %2578 = vmatpush2.msra.mxu0 0.0
        %2579 = vmatprep.subr.mxu0 0.0
        %2580 = vmatpush2.msra.mxu0 0.0
        %2581 = vmatprep.subr.mxu0 0.0
        %2582 = vmatpush2.msra.mxu0 0.0
        %2583 = vmatprep.subr.mxu0 0.0
        %2584 = vmatpush2.msra.mxu0 0.0
        %2585 = vmatprep.subr.mxu0 0.0
        %2586 = vmatpush2.msra.mxu0 0.0
        %2587 = vmatprep.subr.mxu0 0.0
        %2588 = vmatpush2.msra.mxu0 0.0
        %2589 = vmatprep.subr.mxu0 0.0
        %2590 = vmatpush2.msra.mxu0 0.0
        %2591 = vmatprep.subr.mxu0 0.0
        %2592 = vmatpush2.msra.mxu0 0.0
        %2593 = vmatprep.subr.mxu0 0.0
        %2594 = vmatpush2.msra.mxu0 0.0
        %2595 = vmatprep.mubr.f32.mxu0 0.0
        %2596 = vmatmul.mubr.f32.gmra.mxu0 %v991
        %v2597 = vpop.f32.mrf.mxu0
        %v2598 = vadd.f32 %v2529, %v2597
        %v2599 = vpop.f32.mrf.mxu0
        %2600 = vdwg.mxu0
        %s2601 = scalar_lea.vmem %s10, 96
        %v2602 = vld [vmem:[%s2601] sm:$0xff]
        %v2603 = vld [vmem:[%s2601 + $0x8] sm:$0xff]
        %v2604 = vld [vmem:[%s2601 + $0x10] sm:$0xff]
        %v2605 = vld [vmem:[%s2601 + $0x18] sm:$0xff]
        %s2606 = scalar_lea.vmem %s11, 3
        %v2607 = vld [vmem:[%s2606] sm:$0x1]
        %v2609 = vlaneseq
        %v2610 = vshrl.u32 %v2609, 7
        %v2611 = vsub.s32 0, %v2610
        %v2612 = vrot.slane %v2607, %v2611
        %2614 = vmatprep.subr.mxu0 0.0
        %2615 = vmatpush1.msra.mxu0 0.0
        %2616 = vmatprep.subr.mxu0 0.0
        %2617 = vmatpush1.msra.mxu0 0.0
        %2618 = vmatprep.subr.mxu0 0.0
        %2619 = vmatpush1.msra.mxu0 0.0
        %2620 = vmatprep.subr.mxu0 0.0
        %2621 = vmatpush1.msra.mxu0 0.0
        %2622 = vmatprep.subr.mxu0 0.0
        %2623 = vmatpush1.msra.mxu0 0.0
        %2624 = vmatprep.subr.mxu0 0.0
        %2625 = vmatpush1.msra.mxu0 0.0
        %2626 = vmatprep.subr.mxu0 0.0
        %2627 = vmatpush1.msra.mxu0 0.0
        %2628 = vmatprep.subr.mxu0 0.0
        %2629 = vmatpush1.msra.mxu0 0.0
        %2630 = vmatprep.subr.mxu0 0.0
        %2631 = vmatpush1.msra.mxu0 0.0
        %2632 = vmatprep.subr.mxu0 0.0
        %2633 = vmatpush1.msra.mxu0 0.0
        %2634 = vmatprep.subr.mxu0 0.0
        %2635 = vmatpush1.msra.mxu0 0.0
        %2636 = vmatprep.subr.mxu0 0.0
        %2637 = vmatpush1.msra.mxu0 0.0
        %2638 = vmatprep.subr.mxu0 0.0
        %2639 = vmatpush1.msra.mxu0 %v2605
        %2640 = vmatprep.subr.mxu0 0.0
        %2641 = vmatpush1.msra.mxu0 %v2604
        %2642 = vmatprep.subr.mxu0 0.0
        %2643 = vmatpush1.msra.mxu0 %v2603
        %2644 = vmatprep.subr.mxu0 0.0
        %2645 = vmatpush1.msra.mxu0 %v2602
        %2646 = vmatprep.subr.mxu0 0.0
        %2647 = vmatpush2.msra.mxu0 0.0
        %2648 = vmatprep.subr.mxu0 0.0
        %2649 = vmatpush2.msra.mxu0 0.0
        %2650 = vmatprep.subr.mxu0 0.0
        %2651 = vmatpush2.msra.mxu0 0.0
        %2652 = vmatprep.subr.mxu0 0.0
        %2653 = vmatpush2.msra.mxu0 0.0
        %2654 = vmatprep.subr.mxu0 0.0
        %2655 = vmatpush2.msra.mxu0 0.0
        %2656 = vmatprep.subr.mxu0 0.0
        %2657 = vmatpush2.msra.mxu0 0.0
        %2658 = vmatprep.subr.mxu0 0.0
        %2659 = vmatpush2.msra.mxu0 0.0
        %2660 = vmatprep.subr.mxu0 0.0
        %2661 = vmatpush2.msra.mxu0 0.0
        %2662 = vmatprep.subr.mxu0 0.0
        %2663 = vmatpush2.msra.mxu0 0.0
        %2664 = vmatprep.subr.mxu0 0.0
        %2665 = vmatpush2.msra.mxu0 0.0
        %2666 = vmatprep.subr.mxu0 0.0
        %2667 = vmatpush2.msra.mxu0 0.0
        %2668 = vmatprep.subr.mxu0 0.0
        %2669 = vmatpush2.msra.mxu0 0.0
        %2670 = vmatprep.subr.mxu0 0.0
        %2671 = vmatpush2.msra.mxu0 0.0
        %2672 = vmatprep.subr.mxu0 0.0
        %2673 = vmatpush2.msra.mxu0 0.0
        %2674 = vmatprep.subr.mxu0 0.0
        %2675 = vmatpush2.msra.mxu0 0.0
        %2676 = vmatprep.subr.mxu0 0.0
        %2677 = vmatpush2.msra.mxu0 0.0
        %2678 = vmatprep.mubr.f32.mxu0 0.0
        %2679 = vmatmul.mubr.f32.gmra.mxu0 %v991
        %v2680 = vpop.f32.mrf.mxu0
        %v2681 = vadd.f32 %v2612, %v2680
        %v2682 = vpop.f32.mrf.mxu0
        %2683 = vdwg.mxu0
        %v2685 = vsel %vm1225, %v2515, 0
        %v2688 = vsel %vm1225, %v2598, 0
        %2690 = vmatprep.subr.mxu0 0.0
        %2691 = vmatpush1.xpose.msra.mxu0 0.0
        %2692 = vmatprep.subr.mxu0 0.0
        %2693 = vmatpush1.xpose.msra.mxu0 0.0
        %2694 = vmatprep.subr.mxu0 0.0
        %2695 = vmatpush1.xpose.msra.mxu0 0.0
        %2696 = vmatprep.subr.mxu0 0.0
        %2697 = vmatpush1.xpose.msra.mxu0 0.0
        %2698 = vmatprep.subr.mxu0 0.0
        %2699 = vmatpush1.xpose.msra.mxu0 0.0
        %2700 = vmatprep.subr.mxu0 0.0
        %2701 = vmatpush1.xpose.msra.mxu0 0.0
        %2702 = vmatprep.subr.mxu0 0.0
        %2703 = vmatpush1.xpose.msra.mxu0 0.0
        %2704 = vmatprep.subr.mxu0 0.0
        %2705 = vmatpush1.xpose.msra.mxu0 0.0
        %2706 = vmatprep.subr.mxu0 0.0
        %2707 = vmatpush1.xpose.msra.mxu0 0.0
        %2708 = vmatprep.subr.mxu0 0.0
        %2709 = vmatpush1.xpose.msra.mxu0 0.0
        %2710 = vmatprep.subr.mxu0 0.0
        %2711 = vmatpush1.xpose.msra.mxu0 0.0
        %2712 = vmatprep.subr.mxu0 0.0
        %2713 = vmatpush1.xpose.msra.mxu0 0.0
        %2714 = vmatprep.subr.mxu0 0.0
        %2715 = vmatpush1.xpose.msra.mxu0 0.0
        %2716 = vmatprep.subr.mxu0 0.0
        %2717 = vmatpush1.xpose.msra.mxu0 0.0
        %2718 = vmatprep.subr.mxu0 0.0
        %2719 = vmatpush1.xpose.msra.mxu0 0.0
        %2720 = vmatprep.subr.mxu0 0.0
        %2721 = vmatpush1.xpose.msra.mxu0 %v2688
        %2722 = vmatprep.subr.mxu0 0.0
        %2723 = vmatpush2.xpose.msra.mxu0 0.0
        %2724 = vmatprep.subr.mxu0 0.0
        %2725 = vmatpush2.xpose.msra.mxu0 0.0
        %2726 = vmatprep.subr.mxu0 0.0
        %2727 = vmatpush2.xpose.msra.mxu0 0.0
        %2728 = vmatprep.subr.mxu0 0.0
        %2729 = vmatpush2.xpose.msra.mxu0 0.0
        %2730 = vmatprep.subr.mxu0 0.0
        %2731 = vmatpush2.xpose.msra.mxu0 0.0
        %2732 = vmatprep.subr.mxu0 0.0
        %2733 = vmatpush2.xpose.msra.mxu0 0.0
        %2734 = vmatprep.subr.mxu0 0.0
        %2735 = vmatpush2.xpose.msra.mxu0 0.0
        %2736 = vmatprep.subr.mxu0 0.0
        %2737 = vmatpush2.xpose.msra.mxu0 0.0
        %2738 = vmatprep.subr.mxu0 0.0
        %2739 = vmatpush2.xpose.msra.mxu0 0.0
        %2740 = vmatprep.subr.mxu0 0.0
        %2741 = vmatpush2.xpose.msra.mxu0 0.0
        %2742 = vmatprep.subr.mxu0 0.0
        %2743 = vmatpush2.xpose.msra.mxu0 0.0
        %2744 = vmatprep.subr.mxu0 0.0
        %2745 = vmatpush2.xpose.msra.mxu0 0.0
        %2746 = vmatprep.subr.mxu0 0.0
        %2747 = vmatpush2.xpose.msra.mxu0 0.0
        %2748 = vmatprep.subr.mxu0 0.0
        %2749 = vmatpush2.xpose.msra.mxu0 0.0
        %2750 = vmatprep.subr.mxu0 0.0
        %2751 = vmatpush2.xpose.msra.mxu0 0.0
        %2752 = vmatprep.subr.mxu0 0.0
        %2753 = vmatpush2.xpose.msra.mxu0 0.0
        %2754 = vmatprep.mubr.f32.mxu0 0.0
        %2755 = vmatmul.mubr.f32.gmra.mxu0 %v2685
        %v2756 = vpop.f32.mrf.mxu0
        %v2757 = vadd.f32 0.0, %v2756
        %v2758 = vpop.f32.mrf.mxu0
        %2759 = vdwg.mxu0
        %v2760 = vmul.f32 %v2757, 0.35355338
        %v2761 = vsel %vm977, -1e+30, %v2760
        %v2762 = vsel %vm1225, %v2761, -inf
        %2763 = vmax.xlane.f32.xlu0 %v2762
        %v2764 = vpop.xlane.xlu0 %2763
        %v2765 = vsub.f32 %v2761, %v2764
        %v2766 = vmul.f32 %v2765, 1.442695
        %v2767 = vpow.pop %v2766
        %v2768 = vsel %vm1225, %v2767, 0.0
        %2769 = vadd.xlane.f32.xlu0 %v2768
        %v2770 = vpop.xlane.xlu0 %2769
        %v2771 = vrcp.pop %v2770
        %v2772 = vmul.f32 %v2767, %v2771
        %v2774 = vsel %vm1225, %v2772, 0
        %2776 = vmatprep.subr.mxu0 0.0
        %2777 = vmatpush1.msra.mxu0 0.0
        %2778 = vmatprep.subr.mxu0 0.0
        %2779 = vmatpush1.msra.mxu0 0.0
        %2780 = vmatprep.subr.mxu0 0.0
        %2781 = vmatpush1.msra.mxu0 0.0
        %2782 = vmatprep.subr.mxu0 0.0
        %2783 = vmatpush1.msra.mxu0 0.0
        %2784 = vmatprep.subr.mxu0 0.0
        %2785 = vmatpush1.msra.mxu0 0.0
        %2786 = vmatprep.subr.mxu0 0.0
        %2787 = vmatpush1.msra.mxu0 0.0
        %2788 = vmatprep.subr.mxu0 0.0
        %2789 = vmatpush1.msra.mxu0 0.0
        %2790 = vmatprep.subr.mxu0 0.0
        %2791 = vmatpush1.msra.mxu0 0.0
        %2792 = vmatprep.subr.mxu0 0.0
        %2793 = vmatpush1.msra.mxu0 0.0
        %2794 = vmatprep.subr.mxu0 0.0
        %2795 = vmatpush1.msra.mxu0 0.0
        %2796 = vmatprep.subr.mxu0 0.0
        %2797 = vmatpush1.msra.mxu0 0.0
        %2798 = vmatprep.subr.mxu0 0.0
        %2799 = vmatpush1.msra.mxu0 0.0
        %2800 = vmatprep.subr.mxu0 0.0
        %2801 = vmatpush1.msra.mxu0 0.0
        %2802 = vmatprep.subr.mxu0 0.0
        %2803 = vmatpush1.msra.mxu0 0.0
        %2804 = vmatprep.subr.mxu0 0.0
        %2805 = vmatpush1.msra.mxu0 0.0
        %2806 = vmatprep.subr.mxu0 0.0
        %2807 = vmatpush1.msra.mxu0 %v2681
        %2808 = vmatprep.subr.mxu0 0.0
        %2809 = vmatpush2.msra.mxu0 0.0
        %2810 = vmatprep.subr.mxu0 0.0
        %2811 = vmatpush2.msra.mxu0 0.0
        %2812 = vmatprep.subr.mxu0 0.0
        %2813 = vmatpush2.msra.mxu0 0.0
        %2814 = vmatprep.subr.mxu0 0.0
        %2815 = vmatpush2.msra.mxu0 0.0
        %2816 = vmatprep.subr.mxu0 0.0
        %2817 = vmatpush2.msra.mxu0 0.0
        %2818 = vmatprep.subr.mxu0 0.0
        %2819 = vmatpush2.msra.mxu0 0.0
        %2820 = vmatprep.subr.mxu0 0.0
        %2821 = vmatpush2.msra.mxu0 0.0
        %2822 = vmatprep.subr.mxu0 0.0
        %2823 = vmatpush2.msra.mxu0 0.0
        %2824 = vmatprep.subr.mxu0 0.0
        %2825 = vmatpush2.msra.mxu0 0.0
        %2826 = vmatprep.subr.mxu0 0.0
        %2827 = vmatpush2.msra.mxu0 0.0
        %2828 = vmatprep.subr.mxu0 0.0
        %2829 = vmatpush2.msra.mxu0 0.0
        %2830 = vmatprep.subr.mxu0 0.0
        %2831 = vmatpush2.msra.mxu0 0.0
        %2832 = vmatprep.subr.mxu0 0.0
        %2833 = vmatpush2.msra.mxu0 0.0
        %2834 = vmatprep.subr.mxu0 0.0
        %2835 = vmatpush2.msra.mxu0 0.0
        %2836 = vmatprep.subr.mxu0 0.0
        %2837 = vmatpush2.msra.mxu0 0.0
        %2838 = vmatprep.subr.mxu0 0.0
        %2839 = vmatpush2.msra.mxu0 0.0
        %2840 = vmatprep.mubr.f32.mxu0 0.0
        %2841 = vmatmul.mubr.f32.gmra.mxu0 %v2774
        %v2842 = vpop.f32.mrf.mxu0
        %v2843 = vadd.f32 0.0, %v2842
        %v2844 = vpop.f32.mrf.mxu0
        %2845 = vdwg.mxu0
        %s2846 = scalar_lea.vmem %s12, 24
        %v2847 = vld [vmem:[%s2846] sm:$0xff]
        %v2849 = vsel %vm1225, %v2843, 0
        %2851 = vmatprep.subr.mxu0 0.0
        %2852 = vmatpush1.msra.mxu0 0.0
        %2853 = vmatprep.subr.mxu0 0.0
        %2854 = vmatpush1.msra.mxu0 0.0
        %2855 = vmatprep.subr.mxu0 0.0
        %2856 = vmatpush1.msra.mxu0 0.0
        %2857 = vmatprep.subr.mxu0 0.0
        %2858 = vmatpush1.msra.mxu0 0.0
        %2859 = vmatprep.subr.mxu0 0.0
        %2860 = vmatpush1.msra.mxu0 0.0
        %2861 = vmatprep.subr.mxu0 0.0
        %2862 = vmatpush1.msra.mxu0 0.0
        %2863 = vmatprep.subr.mxu0 0.0
        %2864 = vmatpush1.msra.mxu0 0.0
        %2865 = vmatprep.subr.mxu0 0.0
        %2866 = vmatpush1.msra.mxu0 0.0
        %2867 = vmatprep.subr.mxu0 0.0
        %2868 = vmatpush1.msra.mxu0 0.0
        %2869 = vmatprep.subr.mxu0 0.0
        %2870 = vmatpush1.msra.mxu0 0.0
        %2871 = vmatprep.subr.mxu0 0.0
        %2872 = vmatpush1.msra.mxu0 0.0
        %2873 = vmatprep.subr.mxu0 0.0
        %2874 = vmatpush1.msra.mxu0 0.0
        %2875 = vmatprep.subr.mxu0 0.0
        %2876 = vmatpush1.msra.mxu0 0.0
        %2877 = vmatprep.subr.mxu0 0.0
        %2878 = vmatpush1.msra.mxu0 0.0
        %2879 = vmatprep.subr.mxu0 0.0
        %2880 = vmatpush1.msra.mxu0 0.0
        %2881 = vmatprep.subr.mxu0 0.0
        %2882 = vmatpush1.msra.mxu0 %v2847
        %2883 = vmatprep.subr.mxu0 0.0
        %2884 = vmatpush2.msra.mxu0 0.0
        %2885 = vmatprep.subr.mxu0 0.0
        %2886 = vmatpush2.msra.mxu0 0.0
        %2887 = vmatprep.subr.mxu0 0.0
        %2888 = vmatpush2.msra.mxu0 0.0
        %2889 = vmatprep.subr.mxu0 0.0
        %2890 = vmatpush2.msra.mxu0 0.0
        %2891 = vmatprep.subr.mxu0 0.0
        %2892 = vmatpush2.msra.mxu0 0.0
        %2893 = vmatprep.subr.mxu0 0.0
        %2894 = vmatpush2.msra.mxu0 0.0
        %2895 = vmatprep.subr.mxu0 0.0
        %2896 = vmatpush2.msra.mxu0 0.0
        %2897 = vmatprep.subr.mxu0 0.0
        %2898 = vmatpush2.msra.mxu0 0.0
        %2899 = vmatprep.subr.mxu0 0.0
        %2900 = vmatpush2.msra.mxu0 0.0
        %2901 = vmatprep.subr.mxu0 0.0
        %2902 = vmatpush2.msra.mxu0 0.0
        %2903 = vmatprep.subr.mxu0 0.0
        %2904 = vmatpush2.msra.mxu0 0.0
        %2905 = vmatprep.subr.mxu0 0.0
        %2906 = vmatpush2.msra.mxu0 0.0
        %2907 = vmatprep.subr.mxu0 0.0
        %2908 = vmatpush2.msra.mxu0 0.0
        %2909 = vmatprep.subr.mxu0 0.0
        %2910 = vmatpush2.msra.mxu0 0.0
        %2911 = vmatprep.subr.mxu0 0.0
        %2912 = vmatpush2.msra.mxu0 0.0
        %2913 = vmatprep.subr.mxu0 0.0
        %2914 = vmatpush2.msra.mxu0 0.0
        %2915 = vmatprep.mubr.f32.mxu0 0.0
        %2916 = vmatmul.mubr.f32.gmra.mxu0 %v2849
        %v2917 = vpop.f32.mrf.mxu0
        %v2918 = vadd.f32 0.0, %v2917
        %v2919 = vpop.f32.mrf.mxu0
        %2920 = vdwg.mxu0
        %v2921 = vadd.f32 %v2434, %v2918
        %v2922 = vld [vmem:[%s13] sm:$0x1]
        %v2924 = vlaneseq
        %v2925 = vshrl.u32 %v2924, 7
        %v2926 = vsub.s32 0, %v2925
        %v2927 = vrot.slane %v2922, %v2926
        %v2929 = vadd.f32 %v2921, %v2927
        %v2930 = vadd.f32 %v962, %v2929
        %v2931 = vld [vmem:[%s14] sm:$0x1]
        %v2932 = vld [vmem:[%s15] sm:$0x1]
        %v2933 = vsel %vm989, %v2930, 0.0
        %2934 = vadd.xlane.f32.xlu0 %v2933
        %v2935 = vpop.xlane.xlu0 %2934
        %v2936 = vrcp.pop 32.0
        %v2937 = vmul.f32 %v2935, %v2936
        %v2938 = vsub.f32 %v2930, %v2937
        %v2939 = vmul.f32 %v2938, %v2938
        %v2940 = vsel %vm989, %v2939, 0.0
        %2941 = vadd.xlane.f32.xlu0 %v2940
        %v2942 = vpop.xlane.xlu0 %2941
        %v2943 = vmul.f32 %v2942, %v2936
        %v2944 = vadd.f32 %v2943, 1e-05
        %v2945 = vrsqrt.pop %v2944
        %v2946 = vmul.f32 %v2938, %v2945
        %v2948 = vlaneseq
        %v2949 = vshrl.u32 %v2948, 7
        %v2950 = vsub.s32 0, %v2949
        %v2951 = vrot.slane %v2931, %v2950
        %v2953 = vmul.f32 %v2946, %v2951
        %v2955 = vlaneseq
        %v2956 = vshrl.u32 %v2955, 7
        %v2957 = vsub.s32 0, %v2956
        %v2958 = vrot.slane %v2932, %v2957
        %v2960 = vadd.f32 %v2953, %v2958
        %v2961 = vadd.f32 %v962, %v2960
        %v2962 = vld [vmem:[%s16] sm:$0x1]
        %v2963 = vld [vmem:[%s17] sm:$0x1]
        %v2964 = vsel %vm989, %v2961, 0.0
        %2965 = vadd.xlane.f32.xlu0 %v2964
        %v2966 = vpop.xlane.xlu0 %2965
        %v2967 = vmul.f32 %v2966, %v2936
        %v2968 = vsub.f32 %v2961, %v2967
        %v2969 = vmul.f32 %v2968, %v2968
        %v2970 = vsel %vm989, %v2969, 0.0
        %2971 = vadd.xlane.f32.xlu0 %v2970
        %v2972 = vpop.xlane.xlu0 %2971
        %v2973 = vmul.f32 %v2972, %v2936
        %v2974 = vadd.f32 %v2973, 1e-05
        %v2975 = vrsqrt.pop %v2974
        %v2976 = vmul.f32 %v2968, %v2975
        %v2978 = vlaneseq
        %v2979 = vshrl.u32 %v2978, 7
        %v2980 = vsub.s32 0, %v2979
        %v2981 = vrot.slane %v2962, %v2980
        %v2983 = vmul.f32 %v2976, %v2981
        %v2985 = vlaneseq
        %v2986 = vshrl.u32 %v2985, 7
        %v2987 = vsub.s32 0, %v2986
        %v2988 = vrot.slane %v2963, %v2987
        %v2990 = vadd.f32 %v2983, %v2988
        %2992 = vset.pattern.permute.xlu0 0
        %2993 = vperm.xlu0 %2992, %v963
        %v2994 = vpop.permute.xlu0 %2993
        %v2996 = vmul.f32 %v2990, %v2994
        %v2997 = vld [vmem:[%s18] sm:$0xff]
        %v2998 = vld [vmem:[%s18 + $0x8] sm:$0xff]
        %v2999 = vld [vmem:[%s18 + $0x10] sm:$0xff]
        %v3000 = vld [vmem:[%s18 + $0x18] sm:$0xff]
        %v3001 = vld [vmem:[%s19] sm:$0x1]
        %v3003 = vlaneseq
        %v3004 = vshrl.u32 %v3003, 7
        %v3005 = vsub.s32 0, %v3004
        %v3006 = vrot.slane %v3001, %v3005
        %v3009 = vsel %vm989, %v2996, 0
        %3011 = vmatprep.subr.mxu0 0.0
        %3012 = vmatpush1.msra.mxu0 0.0
        %3013 = vmatprep.subr.mxu0 0.0
        %3014 = vmatpush1.msra.mxu0 0.0
        %3015 = vmatprep.subr.mxu0 0.0
        %3016 = vmatpush1.msra.mxu0 0.0
        %3017 = vmatprep.subr.mxu0 0.0
        %3018 = vmatpush1.msra.mxu0 0.0
        %3019 = vmatprep.subr.mxu0 0.0
        %3020 = vmatpush1.msra.mxu0 0.0
        %3021 = vmatprep.subr.mxu0 0.0
        %3022 = vmatpush1.msra.mxu0 0.0
        %3023 = vmatprep.subr.mxu0 0.0
        %3024 = vmatpush1.msra.mxu0 0.0
        %3025 = vmatprep.subr.mxu0 0.0
        %3026 = vmatpush1.msra.mxu0 0.0
        %3027 = vmatprep.subr.mxu0 0.0
        %3028 = vmatpush1.msra.mxu0 0.0
        %3029 = vmatprep.subr.mxu0 0.0
        %3030 = vmatpush1.msra.mxu0 0.0
        %3031 = vmatprep.subr.mxu0 0.0
        %3032 = vmatpush1.msra.mxu0 0.0
        %3033 = vmatprep.subr.mxu0 0.0
        %3034 = vmatpush1.msra.mxu0 0.0
        %3035 = vmatprep.subr.mxu0 0.0
        %3036 = vmatpush1.msra.mxu0 %v3000
        %3037 = vmatprep.subr.mxu0 0.0
        %3038 = vmatpush1.msra.mxu0 %v2999
        %3039 = vmatprep.subr.mxu0 0.0
        %3040 = vmatpush1.msra.mxu0 %v2998
        %3041 = vmatprep.subr.mxu0 0.0
        %3042 = vmatpush1.msra.mxu0 %v2997
        %3043 = vmatprep.subr.mxu0 0.0
        %3044 = vmatpush2.msra.mxu0 0.0
        %3045 = vmatprep.subr.mxu0 0.0
        %3046 = vmatpush2.msra.mxu0 0.0
        %3047 = vmatprep.subr.mxu0 0.0
        %3048 = vmatpush2.msra.mxu0 0.0
        %3049 = vmatprep.subr.mxu0 0.0
        %3050 = vmatpush2.msra.mxu0 0.0
        %3051 = vmatprep.subr.mxu0 0.0
        %3052 = vmatpush2.msra.mxu0 0.0
        %3053 = vmatprep.subr.mxu0 0.0
        %3054 = vmatpush2.msra.mxu0 0.0
        %3055 = vmatprep.subr.mxu0 0.0
        %3056 = vmatpush2.msra.mxu0 0.0
        %3057 = vmatprep.subr.mxu0 0.0
        %3058 = vmatpush2.msra.mxu0 0.0
        %3059 = vmatprep.subr.mxu0 0.0
        %3060 = vmatpush2.msra.mxu0 0.0
        %3061 = vmatprep.subr.mxu0 0.0
        %3062 = vmatpush2.msra.mxu0 0.0
        %3063 = vmatprep.subr.mxu0 0.0
        %3064 = vmatpush2.msra.mxu0 0.0
        %3065 = vmatprep.subr.mxu0 0.0
        %3066 = vmatpush2.msra.mxu0 0.0
        %3067 = vmatprep.subr.mxu0 0.0
        %3068 = vmatpush2.msra.mxu0 0.0
        %3069 = vmatprep.subr.mxu0 0.0
        %3070 = vmatpush2.msra.mxu0 0.0
        %3071 = vmatprep.subr.mxu0 0.0
        %3072 = vmatpush2.msra.mxu0 0.0
        %3073 = vmatprep.subr.mxu0 0.0
        %3074 = vmatpush2.msra.mxu0 0.0
        %3075 = vmatprep.mubr.f32.mxu0 0.0
        %3076 = vmatmul.mubr.f32.gmra.mxu0 %v3009
        %v3077 = vpop.f32.mrf.mxu0
        %v3078 = vadd.f32 %v3006, %v3077
        %v3079 = vpop.f32.mrf.mxu0
        %3080 = vdwg.mxu0
        %v3081 = vmax.f32 %v3078, 0.0
        %v3082 = vld [vmem:[%s20] sm:$0xff]
        %v3083 = vld [vmem:[%s20 + $0x8] sm:$0xff]
        %v3084 = vld [vmem:[%s20 + $0x10] sm:$0xff]
        %v3085 = vld [vmem:[%s20 + $0x18] sm:$0xff]
        %v3086 = vld [vmem:[%s20 + $0x20] sm:$0xff]
        %v3087 = vld [vmem:[%s20 + $0x28] sm:$0xff]
        %v3088 = vld [vmem:[%s20 + $0x30] sm:$0xff]
        %v3089 = vld [vmem:[%s20 + $0x38] sm:$0xff]
        %v3090 = vld [vmem:[%s21] sm:$0x1]
        %v3092 = vlaneseq
        %v3093 = vshrl.u32 %v3092, 7
        %v3094 = vsub.s32 0, %v3093
        %v3095 = vrot.slane %v3090, %v3094
        %vm3097 = vcmask 523264
        %v3099 = vsel %vm3097, %v3081, 0
        %3101 = vmatprep.subr.mxu0 0.0
        %3102 = vmatpush1.msra.mxu0 0.0
        %3103 = vmatprep.subr.mxu0 0.0
        %3104 = vmatpush1.msra.mxu0 0.0
        %3105 = vmatprep.subr.mxu0 0.0
        %3106 = vmatpush1.msra.mxu0 0.0
        %3107 = vmatprep.subr.mxu0 0.0
        %3108 = vmatpush1.msra.mxu0 0.0
        %3109 = vmatprep.subr.mxu0 0.0
        %3110 = vmatpush1.msra.mxu0 0.0
        %3111 = vmatprep.subr.mxu0 0.0
        %3112 = vmatpush1.msra.mxu0 0.0
        %3113 = vmatprep.subr.mxu0 0.0
        %3114 = vmatpush1.msra.mxu0 0.0
        %3115 = vmatprep.subr.mxu0 0.0
        %3116 = vmatpush1.msra.mxu0 0.0
        %3117 = vmatprep.subr.mxu0 0.0
        %3118 = vmatpush1.msra.mxu0 %v3089
        %3119 = vmatprep.subr.mxu0 0.0
        %3120 = vmatpush1.msra.mxu0 %v3088
        %3121 = vmatprep.subr.mxu0 0.0
        %3122 = vmatpush1.msra.mxu0 %v3087
        %3123 = vmatprep.subr.mxu0 0.0
        %3124 = vmatpush1.msra.mxu0 %v3086
        %3125 = vmatprep.subr.mxu0 0.0
        %3126 = vmatpush1.msra.mxu0 %v3085
        %3127 = vmatprep.subr.mxu0 0.0
        %3128 = vmatpush1.msra.mxu0 %v3084
        %3129 = vmatprep.subr.mxu0 0.0
        %3130 = vmatpush1.msra.mxu0 %v3083
        %3131 = vmatprep.subr.mxu0 0.0
        %3132 = vmatpush1.msra.mxu0 %v3082
        %3133 = vmatprep.subr.mxu0 0.0
        %3134 = vmatpush2.msra.mxu0 0.0
        %3135 = vmatprep.subr.mxu0 0.0
        %3136 = vmatpush2.msra.mxu0 0.0
        %3137 = vmatprep.subr.mxu0 0.0
        %3138 = vmatpush2.msra.mxu0 0.0
        %3139 = vmatprep.subr.mxu0 0.0
        %3140 = vmatpush2.msra.mxu0 0.0
        %3141 = vmatprep.subr.mxu0 0.0
        %3142 = vmatpush2.msra.mxu0 0.0
        %3143 = vmatprep.subr.mxu0 0.0
        %3144 = vmatpush2.msra.mxu0 0.0
        %3145 = vmatprep.subr.mxu0 0.0
        %3146 = vmatpush2.msra.mxu0 0.0
        %3147 = vmatprep.subr.mxu0 0.0
        %3148 = vmatpush2.msra.mxu0 0.0
        %3149 = vmatprep.subr.mxu0 0.0
        %3150 = vmatpush2.msra.mxu0 0.0
        %3151 = vmatprep.subr.mxu0 0.0
        %3152 = vmatpush2.msra.mxu0 0.0
        %3153 = vmatprep.subr.mxu0 0.0
        %3154 = vmatpush2.msra.mxu0 0.0
        %3155 = vmatprep.subr.mxu0 0.0
        %3156 = vmatpush2.msra.mxu0 0.0
        %3157 = vmatprep.subr.mxu0 0.0
        %3158 = vmatpush2.msra.mxu0 0.0
        %3159 = vmatprep.subr.mxu0 0.0
        %3160 = vmatpush2.msra.mxu0 0.0
        %3161 = vmatprep.subr.mxu0 0.0
        %3162 = vmatpush2.msra.mxu0 0.0
        %3163 = vmatprep.subr.mxu0 0.0
        %3164 = vmatpush2.msra.mxu0 0.0
        %3165 = vmatprep.mubr.f32.mxu0 0.0
        %3166 = vmatmul.mubr.f32.gmra.mxu0 %v3099
        %v3167 = vpop.f32.mrf.mxu0
        %v3168 = vadd.f32 %v3095, %v3167
        %v3169 = vpop.f32.mrf.mxu0
        %3170 = vdwg.mxu0
        %v3171 = vadd.f32 %v2996, %v3168
        %v3172 = vld [vmem:[%s22] sm:$0x1]
        %v3173 = vld [vmem:[%s23] sm:$0x1]
        %v3174 = vsel %vm989, %v3171, 0.0
        %3175 = vadd.xlane.f32.xlu0 %v3174
        %v3176 = vpop.xlane.xlu0 %3175
        %v3177 = vmul.f32 %v3176, %v2936
        %v3178 = vsub.f32 %v3171, %v3177
        %v3179 = vmul.f32 %v3178, %v3178
        %v3180 = vsel %vm989, %v3179, 0.0
        %3181 = vadd.xlane.f32.xlu0 %v3180
        %v3182 = vpop.xlane.xlu0 %3181
        %v3183 = vmul.f32 %v3182, %v2936
        %v3184 = vadd.f32 %v3183, 1e-05
        %v3185 = vrsqrt.pop %v3184
        %v3186 = vmul.f32 %v3178, %v3185
        %v3188 = vlaneseq
        %v3189 = vshrl.u32 %v3188, 7
        %v3190 = vsub.s32 0, %v3189
        %v3191 = vrot.slane %v3172, %v3190
        %v3193 = vmul.f32 %v3186, %v3191
        %v3195 = vlaneseq
        %v3196 = vshrl.u32 %v3195, 7
        %v3197 = vsub.s32 0, %v3196
        %v3198 = vrot.slane %v3173, %v3197
        %v3200 = vadd.f32 %v3193, %v3198
        %v3201 = vmul.f32 %v3200, %v2994
        %3202 = vst.msk [vmem:[%s857] sm:$0xff] %vm989, %v3201
        %v3203 = vld [vmem:[%s24] sm:$0xff]
        %v3204 = vld [vmem:[%s24 + $0x8] sm:$0xff]
        %v3205 = vld [vmem:[%s24 + $0x10] sm:$0xff]
        %v3206 = vld [vmem:[%s24 + $0x18] sm:$0xff]
        %v3207 = vld [vmem:[%s25] sm:$0x1]
        %v3209 = vlaneseq
        %v3210 = vshrl.u32 %v3209, 7
        %v3211 = vsub.s32 0, %v3210
        %v3212 = vrot.slane %v3207, %v3211
        %v3215 = vsel %vm989, %v3201, 0
        %3217 = vmatprep.subr.mxu0 0.0
        %3218 = vmatpush1.msra.mxu0 0.0
        %3219 = vmatprep.subr.mxu0 0.0
        %3220 = vmatpush1.msra.mxu0 0.0
        %3221 = vmatprep.subr.mxu0 0.0
        %3222 = vmatpush1.msra.mxu0 0.0
        %3223 = vmatprep.subr.mxu0 0.0
        %3224 = vmatpush1.msra.mxu0 0.0
        %3225 = vmatprep.subr.mxu0 0.0
        %3226 = vmatpush1.msra.mxu0 0.0
        %3227 = vmatprep.subr.mxu0 0.0
        %3228 = vmatpush1.msra.mxu0 0.0
        %3229 = vmatprep.subr.mxu0 0.0
        %3230 = vmatpush1.msra.mxu0 0.0
        %3231 = vmatprep.subr.mxu0 0.0
        %3232 = vmatpush1.msra.mxu0 0.0
        %3233 = vmatprep.subr.mxu0 0.0
        %3234 = vmatpush1.msra.mxu0 0.0
        %3235 = vmatprep.subr.mxu0 0.0
        %3236 = vmatpush1.msra.mxu0 0.0
        %3237 = vmatprep.subr.mxu0 0.0
        %3238 = vmatpush1.msra.mxu0 0.0
        %3239 = vmatprep.subr.mxu0 0.0
        %3240 = vmatpush1.msra.mxu0 0.0
        %3241 = vmatprep.subr.mxu0 0.0
        %3242 = vmatpush1.msra.mxu0 %v3206
        %3243 = vmatprep.subr.mxu0 0.0
        %3244 = vmatpush1.msra.mxu0 %v3205
        %3245 = vmatprep.subr.mxu0 0.0
        %3246 = vmatpush1.msra.mxu0 %v3204
        %3247 = vmatprep.subr.mxu0 0.0
        %3248 = vmatpush1.msra.mxu0 %v3203
        %3249 = vmatprep.subr.mxu0 0.0
        %3250 = vmatpush2.msra.mxu0 0.0
        %3251 = vmatprep.subr.mxu0 0.0
        %3252 = vmatpush2.msra.mxu0 0.0
        %3253 = vmatprep.subr.mxu0 0.0
        %3254 = vmatpush2.msra.mxu0 0.0
        %3255 = vmatprep.subr.mxu0 0.0
        %3256 = vmatpush2.msra.mxu0 0.0
        %3257 = vmatprep.subr.mxu0 0.0
        %3258 = vmatpush2.msra.mxu0 0.0
        %3259 = vmatprep.subr.mxu0 0.0
        %3260 = vmatpush2.msra.mxu0 0.0
        %3261 = vmatprep.subr.mxu0 0.0
        %3262 = vmatpush2.msra.mxu0 0.0
        %3263 = vmatprep.subr.mxu0 0.0
        %3264 = vmatpush2.msra.mxu0 0.0
        %3265 = vmatprep.subr.mxu0 0.0
        %3266 = vmatpush2.msra.mxu0 0.0
        %3267 = vmatprep.subr.mxu0 0.0
        %3268 = vmatpush2.msra.mxu0 0.0
        %3269 = vmatprep.subr.mxu0 0.0
        %3270 = vmatpush2.msra.mxu0 0.0
        %3271 = vmatprep.subr.mxu0 0.0
        %3272 = vmatpush2.msra.mxu0 0.0
        %3273 = vmatprep.subr.mxu0 0.0
        %3274 = vmatpush2.msra.mxu0 0.0
        %3275 = vmatprep.subr.mxu0 0.0
        %3276 = vmatpush2.msra.mxu0 0.0
        %3277 = vmatprep.subr.mxu0 0.0
        %3278 = vmatpush2.msra.mxu0 0.0
        %3279 = vmatprep.subr.mxu0 0.0
        %3280 = vmatpush2.msra.mxu0 0.0
        %3281 = vmatprep.mubr.f32.mxu0 0.0
        %3282 = vmatmul.mubr.f32.gmra.mxu0 %v3215
        %v3283 = vpop.f32.mrf.mxu0
        %v3284 = vadd.f32 %v3212, %v3283
        %v3285 = vpop.f32.mrf.mxu0
        %3286 = vdwg.mxu0
        %3287 = vmax.xlane.f32.xlu0 %v3284
        %v3288 = vpop.xlane.xlu0 %3287
        %v3289 = vsub.f32 %v3284, %v3288
        %v3290 = vmul.f32 %v3289, 1.442695
        %v3291 = vpow.pop %v3290
        %3292 = vadd.xlane.f32.xlu0 %v3291
        %v3293 = vpop.xlane.xlu0 %3292
        %v3294 = vlog2.pop %v3293
        %v3295 = vmul.f32 %v3294, 0.6931472
        %v3296 = vadd.f32 %v3295, %v3288
        %v3297 = vsub.f32 %v3284, %v3296
        %3298 = vst [vmem:[%s850] sm:$0xff] %v3297
        %s3299 = sand.u32 %s619, 1
        %s3300 = scalar_lea.sflag [#allocation3], %s3299
        %s3301 = sand.u32 %s619, 1
        %s3302 = smul.addr %s3301, 8
        %s3303 = scalar_lea.vmem [#allocation2], %s3302
        %s3304 = sand.u32 %s645, 1
        %s3305 = scalar_lea.sflag [#allocation5], %s3304
        %s3306 = sand.u32 %s645, 1
        %s3307 = smul.addr %s3306, 8
        %s3308 = scalar_lea.vmem [#allocation4], %s3307
        // Predicated region
        $region125: #{language_model_forward.1} parent=123 // pred_check
          %p3309 = pneg %p629
        $region126: #{language_model_forward.1} parent=123 // pred_check_branch
          %3311 = sbr.rel (%p3309) target = $region128
        $region127: #{language_model_forward.1} parent=123 // pred_region
          %s3313 = ssub.s32 128, 128
          %3314 = vsyncadd %s3300, %s3313
          %s3315 = smul.addr %s45, 128
          %s3316 = scalar_lea.hbm %s26, %s3315
          %s3318 = sshll.u32 %s3303, 4
          %s3319 = int_to_ptr.vmem [resolvable:$true] %s3318
          %3321 = dma.vmem_to_hbm [thread:$0]  %s3319, 128, %s3316, %s3300
        $region128: #{language_model_forward.1} parent=123 // pred_fallthru
          _
        // Predicated region
        $region129: #{language_model_forward.1} parent=123 // pred_check
          %p3322 = pneg %p655
        $region130: #{language_model_forward.1} parent=123 // pred_check_branch
          %3324 = sbr.rel (%p3322) target = $region132
        $region131: #{language_model_forward.1} parent=123 // pred_region
          %s3326 = ssub.s32 128, 128
          %3327 = vsyncadd %s3305, %s3326
          %s3328 = smul.addr %s45, 128
          %s3329 = scalar_lea.hbm %s27, %s3328
          %s3331 = sshll.u32 %s3308, 4
          %s3332 = int_to_ptr.vmem [resolvable:$true] %s3331
          %3334 = dma.vmem_to_hbm [thread:$0]  %s3332, 128, %s3329, %s3305
        $region132: #{language_model_forward.1} parent=123 // pred_fallthru
          _
      $region124: #{language_model_forward.1} parent=5 // pred_fallthru
        _
      %p3335 = scmp.le.s32.totalorder 2, %s40
      // Predicated region
      $region133: #{language_model_forward.1} parent=5 // pred_check
        %p3336 = pneg %p3335
      $region134: #{language_model_forward.1} parent=5 // pred_check_branch
        %3338 = sbr.rel (%p3336) target = $region136
      $region135: #{language_model_forward.1} parent=5 // pred_region
        %s3339 = ssub.s32 %s40, 2
        // Predicated region
        $region137: #{language_model_forward.1} parent=135 // pred_check
          %p3340 = pneg %p635
        $region138: #{language_model_forward.1} parent=135 // pred_check_branch
          %3342 = sbr.rel (%p3340) target = $region140
        $region139: #{language_model_forward.1} parent=135 // pred_region
          %s3343 = sand.u32 %s620, 1
          %s3344 = scalar_lea.sflag [#allocation3], %s3343
          %s3345 = sand.u32 %s620, 1
          %s3346 = smul.addr %s3345, 8
          %s3347 = scalar_lea.vmem [#allocation2], %s3346
          %3348 = dma.done %s3344, 128
        $region140: #{language_model_forward.1} parent=135 // pred_fallthru
          _
        // Predicated region
        $region141: #{language_model_forward.1} parent=135 // pred_check
          %p3349 = pneg %p661
        $region142: #{language_model_forward.1} parent=135 // pred_check_branch
          %3351 = sbr.rel (%p3349) target = $region144
        $region143: #{language_model_forward.1} parent=135 // pred_region
          %s3352 = sand.u32 %s646, 1
          %s3353 = scalar_lea.sflag [#allocation5], %s3352
          %s3354 = sand.u32 %s646, 1
          %s3355 = smul.addr %s3354, 8
          %s3356 = scalar_lea.vmem [#allocation4], %s3355
          %3357 = dma.done %s3353, 128
        $region144: #{language_model_forward.1} parent=135 // pred_fallthru
          _
      $region136: #{language_model_forward.1} parent=5 // pred_fallthru
        _
    $region6: #{language_model_forward.1} parent=1 // loop_footer
      %s44 = sadd.s32 1, %s40
    $region7: #{language_model_forward.1} parent=1 // loop_footer_branch
      %39 = sbr.rel target = $region3
    $region8: #{language_model_forward.1} parent=1 // loop_exit
      _
    %3358 = vsyncpa [#allocation3], 1
    %s3359 = scalar_lea.sflag [#allocation3], 1
    %3360 = vsyncpa %s3359, 1
    %3361 = vsyncpa [#allocation5], 1
    %s3362 = scalar_lea.sflag [#allocation5], 1
    %3363 = vsyncpa %s3362, 1

</llo_original>
